<compile_context>
chip_gen: v5e
topology: v5e:2x2
jax: 0.10.0
libtpu: 0.0.40
codegen_flags: <defaults>
</compile_context>

<pallas_src>
import functools

import jax
import jax.numpy as jnp
from jax.experimental import pallas as pl
from jax.experimental.pallas import tpu as pltpu


def _round_up(v, m):
    return ((v + m - 1) // m) * m


def _nerf_kernel(x_ref,
                 w1_ref, b1_ref,
                 w2_ref, b2_ref,
                 w3_ref, b3_ref,
                 w31_ref, b31_ref,
                 w4_ref, b4_ref,
                 o_ref):
    """Fused MLP: 4 x (dense + ReLU) + final dense.

    x / weights / hidden biases are bf16; all dots accumulate in f32 on the
    MXU.  Hidden epilogues (bias + ReLU) run in bf16 so each layer only
    materializes a single bf16 activation slab.  Final layer bias-add is f32.
    """
    def dense_relu(a, w_ref, b_ref):
        acc = jnp.dot(a, w_ref[...], preferred_element_type=jnp.float32)
        return jnp.maximum(acc.astype(jnp.bfloat16) + b_ref[...], 0)

    h = dense_relu(x_ref[...], w1_ref, b1_ref)
    h = dense_relu(h, w2_ref, b2_ref)
    h = dense_relu(h, w3_ref, b3_ref)
    h = dense_relu(h, w31_ref, b31_ref)

    y = jnp.dot(h, w4_ref[...], preferred_element_type=jnp.float32) + b4_ref[...]
    o_ref[...] = y.astype(o_ref.dtype)


def pack_nerf_params(params):
    """One-off: lane-pad hidden dims to 128 and cast to kernel dtypes.

    Padded weight rows/cols and bias lanes are exactly zero, so padded
    activation lanes stay zero through the ReLU chain (semantics unchanged).
    The final layer keeps its true output width (no lane padding) so the
    kernel writes a de-padded (n, d_out) result.
    """
    d_in = params["w1"].shape[0]
    hidden = params["w1"].shape[1]
    d_out = params["w4"].shape[1]
    hp = _round_up(hidden, 128)

    def pad_w(w, rows, cols):
        r, c = w.shape
        return jnp.pad(w, ((0, rows - r), (0, cols - c))).astype(jnp.bfloat16)

    def pad_b(b, cols, dtype):
        return jnp.pad(b, ((0, 0), (0, cols - b.shape[1]))).astype(dtype)

    return dict(
        w1=pad_w(params["w1"], d_in, hp),
        b1=pad_b(params["b1"], hp, jnp.bfloat16),
        w2=pad_w(params["w2"], hp, hp),
        b2=pad_b(params["b2"], hp, jnp.bfloat16),
        w3=pad_w(params["w3"], hp, hp),
        b3=pad_b(params["b3"], hp, jnp.bfloat16),
        w31=pad_w(params["w31"], hp, hp),
        b31=pad_b(params["b31"], hp, jnp.bfloat16),
        w4=pad_w(params["w4"], hp, d_out),            # last dim NOT padded
        b4=params["b4"].astype(jnp.float32),          # (1, d_out), f32 epilogue
    )


@functools.partial(jax.jit, static_argnames=("tile_m",))
def nerf_forward(x, packed, tile_m=2048):
    """x: (N, input_dims) float32.  packed: output of pack_nerf_params."""
    n, d_in = x.shape
    hp = packed["w1"].shape[1]
    d_out = packed["w4"].shape[1]

    # Effective row tile: big enough to amortize ~0.35us/step overhead, but
    # keep the grid at >= 2 steps when the batch allows (v7x dual-TC sharding).
    tile_eff = min(tile_m, max(256, _round_up((n + 1) // 2, 256)))
    n_pad = _round_up(n, tile_eff)

    x_p = jnp.pad(x, ((0, n_pad - n), (0, 0))).astype(jnp.bfloat16)

    grid = (n_pad // tile_eff,)

    weights = (packed["w1"], packed["b1"],
               packed["w2"], packed["b2"],
               packed["w3"], packed["b3"],
               packed["w31"], packed["b31"],
               packed["w4"], packed["b4"])

    def const_spec(arr):
        # Grid-invariant block: constant index_map -> DMA'd once, reused.
        return pl.BlockSpec(arr.shape, lambda i: (0, 0))

    in_specs = [pl.BlockSpec((tile_eff, d_in), lambda i: (i, 0))] + \
               [const_spec(a) for a in weights]
    out_spec = pl.BlockSpec((tile_eff, d_out), lambda i: (i, 0))

    grid_spec = pltpu.PrefetchScalarGridSpec(
        num_scalar_prefetch=0,
        grid=grid,
        in_specs=in_specs,
        out_specs=out_spec,
    )

    param_bytes = sum(int(a.size) * a.dtype.itemsize for a in weights)
    cost = pl.CostEstimate(
        flops=int(2 * n_pad * (d_in * hp + 3 * hp * hp + hp * d_out)),
        transcendentals=0,
        bytes_accessed=int(x_p.size) * 2 + int(n_pad * d_out) * 4 + param_bytes,
    )

    out = pl.pallas_call(
        _nerf_kernel,
        out_shape=jax.ShapeDtypeStruct((n_pad, d_out), jnp.float32),
        grid_spec=grid_spec,
        compiler_params=pltpu.CompilerParams(
            dimension_semantics=("parallel",)),
        cost_estimate=cost,
    )(x_p, *weights)

    if n_pad != n:
        out = out[:n]
    return out


def init_nerf_params(key, input_dims, hidden_dims, output_dims):
    """Deterministic init matching PyTorch nn.Linear default init.

    Weights stored as (in, out); biases as (1, out).
    """
    def linear(k, fan_in, fan_out):
        kw, kb = jax.random.split(k)
        bound = 1.0 / jnp.sqrt(float(fan_in))
        w = jax.random.uniform(kw, (fan_in, fan_out), jnp.float32, -bound, bound)
        b = jax.random.uniform(kb, (1, fan_out), jnp.float32, -bound, bound)
        return w, b

    k1, k2, k3, k31, k4 = jax.random.split(key, 5)
    w1, b1 = linear(k1, input_dims, hidden_dims)
    w2, b2 = linear(k2, hidden_dims, hidden_dims)
    w3, b3 = linear(k3, hidden_dims, hidden_dims)
    w31, b31 = linear(k31, hidden_dims, hidden_dims)
    w4, b4 = linear(k4, hidden_dims, output_dims)
    return dict(w1=w1, b1=b1, w2=w2, b2=b2, w3=w3, b3=b3,
                w31=w31, b31=b31, w4=w4, b4=b4)


def nerf_reference(x, p):
    """Plain-JAX reference with the same numerics as the kernel
    (bf16 operands, f32 MXU accumulation, bf16 hidden epilogue)."""
    def dense_relu(a, w, b):
        acc = jnp.dot(a, w.astype(jnp.bfloat16),
                      preferred_element_type=jnp.float32)
        return jnp.maximum(acc.astype(jnp.bfloat16) + b.astype(jnp.bfloat16), 0)

    h = x.astype(jnp.bfloat16)
    h = dense_relu(h, p["w1"], p["b1"])
    h = dense_relu(h, p["w2"], p["b2"])
    h = dense_relu(h, p["w3"], p["b3"])
    h = dense_relu(h, p["w31"], p["b31"])
    return jnp.dot(h, p["w4"].astype(jnp.bfloat16),
                   preferred_element_type=jnp.float32) + p["b4"]


if __name__ == "__main__":
    key = jax.random.PRNGKey(0)
    k_params, k_x = jax.random.split(key)

    input_dims, hidden_dims, output_dims = 16, 64, 8
    n_points = 1024  # batch of ray samples (2 grid steps after auto tile pick)

    params = init_nerf_params(k_params, input_dims, hidden_dims, output_dims)
    packed = pack_nerf_params(params)          # one-off, outside the jit path
    x = jax.random.normal(k_x, (n_points, input_dims), dtype=jnp.float32)

    out = nerf_forward(x, packed)
    out = jax.block_until_ready(out)

    ref = nerf_reference(x, params)
    assert out.shape == (n_points, output_dims)
    assert jnp.allclose(out, ref, atol=5e-2, rtol=5e-2), \
        float(jnp.max(jnp.abs(out - ref)))

    print("KERNEL_OK")
</pallas_src>

<mosaic_0001>
module attributes {stable_mosaic.version = 11 : i64} {
  func.func @_nerf_kernel(%arg0: i32, %arg1: memref<512x16xbf16, #tpu.memory_space<vmem>>, %arg2: memref<16x128xbf16, #tpu.memory_space<vmem>>, %arg3: memref<1x128xbf16, #tpu.memory_space<vmem>>, %arg4: memref<128x128xbf16, #tpu.memory_space<vmem>>, %arg5: memref<1x128xbf16, #tpu.memory_space<vmem>>, %arg6: memref<128x128xbf16, #tpu.memory_space<vmem>>, %arg7: memref<1x128xbf16, #tpu.memory_space<vmem>>, %arg8: memref<128x128xbf16, #tpu.memory_space<vmem>>, %arg9: memref<1x128xbf16, #tpu.memory_space<vmem>>, %arg10: memref<128x8xbf16, #tpu.memory_space<vmem>>, %arg11: memref<1x8xf32, #tpu.memory_space<vmem>>, %arg12: memref<512x8xf32, #tpu.memory_space<vmem>>) attributes {dimension_semantics = [#tpu.dimension_semantics<parallel>], iteration_bounds = array<i64: 2>, scalar_prefetch = 0 : i64, scratch_operands = 0 : i64, tpu.core_type = #tpu.core_type<tc>, window_params = [{transform_indices = @transform_0, window_bounds = array<i64: 512, 16>}, {pipeline_mode = #tpu.pipeline_mode<synchronous>, transform_indices = @transform_1, window_bounds = array<i64: 16, 128>}, {pipeline_mode = #tpu.pipeline_mode<synchronous>, transform_indices = @transform_2, window_bounds = array<i64: 1, 128>}, {pipeline_mode = #tpu.pipeline_mode<synchronous>, transform_indices = @transform_3, window_bounds = array<i64: 128, 128>}, {pipeline_mode = #tpu.pipeline_mode<synchronous>, transform_indices = @transform_4, window_bounds = array<i64: 1, 128>}, {pipeline_mode = #tpu.pipeline_mode<synchronous>, transform_indices = @transform_5, window_bounds = array<i64: 128, 128>}, {pipeline_mode = #tpu.pipeline_mode<synchronous>, transform_indices = @transform_6, window_bounds = array<i64: 1, 128>}, {pipeline_mode = #tpu.pipeline_mode<synchronous>, transform_indices = @transform_7, window_bounds = array<i64: 128, 128>}, {pipeline_mode = #tpu.pipeline_mode<synchronous>, transform_indices = @transform_8, window_bounds = array<i64: 1, 128>}, {pipeline_mode = #tpu.pipeline_mode<synchronous>, transform_indices = @transform_9, window_bounds = array<i64: 128, 8>}, {pipeline_mode = #tpu.pipeline_mode<synchronous>, transform_indices = @transform_10, window_bounds = array<i64: 1, 8>}, {transform_indices = @transform_11, window_bounds = array<i64: 512, 8>}]} {
    %c0 = arith.constant 0 : index
    %c0_0 = arith.constant 0 : index
    %0 = vector.load %arg1[%c0, %c0_0] : memref<512x16xbf16, #tpu.memory_space<vmem>>, vector<512x16xbf16>
    %c0_1 = arith.constant 0 : index
    %c0_2 = arith.constant 0 : index
    %1 = vector.load %arg2[%c0_1, %c0_2] : memref<16x128xbf16, #tpu.memory_space<vmem>>, vector<16x128xbf16>
    %cst = arith.constant dense<0.000000e+00> : vector<512x128xf32>
    %2 = tpu.matmul %0, %1, %cst {dimension_numbers = #tpu.dot_dimension_numbers<[1], [0], [0], [1], [0, 0, 1, 1], [], []>} : vector<512x16xbf16>, vector<16x128xbf16>, vector<512x128xf32> -> vector<512x128xf32>
    %3 = arith.truncf %2 : vector<512x128xf32> to vector<512x128xbf16>
    %c0_3 = arith.constant 0 : index
    %c0_4 = arith.constant 0 : index
    %4 = vector.load %arg3[%c0_3, %c0_4] : memref<1x128xbf16, #tpu.memory_space<vmem>>, vector<1x128xbf16>
    %5 = vector.broadcast %4 : vector<1x128xbf16> to vector<512x128xbf16>
    %6 = arith.addf %3, %5 : vector<512x128xbf16>
    %cst_5 = arith.constant 0.000000e+00 : bf16
    %7 = vector.broadcast %cst_5 : bf16 to vector<512x128xbf16>
    %8 = arith.maximumf %6, %7 : vector<512x128xbf16>
    %c0_6 = arith.constant 0 : index
    %c0_7 = arith.constant 0 : index
    %9 = vector.load %arg4[%c0_6, %c0_7] : memref<128x128xbf16, #tpu.memory_space<vmem>>, vector<128x128xbf16>
    %cst_8 = arith.constant dense<0.000000e+00> : vector<512x128xf32>
    %10 = tpu.matmul %8, %9, %cst_8 {dimension_numbers = #tpu.dot_dimension_numbers<[1], [0], [0], [1], [0, 0, 1, 1], [], []>} : vector<512x128xbf16>, vector<128x128xbf16>, vector<512x128xf32> -> vector<512x128xf32>
    %11 = arith.truncf %10 : vector<512x128xf32> to vector<512x128xbf16>
    %c0_9 = arith.constant 0 : index
    %c0_10 = arith.constant 0 : index
    %12 = vector.load %arg5[%c0_9, %c0_10] : memref<1x128xbf16, #tpu.memory_space<vmem>>, vector<1x128xbf16>
    %13 = vector.broadcast %12 : vector<1x128xbf16> to vector<512x128xbf16>
    %14 = arith.addf %11, %13 : vector<512x128xbf16>
    %cst_11 = arith.constant 0.000000e+00 : bf16
    %15 = vector.broadcast %cst_11 : bf16 to vector<512x128xbf16>
    %16 = arith.maximumf %14, %15 : vector<512x128xbf16>
    %c0_12 = arith.constant 0 : index
    %c0_13 = arith.constant 0 : index
    %17 = vector.load %arg6[%c0_12, %c0_13] : memref<128x128xbf16, #tpu.memory_space<vmem>>, vector<128x128xbf16>
    %cst_14 = arith.constant dense<0.000000e+00> : vector<512x128xf32>
    %18 = tpu.matmul %16, %17, %cst_14 {dimension_numbers = #tpu.dot_dimension_numbers<[1], [0], [0], [1], [0, 0, 1, 1], [], []>} : vector<512x128xbf16>, vector<128x128xbf16>, vector<512x128xf32> -> vector<512x128xf32>
    %19 = arith.truncf %18 : vector<512x128xf32> to vector<512x128xbf16>
    %c0_15 = arith.constant 0 : index
    %c0_16 = arith.constant 0 : index
    %20 = vector.load %arg7[%c0_15, %c0_16] : memref<1x128xbf16, #tpu.memory_space<vmem>>, vector<1x128xbf16>
    %21 = vector.broadcast %20 : vector<1x128xbf16> to vector<512x128xbf16>
    %22 = arith.addf %19, %21 : vector<512x128xbf16>
    %cst_17 = arith.constant 0.000000e+00 : bf16
    %23 = vector.broadcast %cst_17 : bf16 to vector<512x128xbf16>
    %24 = arith.maximumf %22, %23 : vector<512x128xbf16>
    %c0_18 = arith.constant 0 : index
    %c0_19 = arith.constant 0 : index
    %25 = vector.load %arg8[%c0_18, %c0_19] : memref<128x128xbf16, #tpu.memory_space<vmem>>, vector<128x128xbf16>
    %cst_20 = arith.constant dense<0.000000e+00> : vector<512x128xf32>
    %26 = tpu.matmul %24, %25, %cst_20 {dimension_numbers = #tpu.dot_dimension_numbers<[1], [0], [0], [1], [0, 0, 1, 1], [], []>} : vector<512x128xbf16>, vector<128x128xbf16>, vector<512x128xf32> -> vector<512x128xf32>
    %27 = arith.truncf %26 : vector<512x128xf32> to vector<512x128xbf16>
    %c0_21 = arith.constant 0 : index
    %c0_22 = arith.constant 0 : index
    %28 = vector.load %arg9[%c0_21, %c0_22] : memref<1x128xbf16, #tpu.memory_space<vmem>>, vector<1x128xbf16>
    %29 = vector.broadcast %28 : vector<1x128xbf16> to vector<512x128xbf16>
    %30 = arith.addf %27, %29 : vector<512x128xbf16>
    %cst_23 = arith.constant 0.000000e+00 : bf16
    %31 = vector.broadcast %cst_23 : bf16 to vector<512x128xbf16>
    %32 = arith.maximumf %30, %31 : vector<512x128xbf16>
    %c0_24 = arith.constant 0 : index
    %c0_25 = arith.constant 0 : index
    %33 = vector.load %arg10[%c0_24, %c0_25] : memref<128x8xbf16, #tpu.memory_space<vmem>>, vector<128x8xbf16>
    %cst_26 = arith.constant dense<0.000000e+00> : vector<512x8xf32>
    %34 = tpu.matmul %32, %33, %cst_26 {dimension_numbers = #tpu.dot_dimension_numbers<[1], [0], [0], [1], [0, 0, 1, 1], [], []>} : vector<512x128xbf16>, vector<128x8xbf16>, vector<512x8xf32> -> vector<512x8xf32>
    %c0_27 = arith.constant 0 : index
    %c0_28 = arith.constant 0 : index
    %35 = vector.load %arg11[%c0_27, %c0_28] : memref<1x8xf32, #tpu.memory_space<vmem>>, vector<1x8xf32>
    %36 = vector.broadcast %35 : vector<1x8xf32> to vector<512x8xf32>
    %37 = arith.addf %34, %36 : vector<512x8xf32>
    %c0_29 = arith.constant 0 : index
    %c0_30 = arith.constant 0 : index
    %38 = vector.load %arg12[%c0_29, %c0_30] : memref<512x8xf32, #tpu.memory_space<vmem>>, vector<512x8xf32>
    tpu.vector_store %arg12[%c0_29, %c0_30], %37 {strides = array<i32>} : memref<512x8xf32, #tpu.memory_space<vmem>>, vector<512x8xf32>,
    return
  }
  func.func @transform_0(%arg0: i32) -> (i32, i32) {
    %c0_i32 = arith.constant 0 : i32
    %c0_i32_0 = arith.constant 0 : i32
    return %arg0, %c0_i32 : i32, i32
  }
  func.func @transform_1(%arg0: i32) -> (i32, i32) {
    %c0_i32 = arith.constant 0 : i32
    %c0_i32_0 = arith.constant 0 : i32
    %c0_i32_1 = arith.constant 0 : i32
    return %c0_i32, %c0_i32_0 : i32, i32
  }
  func.func @transform_2(%arg0: i32) -> (i32, i32) {
    %c0_i32 = arith.constant 0 : i32
    %c0_i32_0 = arith.constant 0 : i32
    %c0_i32_1 = arith.constant 0 : i32
    return %c0_i32, %c0_i32_0 : i32, i32
  }
  func.func @transform_3(%arg0: i32) -> (i32, i32) {
    %c0_i32 = arith.constant 0 : i32
    %c0_i32_0 = arith.constant 0 : i32
    %c0_i32_1 = arith.constant 0 : i32
    return %c0_i32, %c0_i32_0 : i32, i32
  }
  func.func @transform_4(%arg0: i32) -> (i32, i32) {
    %c0_i32 = arith.constant 0 : i32
    %c0_i32_0 = arith.constant 0 : i32
    %c0_i32_1 = arith.constant 0 : i32
    return %c0_i32, %c0_i32_0 : i32, i32
  }
  func.func @transform_5(%arg0: i32) -> (i32, i32) {
    %c0_i32 = arith.constant 0 : i32
    %c0_i32_0 = arith.constant 0 : i32
    %c0_i32_1 = arith.constant 0 : i32
    return %c0_i32, %c0_i32_0 : i32, i32
  }
  func.func @transform_6(%arg0: i32) -> (i32, i32) {
    %c0_i32 = arith.constant 0 : i32
    %c0_i32_0 = arith.constant 0 : i32
    %c0_i32_1 = arith.constant 0 : i32
    return %c0_i32, %c0_i32_0 : i32, i32
  }
  func.func @transform_7(%arg0: i32) -> (i32, i32) {
    %c0_i32 = arith.constant 0 : i32
    %c0_i32_0 = arith.constant 0 : i32
    %c0_i32_1 = arith.constant 0 : i32
    return %c0_i32, %c0_i32_0 : i32, i32
  }
  func.func @transform_8(%arg0: i32) -> (i32, i32) {
    %c0_i32 = arith.constant 0 : i32
    %c0_i32_0 = arith.constant 0 : i32
    %c0_i32_1 = arith.constant 0 : i32
    return %c0_i32, %c0_i32_0 : i32, i32
  }
  func.func @transform_9(%arg0: i32) -> (i32, i32) {
    %c0_i32 = arith.constant 0 : i32
    %c0_i32_0 = arith.constant 0 : i32
    %c0_i32_1 = arith.constant 0 : i32
    return %c0_i32, %c0_i32_0 : i32, i32
  }
  func.func @transform_10(%arg0: i32) -> (i32, i32) {
    %c0_i32 = arith.constant 0 : i32
    %c0_i32_0 = arith.constant 0 : i32
    %c0_i32_1 = arith.constant 0 : i32
    return %c0_i32, %c0_i32_0 : i32, i32
  }
  func.func @transform_11(%arg0: i32) -> (i32, i32) {
    %c0_i32 = arith.constant 0 : i32
    %c0_i32_0 = arith.constant 0 : i32
    return %arg0, %c0_i32 : i32, i32
  }
}

</mosaic_0001>

<llo_original>
// kernel: nerf_forward.1
$region0: #{nerf_forward.1}
  #allocation0 [shape = 'u32[]', space=smem, size = 0x4, offset = 0x4, fixed_abs, tag = 'smem constant byte address 0x4 - core index']
  #allocation1 [shape = 'u32[72,128]{1,0:T(1,128)}', space=vmem, size = 0x9000, scoped, tag = 'internal scratch']
  %s0 = inlined_call_operand.vmem [shape: bf16[1024,16], index: 0, kind: input, shape index: {}]
  %s1 = inlined_call_operand.vmem [shape: bf16[16,128], index: 1, kind: input, shape index: {}]
  %s2 = inlined_call_operand.vmem [shape: bf16[1,128], index: 2, kind: input, shape index: {}]
  %s3 = inlined_call_operand.vmem [shape: bf16[128,128], index: 3, kind: input, shape index: {}]
  %s4 = inlined_call_operand.vmem [shape: bf16[1,128], index: 4, kind: input, shape index: {}]
  %s5 = inlined_call_operand.vmem [shape: bf16[128,128], index: 5, kind: input, shape index: {}]
  %s6 = inlined_call_operand.vmem [shape: bf16[1,128], index: 6, kind: input, shape index: {}]
  %s7 = inlined_call_operand.vmem [shape: bf16[128,128], index: 7, kind: input, shape index: {}]
  %s8 = inlined_call_operand.vmem [shape: bf16[1,128], index: 8, kind: input, shape index: {}]
  %s9 = inlined_call_operand.vmem [shape: bf16[128,8], index: 9, kind: input, shape index: {}]
  %s10 = inlined_call_operand.vmem [shape: f32[1,8], index: 10, kind: input, shape index: {}]
  %s11 = inlined_call_operand.vmem [shape: f32[1024,8], index: 11, kind: output, shape index: {}]
  %s12 = sld [smem:[#allocation0]]
  $region77: #{nerf_forward.1} parent=0
    _
  %s14 = ssub.s32 1, %s12
  %s15 = scalar_select 0, %s14, %s12
  loop: start=0, step=1, limit=4
  $region2: #{nerf_forward.1} parent=0 // loop_pre_header
    _
  $region3: #{nerf_forward.1} parent=0 // loop_header
    %s17 = sphi 0, %s21
    %p18 = scmp.ge.s32.totalorder %s17, 4
    %s27 = sphi 0, %s29
    %s30 = sphi 0, %s27
    %s31 = sphi 0, %s30
    %s47 = sphi 0, %s31
    %s51 = sphi 0, %s51
    %s53 = sphi 0, %s51
    %s54 = sphi 0, %s53
    %s68 = sphi 0, %s54
    %s72 = sphi 0, %s72
    %s74 = sphi 0, %s72
    %s75 = sphi 0, %s74
    %s89 = sphi 0, %s75
    %s93 = sphi 0, %s93
    %s95 = sphi 0, %s93
    %s96 = sphi 0, %s95
    %s110 = sphi 0, %s96
    %s114 = sphi 0, %s114
    %s116 = sphi 0, %s114
    %s117 = sphi 0, %s116
    %s131 = sphi 0, %s117
    %s135 = sphi 0, %s135
    %s137 = sphi 0, %s135
    %s138 = sphi 0, %s137
    %s152 = sphi 0, %s138
    %s156 = sphi 0, %s156
    %s158 = sphi 0, %s156
    %s159 = sphi 0, %s158
    %s173 = sphi 0, %s159
    %s177 = sphi 0, %s177
    %s179 = sphi 0, %s177
    %s180 = sphi 0, %s179
    %s194 = sphi 0, %s180
    %s198 = sphi 0, %s198
    %s200 = sphi 0, %s198
    %s201 = sphi 0, %s200
    %s215 = sphi 0, %s201
    %s219 = sphi 0, %s219
    %s221 = sphi 0, %s219
    %s222 = sphi 0, %s221
    %s236 = sphi 0, %s222
    %s240 = sphi 0, %s240
    %s242 = sphi 0, %s240
    %s243 = sphi 0, %s242
    %s257 = sphi 0, %s243
    %s263 = sphi 0, %s265
    %s266 = sphi 0, %s263
    %s267 = sphi 0, %s266
    %s283 = sphi 0, %s267
  $region4: #{nerf_forward.1} parent=0 // loop_header_branch
    %20 = sbr.rel (%p18) target = $region8
  $region5: #{nerf_forward.1} parent=0 // loop_body
    %s22 = ssub.s32 %s17, 1
    %s23 = ssub.s32 %s17, 2
    %s24 = sadd.s32 %s17, 1
    %s25 = ssub.s32 %s17, %s24
    %p26 = scmp.eq.s32.totalorder %s25, 0
    %s28 = sadd.s32 %s27, 1
    %s29 = scalar_select %p26, %s27, %s28
    %p32 = pneg %p26
    %p33 = scmp.eq.s32.totalorder %s17, 1
    %p34 = por %p32, %p33
    %p35 = scmp.ne.s32.totalorder %s27, %s30
    %p36 = scmp.eq.s32.totalorder %s17, 0
    %p37 = por %p35, %p36
    %p38 = scmp.ne.s32.totalorder %s27, %s30
    %p39 = scmp.eq.s32.totalorder %s22, 1
    %p40 = por %p38, %p39
    %p41 = scmp.ne.s32.totalorder %s30, %s31
    %p42 = scmp.eq.s32.totalorder %s22, 0
    %p43 = por %p41, %p42
    %p44 = scmp.ne.s32.totalorder %s30, %s31
    %p45 = scmp.eq.s32.totalorder %s23, 1
    %p46 = por %p44, %p45
    %p48 = scmp.ne.s32.totalorder %s31, %s47
    %p49 = scmp.eq.s32.totalorder %s23, 0
    %p50 = por %p48, %p49
    %s52 = sadd.s32 %s51, 1
    %p55 = scmp.eq.s32.totalorder %s17, 1
    %p56 = scmp.ne.s32.totalorder %s51, %s53
    %p57 = scmp.eq.s32.totalorder %s17, 0
    %p58 = por %p56, %p57
    %p59 = scmp.ne.s32.totalorder %s51, %s53
    %p60 = scmp.eq.s32.totalorder %s22, 1
    %p61 = por %p59, %p60
    %p62 = scmp.ne.s32.totalorder %s53, %s54
    %p63 = scmp.eq.s32.totalorder %s22, 0
    %p64 = por %p62, %p63
    %p65 = scmp.ne.s32.totalorder %s53, %s54
    %p66 = scmp.eq.s32.totalorder %s23, 1
    %p67 = por %p65, %p66
    %p69 = scmp.ne.s32.totalorder %s54, %s68
    %p70 = scmp.eq.s32.totalorder %s23, 0
    %p71 = por %p69, %p70
    %s73 = sadd.s32 %s72, 1
    %p76 = scmp.eq.s32.totalorder %s17, 1
    %p77 = scmp.ne.s32.totalorder %s72, %s74
    %p78 = scmp.eq.s32.totalorder %s17, 0
    %p79 = por %p77, %p78
    %p80 = scmp.ne.s32.totalorder %s72, %s74
    %p81 = scmp.eq.s32.totalorder %s22, 1
    %p82 = por %p80, %p81
    %p83 = scmp.ne.s32.totalorder %s74, %s75
    %p84 = scmp.eq.s32.totalorder %s22, 0
    %p85 = por %p83, %p84
    %p86 = scmp.ne.s32.totalorder %s74, %s75
    %p87 = scmp.eq.s32.totalorder %s23, 1
    %p88 = por %p86, %p87
    %p90 = scmp.ne.s32.totalorder %s75, %s89
    %p91 = scmp.eq.s32.totalorder %s23, 0
    %p92 = por %p90, %p91
    %s94 = sadd.s32 %s93, 1
    %p97 = scmp.eq.s32.totalorder %s17, 1
    %p98 = scmp.ne.s32.totalorder %s93, %s95
    %p99 = scmp.eq.s32.totalorder %s17, 0
    %p100 = por %p98, %p99
    %p101 = scmp.ne.s32.totalorder %s93, %s95
    %p102 = scmp.eq.s32.totalorder %s22, 1
    %p103 = por %p101, %p102
    %p104 = scmp.ne.s32.totalorder %s95, %s96
    %p105 = scmp.eq.s32.totalorder %s22, 0
    %p106 = por %p104, %p105
    %p107 = scmp.ne.s32.totalorder %s95, %s96
    %p108 = scmp.eq.s32.totalorder %s23, 1
    %p109 = por %p107, %p108
    %p111 = scmp.ne.s32.totalorder %s96, %s110
    %p112 = scmp.eq.s32.totalorder %s23, 0
    %p113 = por %p111, %p112
    %s115 = sadd.s32 %s114, 1
    %p118 = scmp.eq.s32.totalorder %s17, 1
    %p119 = scmp.ne.s32.totalorder %s114, %s116
    %p120 = scmp.eq.s32.totalorder %s17, 0
    %p121 = por %p119, %p120
    %p122 = scmp.ne.s32.totalorder %s114, %s116
    %p123 = scmp.eq.s32.totalorder %s22, 1
    %p124 = por %p122, %p123
    %p125 = scmp.ne.s32.totalorder %s116, %s117
    %p126 = scmp.eq.s32.totalorder %s22, 0
    %p127 = por %p125, %p126
    %p128 = scmp.ne.s32.totalorder %s116, %s117
    %p129 = scmp.eq.s32.totalorder %s23, 1
    %p130 = por %p128, %p129
    %p132 = scmp.ne.s32.totalorder %s117, %s131
    %p133 = scmp.eq.s32.totalorder %s23, 0
    %p134 = por %p132, %p133
    %s136 = sadd.s32 %s135, 1
    %p139 = scmp.eq.s32.totalorder %s17, 1
    %p140 = scmp.ne.s32.totalorder %s135, %s137
    %p141 = scmp.eq.s32.totalorder %s17, 0
    %p142 = por %p140, %p141
    %p143 = scmp.ne.s32.totalorder %s135, %s137
    %p144 = scmp.eq.s32.totalorder %s22, 1
    %p145 = por %p143, %p144
    %p146 = scmp.ne.s32.totalorder %s137, %s138
    %p147 = scmp.eq.s32.totalorder %s22, 0
    %p148 = por %p146, %p147
    %p149 = scmp.ne.s32.totalorder %s137, %s138
    %p150 = scmp.eq.s32.totalorder %s23, 1
    %p151 = por %p149, %p150
    %p153 = scmp.ne.s32.totalorder %s138, %s152
    %p154 = scmp.eq.s32.totalorder %s23, 0
    %p155 = por %p153, %p154
    %s157 = sadd.s32 %s156, 1
    %p160 = scmp.eq.s32.totalorder %s17, 1
    %p161 = scmp.ne.s32.totalorder %s156, %s158
    %p162 = scmp.eq.s32.totalorder %s17, 0
    %p163 = por %p161, %p162
    %p164 = scmp.ne.s32.totalorder %s156, %s158
    %p165 = scmp.eq.s32.totalorder %s22, 1
    %p166 = por %p164, %p165
    %p167 = scmp.ne.s32.totalorder %s158, %s159
    %p168 = scmp.eq.s32.totalorder %s22, 0
    %p169 = por %p167, %p168
    %p170 = scmp.ne.s32.totalorder %s158, %s159
    %p171 = scmp.eq.s32.totalorder %s23, 1
    %p172 = por %p170, %p171
    %p174 = scmp.ne.s32.totalorder %s159, %s173
    %p175 = scmp.eq.s32.totalorder %s23, 0
    %p176 = por %p174, %p175
    %s178 = sadd.s32 %s177, 1
    %p181 = scmp.eq.s32.totalorder %s17, 1
    %p182 = scmp.ne.s32.totalorder %s177, %s179
    %p183 = scmp.eq.s32.totalorder %s17, 0
    %p184 = por %p182, %p183
    %p185 = scmp.ne.s32.totalorder %s177, %s179
    %p186 = scmp.eq.s32.totalorder %s22, 1
    %p187 = por %p185, %p186
    %p188 = scmp.ne.s32.totalorder %s179, %s180
    %p189 = scmp.eq.s32.totalorder %s22, 0
    %p190 = por %p188, %p189
    %p191 = scmp.ne.s32.totalorder %s179, %s180
    %p192 = scmp.eq.s32.totalorder %s23, 1
    %p193 = por %p191, %p192
    %p195 = scmp.ne.s32.totalorder %s180, %s194
    %p196 = scmp.eq.s32.totalorder %s23, 0
    %p197 = por %p195, %p196
    %s199 = sadd.s32 %s198, 1
    %p202 = scmp.eq.s32.totalorder %s17, 1
    %p203 = scmp.ne.s32.totalorder %s198, %s200
    %p204 = scmp.eq.s32.totalorder %s17, 0
    %p205 = por %p203, %p204
    %p206 = scmp.ne.s32.totalorder %s198, %s200
    %p207 = scmp.eq.s32.totalorder %s22, 1
    %p208 = por %p206, %p207
    %p209 = scmp.ne.s32.totalorder %s200, %s201
    %p210 = scmp.eq.s32.totalorder %s22, 0
    %p211 = por %p209, %p210
    %p212 = scmp.ne.s32.totalorder %s200, %s201
    %p213 = scmp.eq.s32.totalorder %s23, 1
    %p214 = por %p212, %p213
    %p216 = scmp.ne.s32.totalorder %s201, %s215
    %p217 = scmp.eq.s32.totalorder %s23, 0
    %p218 = por %p216, %p217
    %s220 = sadd.s32 %s219, 1
    %p223 = scmp.eq.s32.totalorder %s17, 1
    %p224 = scmp.ne.s32.totalorder %s219, %s221
    %p225 = scmp.eq.s32.totalorder %s17, 0
    %p226 = por %p224, %p225
    %p227 = scmp.ne.s32.totalorder %s219, %s221
    %p228 = scmp.eq.s32.totalorder %s22, 1
    %p229 = por %p227, %p228
    %p230 = scmp.ne.s32.totalorder %s221, %s222
    %p231 = scmp.eq.s32.totalorder %s22, 0
    %p232 = por %p230, %p231
    %p233 = scmp.ne.s32.totalorder %s221, %s222
    %p234 = scmp.eq.s32.totalorder %s23, 1
    %p235 = por %p233, %p234
    %p237 = scmp.ne.s32.totalorder %s222, %s236
    %p238 = scmp.eq.s32.totalorder %s23, 0
    %p239 = por %p237, %p238
    %s241 = sadd.s32 %s240, 1
    %p244 = scmp.eq.s32.totalorder %s17, 1
    %p245 = scmp.ne.s32.totalorder %s240, %s242
    %p246 = scmp.eq.s32.totalorder %s17, 0
    %p247 = por %p245, %p246
    %p248 = scmp.ne.s32.totalorder %s240, %s242
    %p249 = scmp.eq.s32.totalorder %s22, 1
    %p250 = por %p248, %p249
    %p251 = scmp.ne.s32.totalorder %s242, %s243
    %p252 = scmp.eq.s32.totalorder %s22, 0
    %p253 = por %p251, %p252
    %p254 = scmp.ne.s32.totalorder %s242, %s243
    %p255 = scmp.eq.s32.totalorder %s23, 1
    %p256 = por %p254, %p255
    %p258 = scmp.ne.s32.totalorder %s243, %s257
    %p259 = scmp.eq.s32.totalorder %s23, 0
    %p260 = por %p258, %p259
    %s261 = ssub.s32 %s17, %s24
    %p262 = scmp.eq.s32.totalorder %s261, 0
    %s264 = sadd.s32 %s263, 1
    %s265 = scalar_select %p262, %s263, %s264
    %p268 = pneg %p262
    %p269 = scmp.eq.s32.totalorder %s17, 1
    %p270 = por %p268, %p269
    %p271 = scmp.ne.s32.totalorder %s263, %s266
    %p272 = scmp.eq.s32.totalorder %s17, 0
    %p273 = por %p271, %p272
    %p274 = scmp.ne.s32.totalorder %s263, %s266
    %p275 = scmp.eq.s32.totalorder %s22, 1
    %p276 = por %p274, %p275
    %p277 = scmp.ne.s32.totalorder %s266, %s267
    %p278 = scmp.eq.s32.totalorder %s22, 0
    %p279 = por %p277, %p278
    %p280 = scmp.ne.s32.totalorder %s266, %s267
    %p281 = scmp.eq.s32.totalorder %s23, 1
    %p282 = por %p280, %p281
    %p284 = scmp.ne.s32.totalorder %s267, %s283
    %p285 = scmp.eq.s32.totalorder %s23, 0
    %p286 = por %p284, %p285
    %p287 = scmp.le.s32.totalorder 1, %s17
    %p288 = scmp.lt.s32.totalorder %s17, 3
    %p289 = pnand %p287, %p288
    %p290 = pneg %p289
    // Predicated region
    $region9: #{nerf_forward.1} parent=5 // pred_check
      _
    $region10: #{nerf_forward.1} parent=5 // pred_check_branch
      %292 = sbr.rel (%p289) target = $region12
    $region11: #{nerf_forward.1} parent=5 // pred_region
      %s293 = ssub.s32 %s17, 1
      // Predicated region
      $region13: #{nerf_forward.1} parent=11 // pred_check
        %p294 = pneg %p64
      $region14: #{nerf_forward.1} parent=11 // pred_check_branch
        %296 = sbr.rel (%p294) target = $region16
      $region15: #{nerf_forward.1} parent=11 // pred_region
        _
      $region16: #{nerf_forward.1} parent=11 // pred_fallthru
        _
      // Predicated region
      $region17: #{nerf_forward.1} parent=11 // pred_check
        %p297 = pneg %p85
      $region18: #{nerf_forward.1} parent=11 // pred_check_branch
        %299 = sbr.rel (%p297) target = $region20
      $region19: #{nerf_forward.1} parent=11 // pred_region
        _
      $region20: #{nerf_forward.1} parent=11 // pred_fallthru
        _
      // Predicated region
      $region21: #{nerf_forward.1} parent=11 // pred_check
        %p300 = pneg %p106
      $region22: #{nerf_forward.1} parent=11 // pred_check_branch
        %302 = sbr.rel (%p300) target = $region24
      $region23: #{nerf_forward.1} parent=11 // pred_region
        _
      $region24: #{nerf_forward.1} parent=11 // pred_fallthru
        _
      // Predicated region
      $region25: #{nerf_forward.1} parent=11 // pred_check
        %p303 = pneg %p127
      $region26: #{nerf_forward.1} parent=11 // pred_check_branch
        %305 = sbr.rel (%p303) target = $region28
      $region27: #{nerf_forward.1} parent=11 // pred_region
        _
      $region28: #{nerf_forward.1} parent=11 // pred_fallthru
        _
      // Predicated region
      $region29: #{nerf_forward.1} parent=11 // pred_check
        %p306 = pneg %p148
      $region30: #{nerf_forward.1} parent=11 // pred_check_branch
        %308 = sbr.rel (%p306) target = $region32
      $region31: #{nerf_forward.1} parent=11 // pred_region
        _
      $region32: #{nerf_forward.1} parent=11 // pred_fallthru
        _
      // Predicated region
      $region33: #{nerf_forward.1} parent=11 // pred_check
        %p309 = pneg %p169
      $region34: #{nerf_forward.1} parent=11 // pred_check_branch
        %311 = sbr.rel (%p309) target = $region36
      $region35: #{nerf_forward.1} parent=11 // pred_region
        _
      $region36: #{nerf_forward.1} parent=11 // pred_fallthru
        _
      // Predicated region
      $region37: #{nerf_forward.1} parent=11 // pred_check
        %p312 = pneg %p190
      $region38: #{nerf_forward.1} parent=11 // pred_check_branch
        %314 = sbr.rel (%p312) target = $region40
      $region39: #{nerf_forward.1} parent=11 // pred_region
        _
      $region40: #{nerf_forward.1} parent=11 // pred_fallthru
        _
      // Predicated region
      $region41: #{nerf_forward.1} parent=11 // pred_check
        %p315 = pneg %p211
      $region42: #{nerf_forward.1} parent=11 // pred_check_branch
        %317 = sbr.rel (%p315) target = $region44
      $region43: #{nerf_forward.1} parent=11 // pred_region
        _
      $region44: #{nerf_forward.1} parent=11 // pred_fallthru
        _
      // Predicated region
      $region45: #{nerf_forward.1} parent=11 // pred_check
        %p318 = pneg %p232
      $region46: #{nerf_forward.1} parent=11 // pred_check_branch
        %320 = sbr.rel (%p318) target = $region48
      $region47: #{nerf_forward.1} parent=11 // pred_region
        _
      $region48: #{nerf_forward.1} parent=11 // pred_fallthru
        _
      // Predicated region
      $region49: #{nerf_forward.1} parent=11 // pred_check
        %p321 = pneg %p253
      $region50: #{nerf_forward.1} parent=11 // pred_check_branch
        %323 = sbr.rel (%p321) target = $region52
      $region51: #{nerf_forward.1} parent=11 // pred_region
        _
      $region52: #{nerf_forward.1} parent=11 // pred_fallthru
        _
    $region12: #{nerf_forward.1} parent=5 // pred_fallthru
      _
    %p324 = scmp.lt.s32.totalorder %s17, 2
    // Predicated region
    $region53: #{nerf_forward.1} parent=5 // pred_check
      %p325 = pneg %p324
    $region54: #{nerf_forward.1} parent=5 // pred_check_branch
      %327 = sbr.rel (%p325) target = $region56
    $region55: #{nerf_forward.1} parent=5 // pred_region
      // Predicated region
      $region57: #{nerf_forward.1} parent=55 // pred_check
        %p328 = pneg %p37
      $region58: #{nerf_forward.1} parent=55 // pred_check_branch
        %330 = sbr.rel (%p328) target = $region60
      $region59: #{nerf_forward.1} parent=55 // pred_region
        %s331 = smul.u32 64, %s17
        %p332 = scmp.lt.s32.totalorder %s331, 127
        %s333 = scalar_select %p332, %s331, 127
        %s334 = smul.addr %s333, 4
        %s335 = scalar_lea.vmem %s0, %s334
        %s336 = smul.u32 64, %s17
      $region60: #{nerf_forward.1} parent=55 // pred_fallthru
        _
    $region56: #{nerf_forward.1} parent=5 // pred_fallthru
      _
    %p337 = scmp.le.s32.totalorder 1, %s17
    %p338 = scmp.lt.s32.totalorder %s17, 3
    %p339 = pnand %p337, %p338
    %p340 = pneg %p339
    // Predicated region
    $region61: #{nerf_forward.1} parent=5 // pred_check
      _
    $region62: #{nerf_forward.1} parent=5 // pred_check_branch
      %342 = sbr.rel (%p339) target = $region64
    $region63: #{nerf_forward.1} parent=5 // pred_region
      %s343 = ssub.s32 %s17, 1
      %s344 = smul.u32 64, %s22
      %p345 = scmp.lt.s32.totalorder %s344, 127
      %s346 = scalar_select %p345, %s344, 127
      %s347 = smul.addr %s346, 4
      %s348 = scalar_lea.vmem %s0, %s347
      %p349 = pneg %p43
      %p350 = pneg %p40
      %p351 = pneg %p64
      %p352 = pneg %p61
      %p353 = pneg %p85
      %p354 = pneg %p82
      %p355 = pneg %p106
      %p356 = pneg %p103
      %p357 = pneg %p127
      %p358 = pneg %p124
      %p359 = pneg %p148
      %p360 = pneg %p145
      %p361 = pneg %p169
      %p362 = pneg %p166
      %p363 = pneg %p190
      %p364 = pneg %p187
      %p365 = pneg %p211
      %p366 = pneg %p208
      %p367 = pneg %p232
      %p368 = pneg %p229
      %p369 = pneg %p253
      %p370 = pneg %p250
      %p371 = pneg %p279
      %p372 = pneg %p276
      %s373 = smul.u32 64, %s22
      %p374 = scmp.lt.s32.totalorder %s373, 127
      %s375 = scalar_select %p374, %s373, 127
      %s376 = smul.addr %s375, 8
      %s377 = scalar_lea.vmem %s11, %s376
      %s378 = smul.u32 64, %s22
      %p379 = scmp.lt.s32.totalorder %s378, 127
      %s380 = scalar_select %p379, %s378, 127
      %s381 = smul.addr %s380, 4
      %s382 = scalar_lea.vmem %s0, %s381
      %s383 = smul.u32 64, %s22
      %s384 = smul.u32 64, %s22
      %p385 = scmp.lt.s32.totalorder %s384, 127
      %s386 = scalar_select %p385, %s384, 127
      %s387 = smul.addr %s386, 8
      %s388 = scalar_lea.vmem %s11, %s387
      %s389 = smul.u32 64, %s22
      %v391 = vld [vmem:[%s382] sm:$0xf]
      %v392 = vld [vmem:[%s382 + $0x4] sm:$0xf]
      %v393 = vld [vmem:[%s382 + $0x8] sm:$0xf]
      %v394 = vld [vmem:[%s382 + $0xc] sm:$0xf]
      %v395 = vld [vmem:[%s382 + $0x10] sm:$0xf]
      %v396 = vld [vmem:[%s382 + $0x14] sm:$0xf]
      %v397 = vld [vmem:[%s382 + $0x18] sm:$0xf]
      %v398 = vld [vmem:[%s382 + $0x1c] sm:$0xf]
      %v399 = vld [vmem:[%s382 + $0x20] sm:$0xf]
      %v400 = vld [vmem:[%s382 + $0x24] sm:$0xf]
      %v401 = vld [vmem:[%s382 + $0x28] sm:$0xf]
      %v402 = vld [vmem:[%s382 + $0x2c] sm:$0xf]
      %v403 = vld [vmem:[%s382 + $0x30] sm:$0xf]
      %v404 = vld [vmem:[%s382 + $0x34] sm:$0xf]
      %v405 = vld [vmem:[%s382 + $0x38] sm:$0xf]
      %v406 = vld [vmem:[%s382 + $0x3c] sm:$0xf]
      %v407 = vld [vmem:[%s382 + $0x40] sm:$0xf]
      %v408 = vld [vmem:[%s382 + $0x44] sm:$0xf]
      %v409 = vld [vmem:[%s382 + $0x48] sm:$0xf]
      %v410 = vld [vmem:[%s382 + $0x4c] sm:$0xf]
      %v411 = vld [vmem:[%s382 + $0x50] sm:$0xf]
      %v412 = vld [vmem:[%s382 + $0x54] sm:$0xf]
      %v413 = vld [vmem:[%s382 + $0x58] sm:$0xf]
      %v414 = vld [vmem:[%s382 + $0x5c] sm:$0xf]
      %v415 = vld [vmem:[%s382 + $0x60] sm:$0xf]
      %v416 = vld [vmem:[%s382 + $0x64] sm:$0xf]
      %v417 = vld [vmem:[%s382 + $0x68] sm:$0xf]
      %v418 = vld [vmem:[%s382 + $0x6c] sm:$0xf]
      %v419 = vld [vmem:[%s382 + $0x70] sm:$0xf]
      %v420 = vld [vmem:[%s382 + $0x74] sm:$0xf]
      %v421 = vld [vmem:[%s382 + $0x78] sm:$0xf]
      %v422 = vld [vmem:[%s382 + $0x7c] sm:$0xf]
      %v423 = vld [vmem:[%s382 + $0x80] sm:$0xf]
      %v424 = vld [vmem:[%s382 + $0x84] sm:$0xf]
      %v425 = vld [vmem:[%s382 + $0x88] sm:$0xf]
      %v426 = vld [vmem:[%s382 + $0x8c] sm:$0xf]
      %v427 = vld [vmem:[%s382 + $0x90] sm:$0xf]
      %v428 = vld [vmem:[%s382 + $0x94] sm:$0xf]
      %v429 = vld [vmem:[%s382 + $0x98] sm:$0xf]
      %v430 = vld [vmem:[%s382 + $0x9c] sm:$0xf]
      %v431 = vld [vmem:[%s382 + $0xa0] sm:$0xf]
      %v432 = vld [vmem:[%s382 + $0xa4] sm:$0xf]
      %v433 = vld [vmem:[%s382 + $0xa8] sm:$0xf]
      %v434 = vld [vmem:[%s382 + $0xac] sm:$0xf]
      %v435 = vld [vmem:[%s382 + $0xb0] sm:$0xf]
      %v436 = vld [vmem:[%s382 + $0xb4] sm:$0xf]
      %v437 = vld [vmem:[%s382 + $0xb8] sm:$0xf]
      %v438 = vld [vmem:[%s382 + $0xbc] sm:$0xf]
      %v439 = vld [vmem:[%s382 + $0xc0] sm:$0xf]
      %v440 = vld [vmem:[%s382 + $0xc4] sm:$0xf]
      %v441 = vld [vmem:[%s382 + $0xc8] sm:$0xf]
      %v442 = vld [vmem:[%s382 + $0xcc] sm:$0xf]
      %v443 = vld [vmem:[%s382 + $0xd0] sm:$0xf]
      %v444 = vld [vmem:[%s382 + $0xd4] sm:$0xf]
      %v445 = vld [vmem:[%s382 + $0xd8] sm:$0xf]
      %v446 = vld [vmem:[%s382 + $0xdc] sm:$0xf]
      %v447 = vld [vmem:[%s382 + $0xe0] sm:$0xf]
      %v448 = vld [vmem:[%s382 + $0xe4] sm:$0xf]
      %v449 = vld [vmem:[%s382 + $0xe8] sm:$0xf]
      %v450 = vld [vmem:[%s382 + $0xec] sm:$0xf]
      %v451 = vld [vmem:[%s382 + $0xf0] sm:$0xf]
      %v452 = vld [vmem:[%s382 + $0xf4] sm:$0xf]
      %v453 = vld [vmem:[%s382 + $0xf8] sm:$0xf]
      %v454 = vld [vmem:[%s382 + $0xfc] sm:$0xf]
      %v455 = vld [vmem:[%s1] sm:$0xf]
      %v456 = vld [vmem:[%s1 + $0x4] sm:$0xf]
      %v521 = vunpack.c.l.b16 %v391
      %v522 = vunpack.c.l.b16 %v392
      %v523 = vunpack.c.l.b16 %v393
      %v524 = vunpack.c.l.b16 %v394
      %v525 = vunpack.c.l.b16 %v395
      %v526 = vunpack.c.l.b16 %v396
      %v527 = vunpack.c.l.b16 %v397
      %v528 = vunpack.c.l.b16 %v398
      %v529 = vunpack.c.l.b16 %v399
      %v530 = vunpack.c.l.b16 %v400
      %v531 = vunpack.c.l.b16 %v401
      %v532 = vunpack.c.l.b16 %v402
      %v533 = vunpack.c.l.b16 %v403
      %v534 = vunpack.c.l.b16 %v404
      %v535 = vunpack.c.l.b16 %v405
      %v536 = vunpack.c.l.b16 %v406
      %v537 = vunpack.c.l.b16 %v407
      %v538 = vunpack.c.l.b16 %v408
      %v539 = vunpack.c.l.b16 %v409
      %v540 = vunpack.c.l.b16 %v410
      %v541 = vunpack.c.l.b16 %v411
      %v542 = vunpack.c.l.b16 %v412
      %v543 = vunpack.c.l.b16 %v413
      %v544 = vunpack.c.l.b16 %v414
      %v545 = vunpack.c.l.b16 %v415
      %v546 = vunpack.c.l.b16 %v416
      %v547 = vunpack.c.l.b16 %v417
      %v548 = vunpack.c.l.b16 %v418
      %v549 = vunpack.c.l.b16 %v419
      %v550 = vunpack.c.l.b16 %v420
      %v551 = vunpack.c.l.b16 %v421
      %v552 = vunpack.c.l.b16 %v422
      %v553 = vunpack.c.l.b16 %v423
      %v554 = vunpack.c.l.b16 %v424
      %v555 = vunpack.c.l.b16 %v425
      %v556 = vunpack.c.l.b16 %v426
      %v557 = vunpack.c.l.b16 %v427
      %v558 = vunpack.c.l.b16 %v428
      %v559 = vunpack.c.l.b16 %v429
      %v560 = vunpack.c.l.b16 %v430
      %v561 = vunpack.c.l.b16 %v431
      %v562 = vunpack.c.l.b16 %v432
      %v563 = vunpack.c.l.b16 %v433
      %v564 = vunpack.c.l.b16 %v434
      %v565 = vunpack.c.l.b16 %v435
      %v566 = vunpack.c.l.b16 %v436
      %v567 = vunpack.c.l.b16 %v437
      %v568 = vunpack.c.l.b16 %v438
      %v569 = vunpack.c.l.b16 %v439
      %v570 = vunpack.c.l.b16 %v440
      %v571 = vunpack.c.l.b16 %v441
      %v572 = vunpack.c.l.b16 %v442
      %v573 = vunpack.c.l.b16 %v443
      %v574 = vunpack.c.l.b16 %v444
      %v575 = vunpack.c.l.b16 %v445
      %v576 = vunpack.c.l.b16 %v446
      %v577 = vunpack.c.l.b16 %v447
      %v578 = vunpack.c.l.b16 %v448
      %v579 = vunpack.c.l.b16 %v449
      %v580 = vunpack.c.l.b16 %v450
      %v581 = vunpack.c.l.b16 %v451
      %v582 = vunpack.c.l.b16 %v452
      %v583 = vunpack.c.l.b16 %v453
      %v584 = vunpack.c.l.b16 %v454
      %v585 = vpack.c.b16 %v522, %v521
      %v586 = vpack.c.b16 %v524, %v523
      %v587 = vpack.c.b16 %v526, %v525
      %v588 = vpack.c.b16 %v528, %v527
      %v589 = vpack.c.b16 %v530, %v529
      %v590 = vpack.c.b16 %v532, %v531
      %v591 = vpack.c.b16 %v534, %v533
      %v592 = vpack.c.b16 %v536, %v535
      %v593 = vpack.c.b16 %v538, %v537
      %v594 = vpack.c.b16 %v540, %v539
      %v595 = vpack.c.b16 %v542, %v541
      %v596 = vpack.c.b16 %v544, %v543
      %v597 = vpack.c.b16 %v546, %v545
      %v598 = vpack.c.b16 %v548, %v547
      %v599 = vpack.c.b16 %v550, %v549
      %v600 = vpack.c.b16 %v552, %v551
      %v601 = vpack.c.b16 %v554, %v553
      %v602 = vpack.c.b16 %v556, %v555
      %v603 = vpack.c.b16 %v558, %v557
      %v604 = vpack.c.b16 %v560, %v559
      %v605 = vpack.c.b16 %v562, %v561
      %v606 = vpack.c.b16 %v564, %v563
      %v607 = vpack.c.b16 %v566, %v565
      %v608 = vpack.c.b16 %v568, %v567
      %v609 = vpack.c.b16 %v570, %v569
      %v610 = vpack.c.b16 %v572, %v571
      %v611 = vpack.c.b16 %v574, %v573
      %v612 = vpack.c.b16 %v576, %v575
      %v613 = vpack.c.b16 %v578, %v577
      %v614 = vpack.c.b16 %v580, %v579
      %v615 = vpack.c.b16 %v582, %v581
      %v616 = vpack.c.b16 %v584, %v583
      %v619 = vunpack.c.l.b16 %v455
      %v620 = vunpack.c.l.b16 %v456
      %v621 = vpack.c.b16 %v620, %v619
      %vm623 = vcmask 130048
      %v625 = vsel %vm623, %v585, 0
      %v628 = vsel %vm623, %v586, 0
      %v631 = vsel %vm623, %v587, 0
      %v634 = vsel %vm623, %v588, 0
      %v637 = vsel %vm623, %v589, 0
      %v640 = vsel %vm623, %v590, 0
      %v643 = vsel %vm623, %v591, 0
      %v646 = vsel %vm623, %v592, 0
      %v649 = vsel %vm623, %v593, 0
      %v652 = vsel %vm623, %v594, 0
      %v655 = vsel %vm623, %v595, 0
      %v658 = vsel %vm623, %v596, 0
      %v661 = vsel %vm623, %v597, 0
      %v664 = vsel %vm623, %v598, 0
      %v667 = vsel %vm623, %v599, 0
      %v670 = vsel %vm623, %v600, 0
      %v673 = vsel %vm623, %v601, 0
      %v676 = vsel %vm623, %v602, 0
      %v679 = vsel %vm623, %v603, 0
      %v682 = vsel %vm623, %v604, 0
      %v685 = vsel %vm623, %v605, 0
      %v688 = vsel %vm623, %v606, 0
      %v691 = vsel %vm623, %v607, 0
      %v694 = vsel %vm623, %v608, 0
      %v697 = vsel %vm623, %v609, 0
      %v700 = vsel %vm623, %v610, 0
      %v703 = vsel %vm623, %v611, 0
      %v706 = vsel %vm623, %v612, 0
      %v709 = vsel %vm623, %v613, 0
      %v712 = vsel %vm623, %v614, 0
      %v715 = vsel %vm623, %v615, 0
      %v718 = vsel %vm623, %v616, 0
      %720 = vmatpush.bf16.msra.mxu0 0
      %721 = vmatpush.bf16.msra.mxu0 0
      %722 = vmatpush.bf16.msra.mxu0 0
      %723 = vmatpush.bf16.msra.mxu0 0
      %724 = vmatpush.bf16.msra.mxu0 0
      %725 = vmatpush.bf16.msra.mxu0 0
      %726 = vmatpush.bf16.msra.mxu0 0
      %727 = vmatpush.bf16.msra.mxu0 %v621
      %728 = vmatmul.bf16.gmra.mxu0 %v625
      %v729 = vpop.f32.mrf.mxu0
      %v730 = vadd.f32 0.0, %v729
      %v731 = vpop.f32.mrf.mxu0
      %v732 = vadd.f32 0.0, %v731
      %733 = vmatmul.bf16.gmra.mxu0 %v628
      %v734 = vpop.f32.mrf.mxu0
      %v735 = vadd.f32 0.0, %v734
      %v736 = vpop.f32.mrf.mxu0
      %v737 = vadd.f32 0.0, %v736
      %738 = vmatmul.bf16.gmra.mxu0 %v631
      %v739 = vpop.f32.mrf.mxu0
      %v740 = vadd.f32 0.0, %v739
      %v741 = vpop.f32.mrf.mxu0
      %v742 = vadd.f32 0.0, %v741
      %743 = vmatmul.bf16.gmra.mxu0 %v634
      %v744 = vpop.f32.mrf.mxu0
      %v745 = vadd.f32 0.0, %v744
      %v746 = vpop.f32.mrf.mxu0
      %v747 = vadd.f32 0.0, %v746
      %748 = vmatmul.bf16.gmra.mxu0 %v637
      %v749 = vpop.f32.mrf.mxu0
      %v750 = vadd.f32 0.0, %v749
      %v751 = vpop.f32.mrf.mxu0
      %v752 = vadd.f32 0.0, %v751
      %753 = vmatmul.bf16.gmra.mxu0 %v640
      %v754 = vpop.f32.mrf.mxu0
      %v755 = vadd.f32 0.0, %v754
      %v756 = vpop.f32.mrf.mxu0
      %v757 = vadd.f32 0.0, %v756
      %758 = vmatmul.bf16.gmra.mxu0 %v643
      %v759 = vpop.f32.mrf.mxu0
      %v760 = vadd.f32 0.0, %v759
      %v761 = vpop.f32.mrf.mxu0
      %v762 = vadd.f32 0.0, %v761
      %763 = vmatmul.bf16.gmra.mxu0 %v646
      %v764 = vpop.f32.mrf.mxu0
      %v765 = vadd.f32 0.0, %v764
      %v766 = vpop.f32.mrf.mxu0
      %v767 = vadd.f32 0.0, %v766
      %768 = vmatmul.bf16.gmra.mxu0 %v649
      %v769 = vpop.f32.mrf.mxu0
      %v770 = vadd.f32 0.0, %v769
      %v771 = vpop.f32.mrf.mxu0
      %v772 = vadd.f32 0.0, %v771
      %773 = vmatmul.bf16.gmra.mxu0 %v652
      %v774 = vpop.f32.mrf.mxu0
      %v775 = vadd.f32 0.0, %v774
      %v776 = vpop.f32.mrf.mxu0
      %v777 = vadd.f32 0.0, %v776
      %778 = vmatmul.bf16.gmra.mxu0 %v655
      %v779 = vpop.f32.mrf.mxu0
      %v780 = vadd.f32 0.0, %v779
      %v781 = vpop.f32.mrf.mxu0
      %v782 = vadd.f32 0.0, %v781
      %783 = vmatmul.bf16.gmra.mxu0 %v658
      %v784 = vpop.f32.mrf.mxu0
      %v785 = vadd.f32 0.0, %v784
      %v786 = vpop.f32.mrf.mxu0
      %v787 = vadd.f32 0.0, %v786
      %788 = vmatmul.bf16.gmra.mxu0 %v661
      %v789 = vpop.f32.mrf.mxu0
      %v790 = vadd.f32 0.0, %v789
      %v791 = vpop.f32.mrf.mxu0
      %v792 = vadd.f32 0.0, %v791
      %793 = vmatmul.bf16.gmra.mxu0 %v664
      %v794 = vpop.f32.mrf.mxu0
      %v795 = vadd.f32 0.0, %v794
      %v796 = vpop.f32.mrf.mxu0
      %v797 = vadd.f32 0.0, %v796
      %798 = vmatmul.bf16.gmra.mxu0 %v667
      %v799 = vpop.f32.mrf.mxu0
      %v800 = vadd.f32 0.0, %v799
      %v801 = vpop.f32.mrf.mxu0
      %v802 = vadd.f32 0.0, %v801
      %803 = vmatmul.bf16.gmra.mxu0 %v670
      %v804 = vpop.f32.mrf.mxu0
      %v805 = vadd.f32 0.0, %v804
      %v806 = vpop.f32.mrf.mxu0
      %v807 = vadd.f32 0.0, %v806
      %808 = vmatmul.bf16.gmra.mxu0 %v673
      %v809 = vpop.f32.mrf.mxu0
      %v810 = vadd.f32 0.0, %v809
      %v811 = vpop.f32.mrf.mxu0
      %v812 = vadd.f32 0.0, %v811
      %813 = vmatmul.bf16.gmra.mxu0 %v676
      %v814 = vpop.f32.mrf.mxu0
      %v815 = vadd.f32 0.0, %v814
      %v816 = vpop.f32.mrf.mxu0
      %v817 = vadd.f32 0.0, %v816
      %818 = vmatmul.bf16.gmra.mxu0 %v679
      %v819 = vpop.f32.mrf.mxu0
      %v820 = vadd.f32 0.0, %v819
      %v821 = vpop.f32.mrf.mxu0
      %v822 = vadd.f32 0.0, %v821
      %823 = vmatmul.bf16.gmra.mxu0 %v682
      %v824 = vpop.f32.mrf.mxu0
      %v825 = vadd.f32 0.0, %v824
      %v826 = vpop.f32.mrf.mxu0
      %v827 = vadd.f32 0.0, %v826
      %828 = vmatmul.bf16.gmra.mxu0 %v685
      %v829 = vpop.f32.mrf.mxu0
      %v830 = vadd.f32 0.0, %v829
      %v831 = vpop.f32.mrf.mxu0
      %v832 = vadd.f32 0.0, %v831
      %833 = vmatmul.bf16.gmra.mxu0 %v688
      %v834 = vpop.f32.mrf.mxu0
      %v835 = vadd.f32 0.0, %v834
      %v836 = vpop.f32.mrf.mxu0
      %v837 = vadd.f32 0.0, %v836
      %838 = vmatmul.bf16.gmra.mxu0 %v691
      %v839 = vpop.f32.mrf.mxu0
      %v840 = vadd.f32 0.0, %v839
      %v841 = vpop.f32.mrf.mxu0
      %v842 = vadd.f32 0.0, %v841
      %843 = vmatmul.bf16.gmra.mxu0 %v694
      %v844 = vpop.f32.mrf.mxu0
      %v845 = vadd.f32 0.0, %v844
      %v846 = vpop.f32.mrf.mxu0
      %v847 = vadd.f32 0.0, %v846
      %848 = vmatmul.bf16.gmra.mxu0 %v697
      %v849 = vpop.f32.mrf.mxu0
      %v850 = vadd.f32 0.0, %v849
      %v851 = vpop.f32.mrf.mxu0
      %v852 = vadd.f32 0.0, %v851
      %853 = vmatmul.bf16.gmra.mxu0 %v700
      %v854 = vpop.f32.mrf.mxu0
      %v855 = vadd.f32 0.0, %v854
      %v856 = vpop.f32.mrf.mxu0
      %v857 = vadd.f32 0.0, %v856
      %858 = vmatmul.bf16.gmra.mxu0 %v703
      %v859 = vpop.f32.mrf.mxu0
      %v860 = vadd.f32 0.0, %v859
      %v861 = vpop.f32.mrf.mxu0
      %v862 = vadd.f32 0.0, %v861
      %863 = vmatmul.bf16.gmra.mxu0 %v706
      %v864 = vpop.f32.mrf.mxu0
      %v865 = vadd.f32 0.0, %v864
      %v866 = vpop.f32.mrf.mxu0
      %v867 = vadd.f32 0.0, %v866
      %868 = vmatmul.bf16.gmra.mxu0 %v709
      %v869 = vpop.f32.mrf.mxu0
      %v870 = vadd.f32 0.0, %v869
      %v871 = vpop.f32.mrf.mxu0
      %v872 = vadd.f32 0.0, %v871
      %873 = vmatmul.bf16.gmra.mxu0 %v712
      %v874 = vpop.f32.mrf.mxu0
      %v875 = vadd.f32 0.0, %v874
      %v876 = vpop.f32.mrf.mxu0
      %v877 = vadd.f32 0.0, %v876
      %878 = vmatmul.bf16.gmra.mxu0 %v715
      %v879 = vpop.f32.mrf.mxu0
      %v880 = vadd.f32 0.0, %v879
      %v881 = vpop.f32.mrf.mxu0
      %v882 = vadd.f32 0.0, %v881
      %883 = vmatmul.bf16.gmra.mxu0 %v718
      %v884 = vpop.f32.mrf.mxu0
      %v885 = vadd.f32 0.0, %v884
      %v886 = vpop.f32.mrf.mxu0
      %v887 = vadd.f32 0.0, %v886
      %888 = vdwg.mxu0
      %v889 = vpack.c.bf16 %v730, %v730
      %v890 = vpack.c.bf16 %v732, %v732
      %v891 = vpack.c.bf16 %v735, %v735
      %v892 = vpack.c.bf16 %v737, %v737
      %v893 = vpack.c.bf16 %v740, %v740
      %v894 = vpack.c.bf16 %v742, %v742
      %v895 = vpack.c.bf16 %v745, %v745
      %v896 = vpack.c.bf16 %v747, %v747
      %v897 = vpack.c.bf16 %v750, %v750
      %v898 = vpack.c.bf16 %v752, %v752
      %v899 = vpack.c.bf16 %v755, %v755
      %v900 = vpack.c.bf16 %v757, %v757
      %v901 = vpack.c.bf16 %v760, %v760
      %v902 = vpack.c.bf16 %v762, %v762
      %v903 = vpack.c.bf16 %v765, %v765
      %v904 = vpack.c.bf16 %v767, %v767
      %v905 = vpack.c.bf16 %v770, %v770
      %v906 = vpack.c.bf16 %v772, %v772
      %v907 = vpack.c.bf16 %v775, %v775
      %v908 = vpack.c.bf16 %v777, %v777
      %v909 = vpack.c.bf16 %v780, %v780
      %v910 = vpack.c.bf16 %v782, %v782
      %v911 = vpack.c.bf16 %v785, %v785
      %v912 = vpack.c.bf16 %v787, %v787
      %v913 = vpack.c.bf16 %v790, %v790
      %v914 = vpack.c.bf16 %v792, %v792
      %v915 = vpack.c.bf16 %v795, %v795
      %v916 = vpack.c.bf16 %v797, %v797
      %v917 = vpack.c.bf16 %v800, %v800
      %v918 = vpack.c.bf16 %v802, %v802
      %v919 = vpack.c.bf16 %v805, %v805
      %v920 = vpack.c.bf16 %v807, %v807
      %v921 = vpack.c.bf16 %v810, %v810
      %v922 = vpack.c.bf16 %v812, %v812
      %v923 = vpack.c.bf16 %v815, %v815
      %v924 = vpack.c.bf16 %v817, %v817
      %v925 = vpack.c.bf16 %v820, %v820
      %v926 = vpack.c.bf16 %v822, %v822
      %v927 = vpack.c.bf16 %v825, %v825
      %v928 = vpack.c.bf16 %v827, %v827
      %v929 = vpack.c.bf16 %v830, %v830
      %v930 = vpack.c.bf16 %v832, %v832
      %v931 = vpack.c.bf16 %v835, %v835
      %v932 = vpack.c.bf16 %v837, %v837
      %v933 = vpack.c.bf16 %v840, %v840
      %v934 = vpack.c.bf16 %v842, %v842
      %v935 = vpack.c.bf16 %v845, %v845
      %v936 = vpack.c.bf16 %v847, %v847
      %v937 = vpack.c.bf16 %v850, %v850
      %v938 = vpack.c.bf16 %v852, %v852
      %v939 = vpack.c.bf16 %v855, %v855
      %v940 = vpack.c.bf16 %v857, %v857
      %v941 = vpack.c.bf16 %v860, %v860
      %v942 = vpack.c.bf16 %v862, %v862
      %v943 = vpack.c.bf16 %v865, %v865
      %v944 = vpack.c.bf16 %v867, %v867
      %v945 = vpack.c.bf16 %v870, %v870
      %v946 = vpack.c.bf16 %v872, %v872
      %v947 = vpack.c.bf16 %v875, %v875
      %v948 = vpack.c.bf16 %v877, %v877
      %v949 = vpack.c.bf16 %v880, %v880
      %v950 = vpack.c.bf16 %v882, %v882
      %v951 = vpack.c.bf16 %v885, %v885
      %v952 = vpack.c.bf16 %v887, %v887
      %v953 = vld [vmem:[%s2] sm:$0x1]
      %v955 = vpack.i.b16 %v953, %v953
      %v957 = vperm.slane %v955, 0
      %v958 = vunpack.c.l.bf16 %v889
      %v959 = vunpack.c.l.bf16 %v890
      %v960 = vunpack.c.l.bf16 %v891
      %v961 = vunpack.c.l.bf16 %v892
      %v962 = vunpack.c.l.bf16 %v893
      %v963 = vunpack.c.l.bf16 %v894
      %v964 = vunpack.c.l.bf16 %v895
      %v965 = vunpack.c.l.bf16 %v896
      %v966 = vunpack.c.l.bf16 %v897
      %v967 = vunpack.c.l.bf16 %v898
      %v968 = vunpack.c.l.bf16 %v899
      %v969 = vunpack.c.l.bf16 %v900
      %v970 = vunpack.c.l.bf16 %v901
      %v971 = vunpack.c.l.bf16 %v902
      %v972 = vunpack.c.l.bf16 %v903
      %v973 = vunpack.c.l.bf16 %v904
      %v974 = vunpack.c.l.bf16 %v905
      %v975 = vunpack.c.l.bf16 %v906
      %v976 = vunpack.c.l.bf16 %v907
      %v977 = vunpack.c.l.bf16 %v908
      %v978 = vunpack.c.l.bf16 %v909
      %v979 = vunpack.c.l.bf16 %v910
      %v980 = vunpack.c.l.bf16 %v911
      %v981 = vunpack.c.l.bf16 %v912
      %v982 = vunpack.c.l.bf16 %v913
      %v983 = vunpack.c.l.bf16 %v914
      %v984 = vunpack.c.l.bf16 %v915
      %v985 = vunpack.c.l.bf16 %v916
      %v986 = vunpack.c.l.bf16 %v917
      %v987 = vunpack.c.l.bf16 %v918
      %v988 = vunpack.c.l.bf16 %v919
      %v989 = vunpack.c.l.bf16 %v920
      %v990 = vunpack.c.l.bf16 %v921
      %v991 = vunpack.c.l.bf16 %v922
      %v992 = vunpack.c.l.bf16 %v923
      %v993 = vunpack.c.l.bf16 %v924
      %v994 = vunpack.c.l.bf16 %v925
      %v995 = vunpack.c.l.bf16 %v926
      %v996 = vunpack.c.l.bf16 %v927
      %v997 = vunpack.c.l.bf16 %v928
      %v998 = vunpack.c.l.bf16 %v929
      %v999 = vunpack.c.l.bf16 %v930
      %v1000 = vunpack.c.l.bf16 %v931
      %v1001 = vunpack.c.l.bf16 %v932
      %v1002 = vunpack.c.l.bf16 %v933
      %v1003 = vunpack.c.l.bf16 %v934
      %v1004 = vunpack.c.l.bf16 %v935
      %v1005 = vunpack.c.l.bf16 %v936
      %v1006 = vunpack.c.l.bf16 %v937
      %v1007 = vunpack.c.l.bf16 %v938
      %v1008 = vunpack.c.l.bf16 %v939
      %v1009 = vunpack.c.l.bf16 %v940
      %v1010 = vunpack.c.l.bf16 %v941
      %v1011 = vunpack.c.l.bf16 %v942
      %v1012 = vunpack.c.l.bf16 %v943
      %v1013 = vunpack.c.l.bf16 %v944
      %v1014 = vunpack.c.l.bf16 %v945
      %v1015 = vunpack.c.l.bf16 %v946
      %v1016 = vunpack.c.l.bf16 %v947
      %v1017 = vunpack.c.l.bf16 %v948
      %v1018 = vunpack.c.l.bf16 %v949
      %v1019 = vunpack.c.l.bf16 %v950
      %v1020 = vunpack.c.l.bf16 %v951
      %v1021 = vunpack.c.l.bf16 %v952
      %v1022 = vunpack.c.l.bf16 %v957
      %v1023 = vadd.f32 %v958, %v1022
      %v1024 = vadd.f32 %v959, %v1022
      %v1025 = vadd.f32 %v960, %v1022
      %v1026 = vadd.f32 %v961, %v1022
      %v1027 = vadd.f32 %v962, %v1022
      %v1028 = vadd.f32 %v963, %v1022
      %v1029 = vadd.f32 %v964, %v1022
      %v1030 = vadd.f32 %v965, %v1022
      %v1031 = vadd.f32 %v966, %v1022
      %v1032 = vadd.f32 %v967, %v1022
      %v1033 = vadd.f32 %v968, %v1022
      %v1034 = vadd.f32 %v969, %v1022
      %v1035 = vadd.f32 %v970, %v1022
      %v1036 = vadd.f32 %v971, %v1022
      %v1037 = vadd.f32 %v972, %v1022
      %v1038 = vadd.f32 %v973, %v1022
      %v1039 = vadd.f32 %v974, %v1022
      %v1040 = vadd.f32 %v975, %v1022
      %v1041 = vadd.f32 %v976, %v1022
      %v1042 = vadd.f32 %v977, %v1022
      %v1043 = vadd.f32 %v978, %v1022
      %v1044 = vadd.f32 %v979, %v1022
      %v1045 = vadd.f32 %v980, %v1022
      %v1046 = vadd.f32 %v981, %v1022
      %v1047 = vadd.f32 %v982, %v1022
      %v1048 = vadd.f32 %v983, %v1022
      %v1049 = vadd.f32 %v984, %v1022
      %v1050 = vadd.f32 %v985, %v1022
      %v1051 = vadd.f32 %v986, %v1022
      %v1052 = vadd.f32 %v987, %v1022
      %v1053 = vadd.f32 %v988, %v1022
      %v1054 = vadd.f32 %v989, %v1022
      %v1055 = vadd.f32 %v990, %v1022
      %v1056 = vadd.f32 %v991, %v1022
      %v1057 = vadd.f32 %v992, %v1022
      %v1058 = vadd.f32 %v993, %v1022
      %v1059 = vadd.f32 %v994, %v1022
      %v1060 = vadd.f32 %v995, %v1022
      %v1061 = vadd.f32 %v996, %v1022
      %v1062 = vadd.f32 %v997, %v1022
      %v1063 = vadd.f32 %v998, %v1022
      %v1064 = vadd.f32 %v999, %v1022
      %v1065 = vadd.f32 %v1000, %v1022
      %v1066 = vadd.f32 %v1001, %v1022
      %v1067 = vadd.f32 %v1002, %v1022
      %v1068 = vadd.f32 %v1003, %v1022
      %v1069 = vadd.f32 %v1004, %v1022
      %v1070 = vadd.f32 %v1005, %v1022
      %v1071 = vadd.f32 %v1006, %v1022
      %v1072 = vadd.f32 %v1007, %v1022
      %v1073 = vadd.f32 %v1008, %v1022
      %v1074 = vadd.f32 %v1009, %v1022
      %v1075 = vadd.f32 %v1010, %v1022
      %v1076 = vadd.f32 %v1011, %v1022
      %v1077 = vadd.f32 %v1012, %v1022
      %v1078 = vadd.f32 %v1013, %v1022
      %v1079 = vadd.f32 %v1014, %v1022
      %v1080 = vadd.f32 %v1015, %v1022
      %v1081 = vadd.f32 %v1016, %v1022
      %v1082 = vadd.f32 %v1017, %v1022
      %v1083 = vadd.f32 %v1018, %v1022
      %v1084 = vadd.f32 %v1019, %v1022
      %v1085 = vadd.f32 %v1020, %v1022
      %v1086 = vadd.f32 %v1021, %v1022
      %v1087 = vpack.c.bf16 %v1023, %v1023
      %v1088 = vpack.c.bf16 %v1024, %v1024
      %v1089 = vpack.c.bf16 %v1025, %v1025
      %v1090 = vpack.c.bf16 %v1026, %v1026
      %v1091 = vpack.c.bf16 %v1027, %v1027
      %v1092 = vpack.c.bf16 %v1028, %v1028
      %v1093 = vpack.c.bf16 %v1029, %v1029
      %v1094 = vpack.c.bf16 %v1030, %v1030
      %v1095 = vpack.c.bf16 %v1031, %v1031
      %v1096 = vpack.c.bf16 %v1032, %v1032
      %v1097 = vpack.c.bf16 %v1033, %v1033
      %v1098 = vpack.c.bf16 %v1034, %v1034
      %v1099 = vpack.c.bf16 %v1035, %v1035
      %v1100 = vpack.c.bf16 %v1036, %v1036
      %v1101 = vpack.c.bf16 %v1037, %v1037
      %v1102 = vpack.c.bf16 %v1038, %v1038
      %v1103 = vpack.c.bf16 %v1039, %v1039
      %v1104 = vpack.c.bf16 %v1040, %v1040
      %v1105 = vpack.c.bf16 %v1041, %v1041
      %v1106 = vpack.c.bf16 %v1042, %v1042
      %v1107 = vpack.c.bf16 %v1043, %v1043
      %v1108 = vpack.c.bf16 %v1044, %v1044
      %v1109 = vpack.c.bf16 %v1045, %v1045
      %v1110 = vpack.c.bf16 %v1046, %v1046
      %v1111 = vpack.c.bf16 %v1047, %v1047
      %v1112 = vpack.c.bf16 %v1048, %v1048
      %v1113 = vpack.c.bf16 %v1049, %v1049
      %v1114 = vpack.c.bf16 %v1050, %v1050
      %v1115 = vpack.c.bf16 %v1051, %v1051
      %v1116 = vpack.c.bf16 %v1052, %v1052
      %v1117 = vpack.c.bf16 %v1053, %v1053
      %v1118 = vpack.c.bf16 %v1054, %v1054
      %v1119 = vpack.c.bf16 %v1055, %v1055
      %v1120 = vpack.c.bf16 %v1056, %v1056
      %v1121 = vpack.c.bf16 %v1057, %v1057
      %v1122 = vpack.c.bf16 %v1058, %v1058
      %v1123 = vpack.c.bf16 %v1059, %v1059
      %v1124 = vpack.c.bf16 %v1060, %v1060
      %v1125 = vpack.c.bf16 %v1061, %v1061
      %v1126 = vpack.c.bf16 %v1062, %v1062
      %v1127 = vpack.c.bf16 %v1063, %v1063
      %v1128 = vpack.c.bf16 %v1064, %v1064
      %v1129 = vpack.c.bf16 %v1065, %v1065
      %v1130 = vpack.c.bf16 %v1066, %v1066
      %v1131 = vpack.c.bf16 %v1067, %v1067
      %v1132 = vpack.c.bf16 %v1068, %v1068
      %v1133 = vpack.c.bf16 %v1069, %v1069
      %v1134 = vpack.c.bf16 %v1070, %v1070
      %v1135 = vpack.c.bf16 %v1071, %v1071
      %v1136 = vpack.c.bf16 %v1072, %v1072
      %v1137 = vpack.c.bf16 %v1073, %v1073
      %v1138 = vpack.c.bf16 %v1074, %v1074
      %v1139 = vpack.c.bf16 %v1075, %v1075
      %v1140 = vpack.c.bf16 %v1076, %v1076
      %v1141 = vpack.c.bf16 %v1077, %v1077
      %v1142 = vpack.c.bf16 %v1078, %v1078
      %v1143 = vpack.c.bf16 %v1079, %v1079
      %v1144 = vpack.c.bf16 %v1080, %v1080
      %v1145 = vpack.c.bf16 %v1081, %v1081
      %v1146 = vpack.c.bf16 %v1082, %v1082
      %v1147 = vpack.c.bf16 %v1083, %v1083
      %v1148 = vpack.c.bf16 %v1084, %v1084
      %v1149 = vpack.c.bf16 %v1085, %v1085
      %v1150 = vpack.c.bf16 %v1086, %v1086
      %v1151 = vunpack.c.l.bf16 %v1087
      %v1152 = vunpack.c.l.bf16 %v1088
      %v1153 = vunpack.c.l.bf16 %v1089
      %v1154 = vunpack.c.l.bf16 %v1090
      %v1155 = vunpack.c.l.bf16 %v1091
      %v1156 = vunpack.c.l.bf16 %v1092
      %v1157 = vunpack.c.l.bf16 %v1093
      %v1158 = vunpack.c.l.bf16 %v1094
      %v1159 = vunpack.c.l.bf16 %v1095
      %v1160 = vunpack.c.l.bf16 %v1096
      %v1161 = vunpack.c.l.bf16 %v1097
      %v1162 = vunpack.c.l.bf16 %v1098
      %v1163 = vunpack.c.l.bf16 %v1099
      %v1164 = vunpack.c.l.bf16 %v1100
      %v1165 = vunpack.c.l.bf16 %v1101
      %v1166 = vunpack.c.l.bf16 %v1102
      %v1167 = vunpack.c.l.bf16 %v1103
      %v1168 = vunpack.c.l.bf16 %v1104
      %v1169 = vunpack.c.l.bf16 %v1105
      %v1170 = vunpack.c.l.bf16 %v1106
      %v1171 = vunpack.c.l.bf16 %v1107
      %v1172 = vunpack.c.l.bf16 %v1108
      %v1173 = vunpack.c.l.bf16 %v1109
      %v1174 = vunpack.c.l.bf16 %v1110
      %v1175 = vunpack.c.l.bf16 %v1111
      %v1176 = vunpack.c.l.bf16 %v1112
      %v1177 = vunpack.c.l.bf16 %v1113
      %v1178 = vunpack.c.l.bf16 %v1114
      %v1179 = vunpack.c.l.bf16 %v1115
      %v1180 = vunpack.c.l.bf16 %v1116
      %v1181 = vunpack.c.l.bf16 %v1117
      %v1182 = vunpack.c.l.bf16 %v1118
      %v1183 = vunpack.c.l.bf16 %v1119
      %v1184 = vunpack.c.l.bf16 %v1120
      %v1185 = vunpack.c.l.bf16 %v1121
      %v1186 = vunpack.c.l.bf16 %v1122
      %v1187 = vunpack.c.l.bf16 %v1123
      %v1188 = vunpack.c.l.bf16 %v1124
      %v1189 = vunpack.c.l.bf16 %v1125
      %v1190 = vunpack.c.l.bf16 %v1126
      %v1191 = vunpack.c.l.bf16 %v1127
      %v1192 = vunpack.c.l.bf16 %v1128
      %v1193 = vunpack.c.l.bf16 %v1129
      %v1194 = vunpack.c.l.bf16 %v1130
      %v1195 = vunpack.c.l.bf16 %v1131
      %v1196 = vunpack.c.l.bf16 %v1132
      %v1197 = vunpack.c.l.bf16 %v1133
      %v1198 = vunpack.c.l.bf16 %v1134
      %v1199 = vunpack.c.l.bf16 %v1135
      %v1200 = vunpack.c.l.bf16 %v1136
      %v1201 = vunpack.c.l.bf16 %v1137
      %v1202 = vunpack.c.l.bf16 %v1138
      %v1203 = vunpack.c.l.bf16 %v1139
      %v1204 = vunpack.c.l.bf16 %v1140
      %v1205 = vunpack.c.l.bf16 %v1141
      %v1206 = vunpack.c.l.bf16 %v1142
      %v1207 = vunpack.c.l.bf16 %v1143
      %v1208 = vunpack.c.l.bf16 %v1144
      %v1209 = vunpack.c.l.bf16 %v1145
      %v1210 = vunpack.c.l.bf16 %v1146
      %v1211 = vunpack.c.l.bf16 %v1147
      %v1212 = vunpack.c.l.bf16 %v1148
      %v1213 = vunpack.c.l.bf16 %v1149
      %v1214 = vunpack.c.l.bf16 %v1150
      %v1215 = vmax.f32 %v1151, 0.0
      %v1216 = vmax.f32 %v1152, 0.0
      %v1217 = vmax.f32 %v1153, 0.0
      %v1218 = vmax.f32 %v1154, 0.0
      %v1219 = vmax.f32 %v1155, 0.0
      %v1220 = vmax.f32 %v1156, 0.0
      %v1221 = vmax.f32 %v1157, 0.0
      %v1222 = vmax.f32 %v1158, 0.0
      %v1223 = vmax.f32 %v1159, 0.0
      %v1224 = vmax.f32 %v1160, 0.0
      %v1225 = vmax.f32 %v1161, 0.0
      %v1226 = vmax.f32 %v1162, 0.0
      %v1227 = vmax.f32 %v1163, 0.0
      %v1228 = vmax.f32 %v1164, 0.0
      %v1229 = vmax.f32 %v1165, 0.0
      %v1230 = vmax.f32 %v1166, 0.0
      %v1231 = vmax.f32 %v1167, 0.0
      %v1232 = vmax.f32 %v1168, 0.0
      %v1233 = vmax.f32 %v1169, 0.0
      %v1234 = vmax.f32 %v1170, 0.0
      %v1235 = vmax.f32 %v1171, 0.0
      %v1236 = vmax.f32 %v1172, 0.0
      %v1237 = vmax.f32 %v1173, 0.0
      %v1238 = vmax.f32 %v1174, 0.0
      %v1239 = vmax.f32 %v1175, 0.0
      %v1240 = vmax.f32 %v1176, 0.0
      %v1241 = vmax.f32 %v1177, 0.0
      %v1242 = vmax.f32 %v1178, 0.0
      %v1243 = vmax.f32 %v1179, 0.0
      %v1244 = vmax.f32 %v1180, 0.0
      %v1245 = vmax.f32 %v1181, 0.0
      %v1246 = vmax.f32 %v1182, 0.0
      %v1247 = vmax.f32 %v1183, 0.0
      %v1248 = vmax.f32 %v1184, 0.0
      %v1249 = vmax.f32 %v1185, 0.0
      %v1250 = vmax.f32 %v1186, 0.0
      %v1251 = vmax.f32 %v1187, 0.0
      %v1252 = vmax.f32 %v1188, 0.0
      %v1253 = vmax.f32 %v1189, 0.0
      %v1254 = vmax.f32 %v1190, 0.0
      %v1255 = vmax.f32 %v1191, 0.0
      %v1256 = vmax.f32 %v1192, 0.0
      %v1257 = vmax.f32 %v1193, 0.0
      %v1258 = vmax.f32 %v1194, 0.0
      %v1259 = vmax.f32 %v1195, 0.0
      %v1260 = vmax.f32 %v1196, 0.0
      %v1261 = vmax.f32 %v1197, 0.0
      %v1262 = vmax.f32 %v1198, 0.0
      %v1263 = vmax.f32 %v1199, 0.0
      %v1264 = vmax.f32 %v1200, 0.0
      %v1265 = vmax.f32 %v1201, 0.0
      %v1266 = vmax.f32 %v1202, 0.0
      %v1267 = vmax.f32 %v1203, 0.0
      %v1268 = vmax.f32 %v1204, 0.0
      %v1269 = vmax.f32 %v1205, 0.0
      %v1270 = vmax.f32 %v1206, 0.0
      %v1271 = vmax.f32 %v1207, 0.0
      %v1272 = vmax.f32 %v1208, 0.0
      %v1273 = vmax.f32 %v1209, 0.0
      %v1274 = vmax.f32 %v1210, 0.0
      %v1275 = vmax.f32 %v1211, 0.0
      %v1276 = vmax.f32 %v1212, 0.0
      %v1277 = vmax.f32 %v1213, 0.0
      %v1278 = vmax.f32 %v1214, 0.0
      %v1279 = vpack.c.bf16 %v1216, %v1215
      %v1280 = vpack.c.bf16 %v1218, %v1217
      %v1281 = vpack.c.bf16 %v1220, %v1219
      %v1282 = vpack.c.bf16 %v1222, %v1221
      %v1283 = vpack.c.bf16 %v1224, %v1223
      %v1284 = vpack.c.bf16 %v1226, %v1225
      %v1285 = vpack.c.bf16 %v1228, %v1227
      %v1286 = vpack.c.bf16 %v1230, %v1229
      %v1287 = vpack.c.bf16 %v1232, %v1231
      %v1288 = vpack.c.bf16 %v1234, %v1233
      %v1289 = vpack.c.bf16 %v1236, %v1235
      %v1290 = vpack.c.bf16 %v1238, %v1237
      %v1291 = vpack.c.bf16 %v1240, %v1239
      %v1292 = vpack.c.bf16 %v1242, %v1241
      %v1293 = vpack.c.bf16 %v1244, %v1243
      %v1294 = vpack.c.bf16 %v1246, %v1245
      %v1295 = vpack.c.bf16 %v1248, %v1247
      %v1296 = vpack.c.bf16 %v1250, %v1249
      %v1297 = vpack.c.bf16 %v1252, %v1251
      %v1298 = vpack.c.bf16 %v1254, %v1253
      %v1299 = vpack.c.bf16 %v1256, %v1255
      %v1300 = vpack.c.bf16 %v1258, %v1257
      %v1301 = vpack.c.bf16 %v1260, %v1259
      %v1302 = vpack.c.bf16 %v1262, %v1261
      %v1303 = vpack.c.bf16 %v1264, %v1263
      %v1304 = vpack.c.bf16 %v1266, %v1265
      %v1305 = vpack.c.bf16 %v1268, %v1267
      %v1306 = vpack.c.bf16 %v1270, %v1269
      %v1307 = vpack.c.bf16 %v1272, %v1271
      %v1308 = vpack.c.bf16 %v1274, %v1273
      %v1309 = vpack.c.bf16 %v1276, %v1275
      %v1310 = vpack.c.bf16 %v1278, %v1277
      %v1311 = vld [vmem:[%s3] sm:$0xf]
      %v1312 = vld [vmem:[%s3 + $0x4] sm:$0xf]
      %v1313 = vld [vmem:[%s3 + $0x8] sm:$0xf]
      %v1314 = vld [vmem:[%s3 + $0xc] sm:$0xf]
      %v1315 = vld [vmem:[%s3 + $0x10] sm:$0xf]
      %v1316 = vld [vmem:[%s3 + $0x14] sm:$0xf]
      %v1317 = vld [vmem:[%s3 + $0x18] sm:$0xf]
      %v1318 = vld [vmem:[%s3 + $0x1c] sm:$0xf]
      %v1319 = vld [vmem:[%s3 + $0x20] sm:$0xf]
      %v1320 = vld [vmem:[%s3 + $0x24] sm:$0xf]
      %v1321 = vld [vmem:[%s3 + $0x28] sm:$0xf]
      %v1322 = vld [vmem:[%s3 + $0x2c] sm:$0xf]
      %v1323 = vld [vmem:[%s3 + $0x30] sm:$0xf]
      %v1324 = vld [vmem:[%s3 + $0x34] sm:$0xf]
      %v1325 = vld [vmem:[%s3 + $0x38] sm:$0xf]
      %v1326 = vld [vmem:[%s3 + $0x3c] sm:$0xf]
      %v1343 = vunpack.c.l.b16 %v1311
      %v1344 = vunpack.c.l.b16 %v1312
      %v1345 = vunpack.c.l.b16 %v1313
      %v1346 = vunpack.c.l.b16 %v1314
      %v1347 = vunpack.c.l.b16 %v1315
      %v1348 = vunpack.c.l.b16 %v1316
      %v1349 = vunpack.c.l.b16 %v1317
      %v1350 = vunpack.c.l.b16 %v1318
      %v1351 = vunpack.c.l.b16 %v1319
      %v1352 = vunpack.c.l.b16 %v1320
      %v1353 = vunpack.c.l.b16 %v1321
      %v1354 = vunpack.c.l.b16 %v1322
      %v1355 = vunpack.c.l.b16 %v1323
      %v1356 = vunpack.c.l.b16 %v1324
      %v1357 = vunpack.c.l.b16 %v1325
      %v1358 = vunpack.c.l.b16 %v1326
      %v1359 = vpack.c.b16 %v1344, %v1343
      %v1360 = vpack.c.b16 %v1346, %v1345
      %v1361 = vpack.c.b16 %v1348, %v1347
      %v1362 = vpack.c.b16 %v1350, %v1349
      %v1363 = vpack.c.b16 %v1352, %v1351
      %v1364 = vpack.c.b16 %v1354, %v1353
      %v1365 = vpack.c.b16 %v1356, %v1355
      %v1366 = vpack.c.b16 %v1358, %v1357
      %1375 = vmatpush.bf16.msra.mxu0 %v1366
      %1376 = vmatpush.bf16.msra.mxu0 %v1365
      %1377 = vmatpush.bf16.msra.mxu0 %v1364
      %1378 = vmatpush.bf16.msra.mxu0 %v1363
      %1379 = vmatpush.bf16.msra.mxu0 %v1362
      %1380 = vmatpush.bf16.msra.mxu0 %v1361
      %1381 = vmatpush.bf16.msra.mxu0 %v1360
      %1382 = vmatpush.bf16.msra.mxu0 %v1359
      %1383 = vmatmul.bf16.gmra.mxu0 %v1279
      %v1384 = vpop.f32.mrf.mxu0
      %v1385 = vadd.f32 0.0, %v1384
      %v1386 = vpop.f32.mrf.mxu0
      %v1387 = vadd.f32 0.0, %v1386
      %1388 = vmatmul.bf16.gmra.mxu0 %v1280
      %v1389 = vpop.f32.mrf.mxu0
      %v1390 = vadd.f32 0.0, %v1389
      %v1391 = vpop.f32.mrf.mxu0
      %v1392 = vadd.f32 0.0, %v1391
      %1393 = vmatmul.bf16.gmra.mxu0 %v1281
      %v1394 = vpop.f32.mrf.mxu0
      %v1395 = vadd.f32 0.0, %v1394
      %v1396 = vpop.f32.mrf.mxu0
      %v1397 = vadd.f32 0.0, %v1396
      %1398 = vmatmul.bf16.gmra.mxu0 %v1282
      %v1399 = vpop.f32.mrf.mxu0
      %v1400 = vadd.f32 0.0, %v1399
      %v1401 = vpop.f32.mrf.mxu0
      %v1402 = vadd.f32 0.0, %v1401
      %1403 = vmatmul.bf16.gmra.mxu0 %v1283
      %v1404 = vpop.f32.mrf.mxu0
      %v1405 = vadd.f32 0.0, %v1404
      %v1406 = vpop.f32.mrf.mxu0
      %v1407 = vadd.f32 0.0, %v1406
      %1408 = vmatmul.bf16.gmra.mxu0 %v1284
      %v1409 = vpop.f32.mrf.mxu0
      %v1410 = vadd.f32 0.0, %v1409
      %v1411 = vpop.f32.mrf.mxu0
      %v1412 = vadd.f32 0.0, %v1411
      %1413 = vmatmul.bf16.gmra.mxu0 %v1285
      %v1414 = vpop.f32.mrf.mxu0
      %v1415 = vadd.f32 0.0, %v1414
      %v1416 = vpop.f32.mrf.mxu0
      %v1417 = vadd.f32 0.0, %v1416
      %1418 = vmatmul.bf16.gmra.mxu0 %v1286
      %v1419 = vpop.f32.mrf.mxu0
      %v1420 = vadd.f32 0.0, %v1419
      %v1421 = vpop.f32.mrf.mxu0
      %v1422 = vadd.f32 0.0, %v1421
      %1423 = vmatmul.bf16.gmra.mxu0 %v1287
      %v1424 = vpop.f32.mrf.mxu0
      %v1425 = vadd.f32 0.0, %v1424
      %v1426 = vpop.f32.mrf.mxu0
      %v1427 = vadd.f32 0.0, %v1426
      %1428 = vmatmul.bf16.gmra.mxu0 %v1288
      %v1429 = vpop.f32.mrf.mxu0
      %v1430 = vadd.f32 0.0, %v1429
      %v1431 = vpop.f32.mrf.mxu0
      %v1432 = vadd.f32 0.0, %v1431
      %1433 = vmatmul.bf16.gmra.mxu0 %v1289
      %v1434 = vpop.f32.mrf.mxu0
      %v1435 = vadd.f32 0.0, %v1434
      %v1436 = vpop.f32.mrf.mxu0
      %v1437 = vadd.f32 0.0, %v1436
      %1438 = vmatmul.bf16.gmra.mxu0 %v1290
      %v1439 = vpop.f32.mrf.mxu0
      %v1440 = vadd.f32 0.0, %v1439
      %v1441 = vpop.f32.mrf.mxu0
      %v1442 = vadd.f32 0.0, %v1441
      %1443 = vmatmul.bf16.gmra.mxu0 %v1291
      %v1444 = vpop.f32.mrf.mxu0
      %v1445 = vadd.f32 0.0, %v1444
      %v1446 = vpop.f32.mrf.mxu0
      %v1447 = vadd.f32 0.0, %v1446
      %1448 = vmatmul.bf16.gmra.mxu0 %v1292
      %v1449 = vpop.f32.mrf.mxu0
      %v1450 = vadd.f32 0.0, %v1449
      %v1451 = vpop.f32.mrf.mxu0
      %v1452 = vadd.f32 0.0, %v1451
      %1453 = vmatmul.bf16.gmra.mxu0 %v1293
      %v1454 = vpop.f32.mrf.mxu0
      %v1455 = vadd.f32 0.0, %v1454
      %v1456 = vpop.f32.mrf.mxu0
      %v1457 = vadd.f32 0.0, %v1456
      %1458 = vmatmul.bf16.gmra.mxu0 %v1294
      %v1459 = vpop.f32.mrf.mxu0
      %v1460 = vadd.f32 0.0, %v1459
      %v1461 = vpop.f32.mrf.mxu0
      %v1462 = vadd.f32 0.0, %v1461
      %1463 = vmatmul.bf16.gmra.mxu0 %v1295
      %v1464 = vpop.f32.mrf.mxu0
      %v1465 = vadd.f32 0.0, %v1464
      %v1466 = vpop.f32.mrf.mxu0
      %v1467 = vadd.f32 0.0, %v1466
      %1468 = vmatmul.bf16.gmra.mxu0 %v1296
      %v1469 = vpop.f32.mrf.mxu0
      %v1470 = vadd.f32 0.0, %v1469
      %v1471 = vpop.f32.mrf.mxu0
      %v1472 = vadd.f32 0.0, %v1471
      %1473 = vmatmul.bf16.gmra.mxu0 %v1297
      %v1474 = vpop.f32.mrf.mxu0
      %v1475 = vadd.f32 0.0, %v1474
      %v1476 = vpop.f32.mrf.mxu0
      %v1477 = vadd.f32 0.0, %v1476
      %1478 = vmatmul.bf16.gmra.mxu0 %v1298
      %v1479 = vpop.f32.mrf.mxu0
      %v1480 = vadd.f32 0.0, %v1479
      %v1481 = vpop.f32.mrf.mxu0
      %v1482 = vadd.f32 0.0, %v1481
      %1483 = vmatmul.bf16.gmra.mxu0 %v1299
      %v1484 = vpop.f32.mrf.mxu0
      %v1485 = vadd.f32 0.0, %v1484
      %v1486 = vpop.f32.mrf.mxu0
      %v1487 = vadd.f32 0.0, %v1486
      %1488 = vmatmul.bf16.gmra.mxu0 %v1300
      %v1489 = vpop.f32.mrf.mxu0
      %v1490 = vadd.f32 0.0, %v1489
      %v1491 = vpop.f32.mrf.mxu0
      %v1492 = vadd.f32 0.0, %v1491
      %1493 = vmatmul.bf16.gmra.mxu0 %v1301
      %v1494 = vpop.f32.mrf.mxu0
      %v1495 = vadd.f32 0.0, %v1494
      %v1496 = vpop.f32.mrf.mxu0
      %v1497 = vadd.f32 0.0, %v1496
      %1498 = vmatmul.bf16.gmra.mxu0 %v1302
      %v1499 = vpop.f32.mrf.mxu0
      %v1500 = vadd.f32 0.0, %v1499
      %v1501 = vpop.f32.mrf.mxu0
      %v1502 = vadd.f32 0.0, %v1501
      %1503 = vmatmul.bf16.gmra.mxu0 %v1303
      %v1504 = vpop.f32.mrf.mxu0
      %v1505 = vadd.f32 0.0, %v1504
      %v1506 = vpop.f32.mrf.mxu0
      %v1507 = vadd.f32 0.0, %v1506
      %1508 = vmatmul.bf16.gmra.mxu0 %v1304
      %v1509 = vpop.f32.mrf.mxu0
      %v1510 = vadd.f32 0.0, %v1509
      %v1511 = vpop.f32.mrf.mxu0
      %v1512 = vadd.f32 0.0, %v1511
      %1513 = vmatmul.bf16.gmra.mxu0 %v1305
      %v1514 = vpop.f32.mrf.mxu0
      %v1515 = vadd.f32 0.0, %v1514
      %v1516 = vpop.f32.mrf.mxu0
      %v1517 = vadd.f32 0.0, %v1516
      %1518 = vmatmul.bf16.gmra.mxu0 %v1306
      %v1519 = vpop.f32.mrf.mxu0
      %v1520 = vadd.f32 0.0, %v1519
      %v1521 = vpop.f32.mrf.mxu0
      %v1522 = vadd.f32 0.0, %v1521
      %1523 = vmatmul.bf16.gmra.mxu0 %v1307
      %v1524 = vpop.f32.mrf.mxu0
      %v1525 = vadd.f32 0.0, %v1524
      %v1526 = vpop.f32.mrf.mxu0
      %v1527 = vadd.f32 0.0, %v1526
      %1528 = vmatmul.bf16.gmra.mxu0 %v1308
      %v1529 = vpop.f32.mrf.mxu0
      %v1530 = vadd.f32 0.0, %v1529
      %v1531 = vpop.f32.mrf.mxu0
      %v1532 = vadd.f32 0.0, %v1531
      %1533 = vmatmul.bf16.gmra.mxu0 %v1309
      %v1534 = vpop.f32.mrf.mxu0
      %v1535 = vadd.f32 0.0, %v1534
      %v1536 = vpop.f32.mrf.mxu0
      %v1537 = vadd.f32 0.0, %v1536
      %1538 = vmatmul.bf16.gmra.mxu0 %v1310
      %v1539 = vpop.f32.mrf.mxu0
      %v1540 = vadd.f32 0.0, %v1539
      %v1541 = vpop.f32.mrf.mxu0
      %v1542 = vadd.f32 0.0, %v1541
      %1543 = vdwg.mxu0
      %v1544 = vpack.c.bf16 %v1385, %v1385
      %v1545 = vpack.c.bf16 %v1387, %v1387
      %v1546 = vpack.c.bf16 %v1390, %v1390
      %v1547 = vpack.c.bf16 %v1392, %v1392
      %v1548 = vpack.c.bf16 %v1395, %v1395
      %v1549 = vpack.c.bf16 %v1397, %v1397
      %v1550 = vpack.c.bf16 %v1400, %v1400
      %v1551 = vpack.c.bf16 %v1402, %v1402
      %v1552 = vpack.c.bf16 %v1405, %v1405
      %v1553 = vpack.c.bf16 %v1407, %v1407
      %v1554 = vpack.c.bf16 %v1410, %v1410
      %v1555 = vpack.c.bf16 %v1412, %v1412
      %v1556 = vpack.c.bf16 %v1415, %v1415
      %v1557 = vpack.c.bf16 %v1417, %v1417
      %v1558 = vpack.c.bf16 %v1420, %v1420
      %v1559 = vpack.c.bf16 %v1422, %v1422
      %v1560 = vpack.c.bf16 %v1425, %v1425
      %v1561 = vpack.c.bf16 %v1427, %v1427
      %v1562 = vpack.c.bf16 %v1430, %v1430
      %v1563 = vpack.c.bf16 %v1432, %v1432
      %v1564 = vpack.c.bf16 %v1435, %v1435
      %v1565 = vpack.c.bf16 %v1437, %v1437
      %v1566 = vpack.c.bf16 %v1440, %v1440
      %v1567 = vpack.c.bf16 %v1442, %v1442
      %v1568 = vpack.c.bf16 %v1445, %v1445
      %v1569 = vpack.c.bf16 %v1447, %v1447
      %v1570 = vpack.c.bf16 %v1450, %v1450
      %v1571 = vpack.c.bf16 %v1452, %v1452
      %v1572 = vpack.c.bf16 %v1455, %v1455
      %v1573 = vpack.c.bf16 %v1457, %v1457
      %v1574 = vpack.c.bf16 %v1460, %v1460
      %v1575 = vpack.c.bf16 %v1462, %v1462
      %v1576 = vpack.c.bf16 %v1465, %v1465
      %v1577 = vpack.c.bf16 %v1467, %v1467
      %v1578 = vpack.c.bf16 %v1470, %v1470
      %v1579 = vpack.c.bf16 %v1472, %v1472
      %v1580 = vpack.c.bf16 %v1475, %v1475
      %v1581 = vpack.c.bf16 %v1477, %v1477
      %v1582 = vpack.c.bf16 %v1480, %v1480
      %v1583 = vpack.c.bf16 %v1482, %v1482
      %v1584 = vpack.c.bf16 %v1485, %v1485
      %v1585 = vpack.c.bf16 %v1487, %v1487
      %v1586 = vpack.c.bf16 %v1490, %v1490
      %v1587 = vpack.c.bf16 %v1492, %v1492
      %v1588 = vpack.c.bf16 %v1495, %v1495
      %v1589 = vpack.c.bf16 %v1497, %v1497
      %v1590 = vpack.c.bf16 %v1500, %v1500
      %v1591 = vpack.c.bf16 %v1502, %v1502
      %v1592 = vpack.c.bf16 %v1505, %v1505
      %v1593 = vpack.c.bf16 %v1507, %v1507
      %v1594 = vpack.c.bf16 %v1510, %v1510
      %v1595 = vpack.c.bf16 %v1512, %v1512
      %v1596 = vpack.c.bf16 %v1515, %v1515
      %v1597 = vpack.c.bf16 %v1517, %v1517
      %v1598 = vpack.c.bf16 %v1520, %v1520
      %v1599 = vpack.c.bf16 %v1522, %v1522
      %v1600 = vpack.c.bf16 %v1525, %v1525
      %v1601 = vpack.c.bf16 %v1527, %v1527
      %v1602 = vpack.c.bf16 %v1530, %v1530
      %v1603 = vpack.c.bf16 %v1532, %v1532
      %v1604 = vpack.c.bf16 %v1535, %v1535
      %v1605 = vpack.c.bf16 %v1537, %v1537
      %v1606 = vpack.c.bf16 %v1540, %v1540
      %v1607 = vpack.c.bf16 %v1542, %v1542
      %v1608 = vld [vmem:[%s4] sm:$0x1]
      %v1610 = vpack.i.b16 %v1608, %v1608
      %v1612 = vperm.slane %v1610, 0
      %v1613 = vunpack.c.l.bf16 %v1544
      %v1614 = vunpack.c.l.bf16 %v1545
      %v1615 = vunpack.c.l.bf16 %v1546
      %v1616 = vunpack.c.l.bf16 %v1547
      %v1617 = vunpack.c.l.bf16 %v1548
      %v1618 = vunpack.c.l.bf16 %v1549
      %v1619 = vunpack.c.l.bf16 %v1550
      %v1620 = vunpack.c.l.bf16 %v1551
      %v1621 = vunpack.c.l.bf16 %v1552
      %v1622 = vunpack.c.l.bf16 %v1553
      %v1623 = vunpack.c.l.bf16 %v1554
      %v1624 = vunpack.c.l.bf16 %v1555
      %v1625 = vunpack.c.l.bf16 %v1556
      %v1626 = vunpack.c.l.bf16 %v1557
      %v1627 = vunpack.c.l.bf16 %v1558
      %v1628 = vunpack.c.l.bf16 %v1559
      %v1629 = vunpack.c.l.bf16 %v1560
      %v1630 = vunpack.c.l.bf16 %v1561
      %v1631 = vunpack.c.l.bf16 %v1562
      %v1632 = vunpack.c.l.bf16 %v1563
      %v1633 = vunpack.c.l.bf16 %v1564
      %v1634 = vunpack.c.l.bf16 %v1565
      %v1635 = vunpack.c.l.bf16 %v1566
      %v1636 = vunpack.c.l.bf16 %v1567
      %v1637 = vunpack.c.l.bf16 %v1568
      %v1638 = vunpack.c.l.bf16 %v1569
      %v1639 = vunpack.c.l.bf16 %v1570
      %v1640 = vunpack.c.l.bf16 %v1571
      %v1641 = vunpack.c.l.bf16 %v1572
      %v1642 = vunpack.c.l.bf16 %v1573
      %v1643 = vunpack.c.l.bf16 %v1574
      %v1644 = vunpack.c.l.bf16 %v1575
      %v1645 = vunpack.c.l.bf16 %v1576
      %v1646 = vunpack.c.l.bf16 %v1577
      %v1647 = vunpack.c.l.bf16 %v1578
      %v1648 = vunpack.c.l.bf16 %v1579
      %v1649 = vunpack.c.l.bf16 %v1580
      %v1650 = vunpack.c.l.bf16 %v1581
      %v1651 = vunpack.c.l.bf16 %v1582
      %v1652 = vunpack.c.l.bf16 %v1583
      %v1653 = vunpack.c.l.bf16 %v1584
      %v1654 = vunpack.c.l.bf16 %v1585
      %v1655 = vunpack.c.l.bf16 %v1586
      %v1656 = vunpack.c.l.bf16 %v1587
      %v1657 = vunpack.c.l.bf16 %v1588
      %v1658 = vunpack.c.l.bf16 %v1589
      %v1659 = vunpack.c.l.bf16 %v1590
      %v1660 = vunpack.c.l.bf16 %v1591
      %v1661 = vunpack.c.l.bf16 %v1592
      %v1662 = vunpack.c.l.bf16 %v1593
      %v1663 = vunpack.c.l.bf16 %v1594
      %v1664 = vunpack.c.l.bf16 %v1595
      %v1665 = vunpack.c.l.bf16 %v1596
      %v1666 = vunpack.c.l.bf16 %v1597
      %v1667 = vunpack.c.l.bf16 %v1598
      %v1668 = vunpack.c.l.bf16 %v1599
      %v1669 = vunpack.c.l.bf16 %v1600
      %v1670 = vunpack.c.l.bf16 %v1601
      %v1671 = vunpack.c.l.bf16 %v1602
      %v1672 = vunpack.c.l.bf16 %v1603
      %v1673 = vunpack.c.l.bf16 %v1604
      %v1674 = vunpack.c.l.bf16 %v1605
      %v1675 = vunpack.c.l.bf16 %v1606
      %v1676 = vunpack.c.l.bf16 %v1607
      %v1677 = vunpack.c.l.bf16 %v1612
      %v1678 = vadd.f32 %v1613, %v1677
      %v1679 = vadd.f32 %v1614, %v1677
      %v1680 = vadd.f32 %v1615, %v1677
      %v1681 = vadd.f32 %v1616, %v1677
      %v1682 = vadd.f32 %v1617, %v1677
      %v1683 = vadd.f32 %v1618, %v1677
      %v1684 = vadd.f32 %v1619, %v1677
      %v1685 = vadd.f32 %v1620, %v1677
      %v1686 = vadd.f32 %v1621, %v1677
      %v1687 = vadd.f32 %v1622, %v1677
      %v1688 = vadd.f32 %v1623, %v1677
      %v1689 = vadd.f32 %v1624, %v1677
      %v1690 = vadd.f32 %v1625, %v1677
      %v1691 = vadd.f32 %v1626, %v1677
      %v1692 = vadd.f32 %v1627, %v1677
      %v1693 = vadd.f32 %v1628, %v1677
      %v1694 = vadd.f32 %v1629, %v1677
      %v1695 = vadd.f32 %v1630, %v1677
      %v1696 = vadd.f32 %v1631, %v1677
      %v1697 = vadd.f32 %v1632, %v1677
      %v1698 = vadd.f32 %v1633, %v1677
      %v1699 = vadd.f32 %v1634, %v1677
      %v1700 = vadd.f32 %v1635, %v1677
      %v1701 = vadd.f32 %v1636, %v1677
      %v1702 = vadd.f32 %v1637, %v1677
      %v1703 = vadd.f32 %v1638, %v1677
      %v1704 = vadd.f32 %v1639, %v1677
      %v1705 = vadd.f32 %v1640, %v1677
      %v1706 = vadd.f32 %v1641, %v1677
      %v1707 = vadd.f32 %v1642, %v1677
      %v1708 = vadd.f32 %v1643, %v1677
      %v1709 = vadd.f32 %v1644, %v1677
      %v1710 = vadd.f32 %v1645, %v1677
      %v1711 = vadd.f32 %v1646, %v1677
      %v1712 = vadd.f32 %v1647, %v1677
      %v1713 = vadd.f32 %v1648, %v1677
      %v1714 = vadd.f32 %v1649, %v1677
      %v1715 = vadd.f32 %v1650, %v1677
      %v1716 = vadd.f32 %v1651, %v1677
      %v1717 = vadd.f32 %v1652, %v1677
      %v1718 = vadd.f32 %v1653, %v1677
      %v1719 = vadd.f32 %v1654, %v1677
      %v1720 = vadd.f32 %v1655, %v1677
      %v1721 = vadd.f32 %v1656, %v1677
      %v1722 = vadd.f32 %v1657, %v1677
      %v1723 = vadd.f32 %v1658, %v1677
      %v1724 = vadd.f32 %v1659, %v1677
      %v1725 = vadd.f32 %v1660, %v1677
      %v1726 = vadd.f32 %v1661, %v1677
      %v1727 = vadd.f32 %v1662, %v1677
      %v1728 = vadd.f32 %v1663, %v1677
      %v1729 = vadd.f32 %v1664, %v1677
      %v1730 = vadd.f32 %v1665, %v1677
      %v1731 = vadd.f32 %v1666, %v1677
      %v1732 = vadd.f32 %v1667, %v1677
      %v1733 = vadd.f32 %v1668, %v1677
      %v1734 = vadd.f32 %v1669, %v1677
      %v1735 = vadd.f32 %v1670, %v1677
      %v1736 = vadd.f32 %v1671, %v1677
      %v1737 = vadd.f32 %v1672, %v1677
      %v1738 = vadd.f32 %v1673, %v1677
      %v1739 = vadd.f32 %v1674, %v1677
      %v1740 = vadd.f32 %v1675, %v1677
      %v1741 = vadd.f32 %v1676, %v1677
      %v1742 = vpack.c.bf16 %v1678, %v1678
      %v1743 = vpack.c.bf16 %v1679, %v1679
      %v1744 = vpack.c.bf16 %v1680, %v1680
      %v1745 = vpack.c.bf16 %v1681, %v1681
      %v1746 = vpack.c.bf16 %v1682, %v1682
      %v1747 = vpack.c.bf16 %v1683, %v1683
      %v1748 = vpack.c.bf16 %v1684, %v1684
      %v1749 = vpack.c.bf16 %v1685, %v1685
      %v1750 = vpack.c.bf16 %v1686, %v1686
      %v1751 = vpack.c.bf16 %v1687, %v1687
      %v1752 = vpack.c.bf16 %v1688, %v1688
      %v1753 = vpack.c.bf16 %v1689, %v1689
      %v1754 = vpack.c.bf16 %v1690, %v1690
      %v1755 = vpack.c.bf16 %v1691, %v1691
      %v1756 = vpack.c.bf16 %v1692, %v1692
      %v1757 = vpack.c.bf16 %v1693, %v1693
      %v1758 = vpack.c.bf16 %v1694, %v1694
      %v1759 = vpack.c.bf16 %v1695, %v1695
      %v1760 = vpack.c.bf16 %v1696, %v1696
      %v1761 = vpack.c.bf16 %v1697, %v1697
      %v1762 = vpack.c.bf16 %v1698, %v1698
      %v1763 = vpack.c.bf16 %v1699, %v1699
      %v1764 = vpack.c.bf16 %v1700, %v1700
      %v1765 = vpack.c.bf16 %v1701, %v1701
      %v1766 = vpack.c.bf16 %v1702, %v1702
      %v1767 = vpack.c.bf16 %v1703, %v1703
      %v1768 = vpack.c.bf16 %v1704, %v1704
      %v1769 = vpack.c.bf16 %v1705, %v1705
      %v1770 = vpack.c.bf16 %v1706, %v1706
      %v1771 = vpack.c.bf16 %v1707, %v1707
      %v1772 = vpack.c.bf16 %v1708, %v1708
      %v1773 = vpack.c.bf16 %v1709, %v1709
      %v1774 = vpack.c.bf16 %v1710, %v1710
      %v1775 = vpack.c.bf16 %v1711, %v1711
      %v1776 = vpack.c.bf16 %v1712, %v1712
      %v1777 = vpack.c.bf16 %v1713, %v1713
      %v1778 = vpack.c.bf16 %v1714, %v1714
      %v1779 = vpack.c.bf16 %v1715, %v1715
      %v1780 = vpack.c.bf16 %v1716, %v1716
      %v1781 = vpack.c.bf16 %v1717, %v1717
      %v1782 = vpack.c.bf16 %v1718, %v1718
      %v1783 = vpack.c.bf16 %v1719, %v1719
      %v1784 = vpack.c.bf16 %v1720, %v1720
      %v1785 = vpack.c.bf16 %v1721, %v1721
      %v1786 = vpack.c.bf16 %v1722, %v1722
      %v1787 = vpack.c.bf16 %v1723, %v1723
      %v1788 = vpack.c.bf16 %v1724, %v1724
      %v1789 = vpack.c.bf16 %v1725, %v1725
      %v1790 = vpack.c.bf16 %v1726, %v1726
      %v1791 = vpack.c.bf16 %v1727, %v1727
      %v1792 = vpack.c.bf16 %v1728, %v1728
      %v1793 = vpack.c.bf16 %v1729, %v1729
      %v1794 = vpack.c.bf16 %v1730, %v1730
      %v1795 = vpack.c.bf16 %v1731, %v1731
      %v1796 = vpack.c.bf16 %v1732, %v1732
      %v1797 = vpack.c.bf16 %v1733, %v1733
      %v1798 = vpack.c.bf16 %v1734, %v1734
      %v1799 = vpack.c.bf16 %v1735, %v1735
      %v1800 = vpack.c.bf16 %v1736, %v1736
      %v1801 = vpack.c.bf16 %v1737, %v1737
      %v1802 = vpack.c.bf16 %v1738, %v1738
      %v1803 = vpack.c.bf16 %v1739, %v1739
      %v1804 = vpack.c.bf16 %v1740, %v1740
      %v1805 = vpack.c.bf16 %v1741, %v1741
      %v1806 = vunpack.c.l.bf16 %v1742
      %v1807 = vunpack.c.l.bf16 %v1743
      %v1808 = vunpack.c.l.bf16 %v1744
      %v1809 = vunpack.c.l.bf16 %v1745
      %v1810 = vunpack.c.l.bf16 %v1746
      %v1811 = vunpack.c.l.bf16 %v1747
      %v1812 = vunpack.c.l.bf16 %v1748
      %v1813 = vunpack.c.l.bf16 %v1749
      %v1814 = vunpack.c.l.bf16 %v1750
      %v1815 = vunpack.c.l.bf16 %v1751
      %v1816 = vunpack.c.l.bf16 %v1752
      %v1817 = vunpack.c.l.bf16 %v1753
      %v1818 = vunpack.c.l.bf16 %v1754
      %v1819 = vunpack.c.l.bf16 %v1755
      %v1820 = vunpack.c.l.bf16 %v1756
      %v1821 = vunpack.c.l.bf16 %v1757
      %v1822 = vunpack.c.l.bf16 %v1758
      %v1823 = vunpack.c.l.bf16 %v1759
      %v1824 = vunpack.c.l.bf16 %v1760
      %v1825 = vunpack.c.l.bf16 %v1761
      %v1826 = vunpack.c.l.bf16 %v1762
      %v1827 = vunpack.c.l.bf16 %v1763
      %v1828 = vunpack.c.l.bf16 %v1764
      %v1829 = vunpack.c.l.bf16 %v1765
      %v1830 = vunpack.c.l.bf16 %v1766
      %v1831 = vunpack.c.l.bf16 %v1767
      %v1832 = vunpack.c.l.bf16 %v1768
      %v1833 = vunpack.c.l.bf16 %v1769
      %v1834 = vunpack.c.l.bf16 %v1770
      %v1835 = vunpack.c.l.bf16 %v1771
      %v1836 = vunpack.c.l.bf16 %v1772
      %v1837 = vunpack.c.l.bf16 %v1773
      %v1838 = vunpack.c.l.bf16 %v1774
      %v1839 = vunpack.c.l.bf16 %v1775
      %v1840 = vunpack.c.l.bf16 %v1776
      %v1841 = vunpack.c.l.bf16 %v1777
      %v1842 = vunpack.c.l.bf16 %v1778
      %v1843 = vunpack.c.l.bf16 %v1779
      %v1844 = vunpack.c.l.bf16 %v1780
      %v1845 = vunpack.c.l.bf16 %v1781
      %v1846 = vunpack.c.l.bf16 %v1782
      %v1847 = vunpack.c.l.bf16 %v1783
      %v1848 = vunpack.c.l.bf16 %v1784
      %v1849 = vunpack.c.l.bf16 %v1785
      %v1850 = vunpack.c.l.bf16 %v1786
      %v1851 = vunpack.c.l.bf16 %v1787
      %v1852 = vunpack.c.l.bf16 %v1788
      %v1853 = vunpack.c.l.bf16 %v1789
      %v1854 = vunpack.c.l.bf16 %v1790
      %v1855 = vunpack.c.l.bf16 %v1791
      %v1856 = vunpack.c.l.bf16 %v1792
      %v1857 = vunpack.c.l.bf16 %v1793
      %v1858 = vunpack.c.l.bf16 %v1794
      %v1859 = vunpack.c.l.bf16 %v1795
      %v1860 = vunpack.c.l.bf16 %v1796
      %v1861 = vunpack.c.l.bf16 %v1797
      %v1862 = vunpack.c.l.bf16 %v1798
      %v1863 = vunpack.c.l.bf16 %v1799
      %v1864 = vunpack.c.l.bf16 %v1800
      %v1865 = vunpack.c.l.bf16 %v1801
      %v1866 = vunpack.c.l.bf16 %v1802
      %v1867 = vunpack.c.l.bf16 %v1803
      %v1868 = vunpack.c.l.bf16 %v1804
      %v1869 = vunpack.c.l.bf16 %v1805
      %v1870 = vmax.f32 %v1806, 0.0
      %v1871 = vmax.f32 %v1807, 0.0
      %v1872 = vmax.f32 %v1808, 0.0
      %v1873 = vmax.f32 %v1809, 0.0
      %v1874 = vmax.f32 %v1810, 0.0
      %v1875 = vmax.f32 %v1811, 0.0
      %v1876 = vmax.f32 %v1812, 0.0
      %v1877 = vmax.f32 %v1813, 0.0
      %v1878 = vmax.f32 %v1814, 0.0
      %v1879 = vmax.f32 %v1815, 0.0
      %v1880 = vmax.f32 %v1816, 0.0
      %v1881 = vmax.f32 %v1817, 0.0
      %v1882 = vmax.f32 %v1818, 0.0
      %v1883 = vmax.f32 %v1819, 0.0
      %v1884 = vmax.f32 %v1820, 0.0
      %v1885 = vmax.f32 %v1821, 0.0
      %v1886 = vmax.f32 %v1822, 0.0
      %v1887 = vmax.f32 %v1823, 0.0
      %v1888 = vmax.f32 %v1824, 0.0
      %v1889 = vmax.f32 %v1825, 0.0
      %v1890 = vmax.f32 %v1826, 0.0
      %v1891 = vmax.f32 %v1827, 0.0
      %v1892 = vmax.f32 %v1828, 0.0
      %v1893 = vmax.f32 %v1829, 0.0
      %v1894 = vmax.f32 %v1830, 0.0
      %v1895 = vmax.f32 %v1831, 0.0
      %v1896 = vmax.f32 %v1832, 0.0
      %v1897 = vmax.f32 %v1833, 0.0
      %v1898 = vmax.f32 %v1834, 0.0
      %v1899 = vmax.f32 %v1835, 0.0
      %v1900 = vmax.f32 %v1836, 0.0
      %v1901 = vmax.f32 %v1837, 0.0
      %v1902 = vmax.f32 %v1838, 0.0
      %v1903 = vmax.f32 %v1839, 0.0
      %v1904 = vmax.f32 %v1840, 0.0
      %v1905 = vmax.f32 %v1841, 0.0
      %v1906 = vmax.f32 %v1842, 0.0
      %v1907 = vmax.f32 %v1843, 0.0
      %v1908 = vmax.f32 %v1844, 0.0
      %v1909 = vmax.f32 %v1845, 0.0
      %v1910 = vmax.f32 %v1846, 0.0
      %v1911 = vmax.f32 %v1847, 0.0
      %v1912 = vmax.f32 %v1848, 0.0
      %v1913 = vmax.f32 %v1849, 0.0
      %v1914 = vmax.f32 %v1850, 0.0
      %v1915 = vmax.f32 %v1851, 0.0
      %v1916 = vmax.f32 %v1852, 0.0
      %v1917 = vmax.f32 %v1853, 0.0
      %v1918 = vmax.f32 %v1854, 0.0
      %v1919 = vmax.f32 %v1855, 0.0
      %v1920 = vmax.f32 %v1856, 0.0
      %v1921 = vmax.f32 %v1857, 0.0
      %v1922 = vmax.f32 %v1858, 0.0
      %v1923 = vmax.f32 %v1859, 0.0
      %v1924 = vmax.f32 %v1860, 0.0
      %v1925 = vmax.f32 %v1861, 0.0
      %v1926 = vmax.f32 %v1862, 0.0
      %v1927 = vmax.f32 %v1863, 0.0
      %v1928 = vmax.f32 %v1864, 0.0
      %v1929 = vmax.f32 %v1865, 0.0
      %v1930 = vmax.f32 %v1866, 0.0
      %v1931 = vmax.f32 %v1867, 0.0
      %v1932 = vmax.f32 %v1868, 0.0
      %v1933 = vmax.f32 %v1869, 0.0
      %v1934 = vpack.c.bf16 %v1871, %v1870
      %v1935 = vpack.c.bf16 %v1873, %v1872
      %v1936 = vpack.c.bf16 %v1875, %v1874
      %v1937 = vpack.c.bf16 %v1877, %v1876
      %v1938 = vpack.c.bf16 %v1879, %v1878
      %v1939 = vpack.c.bf16 %v1881, %v1880
      %v1940 = vpack.c.bf16 %v1883, %v1882
      %v1941 = vpack.c.bf16 %v1885, %v1884
      %v1942 = vpack.c.bf16 %v1887, %v1886
      %v1943 = vpack.c.bf16 %v1889, %v1888
      %v1944 = vpack.c.bf16 %v1891, %v1890
      %v1945 = vpack.c.bf16 %v1893, %v1892
      %v1946 = vpack.c.bf16 %v1895, %v1894
      %v1947 = vpack.c.bf16 %v1897, %v1896
      %v1948 = vpack.c.bf16 %v1899, %v1898
      %v1949 = vpack.c.bf16 %v1901, %v1900
      %v1950 = vpack.c.bf16 %v1903, %v1902
      %v1951 = vpack.c.bf16 %v1905, %v1904
      %v1952 = vpack.c.bf16 %v1907, %v1906
      %v1953 = vpack.c.bf16 %v1909, %v1908
      %v1954 = vpack.c.bf16 %v1911, %v1910
      %v1955 = vpack.c.bf16 %v1913, %v1912
      %v1956 = vpack.c.bf16 %v1915, %v1914
      %v1957 = vpack.c.bf16 %v1917, %v1916
      %v1958 = vpack.c.bf16 %v1919, %v1918
      %v1959 = vpack.c.bf16 %v1921, %v1920
      %v1960 = vpack.c.bf16 %v1923, %v1922
      %v1961 = vpack.c.bf16 %v1925, %v1924
      %v1962 = vpack.c.bf16 %v1927, %v1926
      %v1963 = vpack.c.bf16 %v1929, %v1928
      %v1964 = vpack.c.bf16 %v1931, %v1930
      %v1965 = vpack.c.bf16 %v1933, %v1932
      %v1966 = vld [vmem:[%s5] sm:$0xf]
      %v1967 = vld [vmem:[%s5 + $0x4] sm:$0xf]
      %v1968 = vld [vmem:[%s5 + $0x8] sm:$0xf]
      %v1969 = vld [vmem:[%s5 + $0xc] sm:$0xf]
      %v1970 = vld [vmem:[%s5 + $0x10] sm:$0xf]
      %v1971 = vld [vmem:[%s5 + $0x14] sm:$0xf]
      %v1972 = vld [vmem:[%s5 + $0x18] sm:$0xf]
      %v1973 = vld [vmem:[%s5 + $0x1c] sm:$0xf]
      %v1974 = vld [vmem:[%s5 + $0x20] sm:$0xf]
      %v1975 = vld [vmem:[%s5 + $0x24] sm:$0xf]
      %v1976 = vld [vmem:[%s5 + $0x28] sm:$0xf]
      %v1977 = vld [vmem:[%s5 + $0x2c] sm:$0xf]
      %v1978 = vld [vmem:[%s5 + $0x30] sm:$0xf]
      %v1979 = vld [vmem:[%s5 + $0x34] sm:$0xf]
      %v1980 = vld [vmem:[%s5 + $0x38] sm:$0xf]
      %v1981 = vld [vmem:[%s5 + $0x3c] sm:$0xf]
      %v1998 = vunpack.c.l.b16 %v1966
      %v1999 = vunpack.c.l.b16 %v1967
      %v2000 = vunpack.c.l.b16 %v1968
      %v2001 = vunpack.c.l.b16 %v1969
      %v2002 = vunpack.c.l.b16 %v1970
      %v2003 = vunpack.c.l.b16 %v1971
      %v2004 = vunpack.c.l.b16 %v1972
      %v2005 = vunpack.c.l.b16 %v1973
      %v2006 = vunpack.c.l.b16 %v1974
      %v2007 = vunpack.c.l.b16 %v1975
      %v2008 = vunpack.c.l.b16 %v1976
      %v2009 = vunpack.c.l.b16 %v1977
      %v2010 = vunpack.c.l.b16 %v1978
      %v2011 = vunpack.c.l.b16 %v1979
      %v2012 = vunpack.c.l.b16 %v1980
      %v2013 = vunpack.c.l.b16 %v1981
      %v2014 = vpack.c.b16 %v1999, %v1998
      %v2015 = vpack.c.b16 %v2001, %v2000
      %v2016 = vpack.c.b16 %v2003, %v2002
      %v2017 = vpack.c.b16 %v2005, %v2004
      %v2018 = vpack.c.b16 %v2007, %v2006
      %v2019 = vpack.c.b16 %v2009, %v2008
      %v2020 = vpack.c.b16 %v2011, %v2010
      %v2021 = vpack.c.b16 %v2013, %v2012
      %2030 = vmatpush.bf16.msra.mxu0 %v2021
      %2031 = vmatpush.bf16.msra.mxu0 %v2020
      %2032 = vmatpush.bf16.msra.mxu0 %v2019
      %2033 = vmatpush.bf16.msra.mxu0 %v2018
      %2034 = vmatpush.bf16.msra.mxu0 %v2017
      %2035 = vmatpush.bf16.msra.mxu0 %v2016
      %2036 = vmatpush.bf16.msra.mxu0 %v2015
      %2037 = vmatpush.bf16.msra.mxu0 %v2014
      %2038 = vmatmul.bf16.gmra.mxu0 %v1934
      %v2039 = vpop.f32.mrf.mxu0
      %v2040 = vadd.f32 0.0, %v2039
      %v2041 = vpop.f32.mrf.mxu0
      %v2042 = vadd.f32 0.0, %v2041
      %2043 = vmatmul.bf16.gmra.mxu0 %v1935
      %v2044 = vpop.f32.mrf.mxu0
      %v2045 = vadd.f32 0.0, %v2044
      %v2046 = vpop.f32.mrf.mxu0
      %v2047 = vadd.f32 0.0, %v2046
      %2048 = vmatmul.bf16.gmra.mxu0 %v1936
      %v2049 = vpop.f32.mrf.mxu0
      %v2050 = vadd.f32 0.0, %v2049
      %v2051 = vpop.f32.mrf.mxu0
      %v2052 = vadd.f32 0.0, %v2051
      %2053 = vmatmul.bf16.gmra.mxu0 %v1937
      %v2054 = vpop.f32.mrf.mxu0
      %v2055 = vadd.f32 0.0, %v2054
      %v2056 = vpop.f32.mrf.mxu0
      %v2057 = vadd.f32 0.0, %v2056
      %2058 = vmatmul.bf16.gmra.mxu0 %v1938
      %v2059 = vpop.f32.mrf.mxu0
      %v2060 = vadd.f32 0.0, %v2059
      %v2061 = vpop.f32.mrf.mxu0
      %v2062 = vadd.f32 0.0, %v2061
      %2063 = vmatmul.bf16.gmra.mxu0 %v1939
      %v2064 = vpop.f32.mrf.mxu0
      %v2065 = vadd.f32 0.0, %v2064
      %v2066 = vpop.f32.mrf.mxu0
      %v2067 = vadd.f32 0.0, %v2066
      %2068 = vmatmul.bf16.gmra.mxu0 %v1940
      %v2069 = vpop.f32.mrf.mxu0
      %v2070 = vadd.f32 0.0, %v2069
      %v2071 = vpop.f32.mrf.mxu0
      %v2072 = vadd.f32 0.0, %v2071
      %2073 = vmatmul.bf16.gmra.mxu0 %v1941
      %v2074 = vpop.f32.mrf.mxu0
      %v2075 = vadd.f32 0.0, %v2074
      %v2076 = vpop.f32.mrf.mxu0
      %v2077 = vadd.f32 0.0, %v2076
      %2078 = vmatmul.bf16.gmra.mxu0 %v1942
      %v2079 = vpop.f32.mrf.mxu0
      %v2080 = vadd.f32 0.0, %v2079
      %v2081 = vpop.f32.mrf.mxu0
      %v2082 = vadd.f32 0.0, %v2081
      %2083 = vmatmul.bf16.gmra.mxu0 %v1943
      %v2084 = vpop.f32.mrf.mxu0
      %v2085 = vadd.f32 0.0, %v2084
      %v2086 = vpop.f32.mrf.mxu0
      %v2087 = vadd.f32 0.0, %v2086
      %2088 = vmatmul.bf16.gmra.mxu0 %v1944
      %v2089 = vpop.f32.mrf.mxu0
      %v2090 = vadd.f32 0.0, %v2089
      %v2091 = vpop.f32.mrf.mxu0
      %v2092 = vadd.f32 0.0, %v2091
      %2093 = vmatmul.bf16.gmra.mxu0 %v1945
      %v2094 = vpop.f32.mrf.mxu0
      %v2095 = vadd.f32 0.0, %v2094
      %v2096 = vpop.f32.mrf.mxu0
      %v2097 = vadd.f32 0.0, %v2096
      %2098 = vmatmul.bf16.gmra.mxu0 %v1946
      %v2099 = vpop.f32.mrf.mxu0
      %v2100 = vadd.f32 0.0, %v2099
      %v2101 = vpop.f32.mrf.mxu0
      %v2102 = vadd.f32 0.0, %v2101
      %2103 = vmatmul.bf16.gmra.mxu0 %v1947
      %v2104 = vpop.f32.mrf.mxu0
      %v2105 = vadd.f32 0.0, %v2104
      %v2106 = vpop.f32.mrf.mxu0
      %v2107 = vadd.f32 0.0, %v2106
      %2108 = vmatmul.bf16.gmra.mxu0 %v1948
      %v2109 = vpop.f32.mrf.mxu0
      %v2110 = vadd.f32 0.0, %v2109
      %v2111 = vpop.f32.mrf.mxu0
      %v2112 = vadd.f32 0.0, %v2111
      %2113 = vmatmul.bf16.gmra.mxu0 %v1949
      %v2114 = vpop.f32.mrf.mxu0
      %v2115 = vadd.f32 0.0, %v2114
      %v2116 = vpop.f32.mrf.mxu0
      %v2117 = vadd.f32 0.0, %v2116
      %2118 = vmatmul.bf16.gmra.mxu0 %v1950
      %v2119 = vpop.f32.mrf.mxu0
      %v2120 = vadd.f32 0.0, %v2119
      %v2121 = vpop.f32.mrf.mxu0
      %v2122 = vadd.f32 0.0, %v2121
      %2123 = vmatmul.bf16.gmra.mxu0 %v1951
      %v2124 = vpop.f32.mrf.mxu0
      %v2125 = vadd.f32 0.0, %v2124
      %v2126 = vpop.f32.mrf.mxu0
      %v2127 = vadd.f32 0.0, %v2126
      %2128 = vmatmul.bf16.gmra.mxu0 %v1952
      %v2129 = vpop.f32.mrf.mxu0
      %v2130 = vadd.f32 0.0, %v2129
      %v2131 = vpop.f32.mrf.mxu0
      %v2132 = vadd.f32 0.0, %v2131
      %2133 = vmatmul.bf16.gmra.mxu0 %v1953
      %v2134 = vpop.f32.mrf.mxu0
      %v2135 = vadd.f32 0.0, %v2134
      %v2136 = vpop.f32.mrf.mxu0
      %v2137 = vadd.f32 0.0, %v2136
      %2138 = vmatmul.bf16.gmra.mxu0 %v1954
      %v2139 = vpop.f32.mrf.mxu0
      %v2140 = vadd.f32 0.0, %v2139
      %v2141 = vpop.f32.mrf.mxu0
      %v2142 = vadd.f32 0.0, %v2141
      %2143 = vmatmul.bf16.gmra.mxu0 %v1955
      %v2144 = vpop.f32.mrf.mxu0
      %v2145 = vadd.f32 0.0, %v2144
      %v2146 = vpop.f32.mrf.mxu0
      %v2147 = vadd.f32 0.0, %v2146
      %2148 = vmatmul.bf16.gmra.mxu0 %v1956
      %v2149 = vpop.f32.mrf.mxu0
      %v2150 = vadd.f32 0.0, %v2149
      %v2151 = vpop.f32.mrf.mxu0
      %v2152 = vadd.f32 0.0, %v2151
      %2153 = vmatmul.bf16.gmra.mxu0 %v1957
      %v2154 = vpop.f32.mrf.mxu0
      %v2155 = vadd.f32 0.0, %v2154
      %v2156 = vpop.f32.mrf.mxu0
      %v2157 = vadd.f32 0.0, %v2156
      %2158 = vmatmul.bf16.gmra.mxu0 %v1958
      %v2159 = vpop.f32.mrf.mxu0
      %v2160 = vadd.f32 0.0, %v2159
      %v2161 = vpop.f32.mrf.mxu0
      %v2162 = vadd.f32 0.0, %v2161
      %2163 = vmatmul.bf16.gmra.mxu0 %v1959
      %v2164 = vpop.f32.mrf.mxu0
      %v2165 = vadd.f32 0.0, %v2164
      %v2166 = vpop.f32.mrf.mxu0
      %v2167 = vadd.f32 0.0, %v2166
      %2168 = vmatmul.bf16.gmra.mxu0 %v1960
      %v2169 = vpop.f32.mrf.mxu0
      %v2170 = vadd.f32 0.0, %v2169
      %v2171 = vpop.f32.mrf.mxu0
      %v2172 = vadd.f32 0.0, %v2171
      %2173 = vmatmul.bf16.gmra.mxu0 %v1961
      %v2174 = vpop.f32.mrf.mxu0
      %v2175 = vadd.f32 0.0, %v2174
      %v2176 = vpop.f32.mrf.mxu0
      %v2177 = vadd.f32 0.0, %v2176
      %2178 = vmatmul.bf16.gmra.mxu0 %v1962
      %v2179 = vpop.f32.mrf.mxu0
      %v2180 = vadd.f32 0.0, %v2179
      %v2181 = vpop.f32.mrf.mxu0
      %v2182 = vadd.f32 0.0, %v2181
      %2183 = vmatmul.bf16.gmra.mxu0 %v1963
      %v2184 = vpop.f32.mrf.mxu0
      %v2185 = vadd.f32 0.0, %v2184
      %v2186 = vpop.f32.mrf.mxu0
      %v2187 = vadd.f32 0.0, %v2186
      %2188 = vmatmul.bf16.gmra.mxu0 %v1964
      %v2189 = vpop.f32.mrf.mxu0
      %v2190 = vadd.f32 0.0, %v2189
      %v2191 = vpop.f32.mrf.mxu0
      %v2192 = vadd.f32 0.0, %v2191
      %2193 = vmatmul.bf16.gmra.mxu0 %v1965
      %v2194 = vpop.f32.mrf.mxu0
      %v2195 = vadd.f32 0.0, %v2194
      %v2196 = vpop.f32.mrf.mxu0
      %v2197 = vadd.f32 0.0, %v2196
      %2198 = vdwg.mxu0
      %v2199 = vpack.c.bf16 %v2040, %v2040
      %v2200 = vpack.c.bf16 %v2042, %v2042
      %v2201 = vpack.c.bf16 %v2045, %v2045
      %v2202 = vpack.c.bf16 %v2047, %v2047
      %v2203 = vpack.c.bf16 %v2050, %v2050
      %v2204 = vpack.c.bf16 %v2052, %v2052
      %v2205 = vpack.c.bf16 %v2055, %v2055
      %v2206 = vpack.c.bf16 %v2057, %v2057
      %v2207 = vpack.c.bf16 %v2060, %v2060
      %v2208 = vpack.c.bf16 %v2062, %v2062
      %v2209 = vpack.c.bf16 %v2065, %v2065
      %v2210 = vpack.c.bf16 %v2067, %v2067
      %v2211 = vpack.c.bf16 %v2070, %v2070
      %v2212 = vpack.c.bf16 %v2072, %v2072
      %v2213 = vpack.c.bf16 %v2075, %v2075
      %v2214 = vpack.c.bf16 %v2077, %v2077
      %v2215 = vpack.c.bf16 %v2080, %v2080
      %v2216 = vpack.c.bf16 %v2082, %v2082
      %v2217 = vpack.c.bf16 %v2085, %v2085
      %v2218 = vpack.c.bf16 %v2087, %v2087
      %v2219 = vpack.c.bf16 %v2090, %v2090
      %v2220 = vpack.c.bf16 %v2092, %v2092
      %v2221 = vpack.c.bf16 %v2095, %v2095
      %v2222 = vpack.c.bf16 %v2097, %v2097
      %v2223 = vpack.c.bf16 %v2100, %v2100
      %v2224 = vpack.c.bf16 %v2102, %v2102
      %v2225 = vpack.c.bf16 %v2105, %v2105
      %v2226 = vpack.c.bf16 %v2107, %v2107
      %v2227 = vpack.c.bf16 %v2110, %v2110
      %v2228 = vpack.c.bf16 %v2112, %v2112
      %v2229 = vpack.c.bf16 %v2115, %v2115
      %v2230 = vpack.c.bf16 %v2117, %v2117
      %v2231 = vpack.c.bf16 %v2120, %v2120
      %v2232 = vpack.c.bf16 %v2122, %v2122
      %v2233 = vpack.c.bf16 %v2125, %v2125
      %v2234 = vpack.c.bf16 %v2127, %v2127
      %v2235 = vpack.c.bf16 %v2130, %v2130
      %v2236 = vpack.c.bf16 %v2132, %v2132
      %v2237 = vpack.c.bf16 %v2135, %v2135
      %v2238 = vpack.c.bf16 %v2137, %v2137
      %v2239 = vpack.c.bf16 %v2140, %v2140
      %v2240 = vpack.c.bf16 %v2142, %v2142
      %v2241 = vpack.c.bf16 %v2145, %v2145
      %v2242 = vpack.c.bf16 %v2147, %v2147
      %v2243 = vpack.c.bf16 %v2150, %v2150
      %v2244 = vpack.c.bf16 %v2152, %v2152
      %v2245 = vpack.c.bf16 %v2155, %v2155
      %v2246 = vpack.c.bf16 %v2157, %v2157
      %v2247 = vpack.c.bf16 %v2160, %v2160
      %v2248 = vpack.c.bf16 %v2162, %v2162
      %v2249 = vpack.c.bf16 %v2165, %v2165
      %v2250 = vpack.c.bf16 %v2167, %v2167
      %v2251 = vpack.c.bf16 %v2170, %v2170
      %v2252 = vpack.c.bf16 %v2172, %v2172
      %v2253 = vpack.c.bf16 %v2175, %v2175
      %v2254 = vpack.c.bf16 %v2177, %v2177
      %v2255 = vpack.c.bf16 %v2180, %v2180
      %v2256 = vpack.c.bf16 %v2182, %v2182
      %v2257 = vpack.c.bf16 %v2185, %v2185
      %v2258 = vpack.c.bf16 %v2187, %v2187
      %v2259 = vpack.c.bf16 %v2190, %v2190
      %v2260 = vpack.c.bf16 %v2192, %v2192
      %v2261 = vpack.c.bf16 %v2195, %v2195
      %v2262 = vpack.c.bf16 %v2197, %v2197
      %v2263 = vld [vmem:[%s6] sm:$0x1]
      %v2265 = vpack.i.b16 %v2263, %v2263
      %v2267 = vperm.slane %v2265, 0
      %v2268 = vunpack.c.l.bf16 %v2199
      %v2269 = vunpack.c.l.bf16 %v2200
      %v2270 = vunpack.c.l.bf16 %v2201
      %v2271 = vunpack.c.l.bf16 %v2202
      %v2272 = vunpack.c.l.bf16 %v2203
      %v2273 = vunpack.c.l.bf16 %v2204
      %v2274 = vunpack.c.l.bf16 %v2205
      %v2275 = vunpack.c.l.bf16 %v2206
      %v2276 = vunpack.c.l.bf16 %v2207
      %v2277 = vunpack.c.l.bf16 %v2208
      %v2278 = vunpack.c.l.bf16 %v2209
      %v2279 = vunpack.c.l.bf16 %v2210
      %v2280 = vunpack.c.l.bf16 %v2211
      %v2281 = vunpack.c.l.bf16 %v2212
      %v2282 = vunpack.c.l.bf16 %v2213
      %v2283 = vunpack.c.l.bf16 %v2214
      %v2284 = vunpack.c.l.bf16 %v2215
      %v2285 = vunpack.c.l.bf16 %v2216
      %v2286 = vunpack.c.l.bf16 %v2217
      %v2287 = vunpack.c.l.bf16 %v2218
      %v2288 = vunpack.c.l.bf16 %v2219
      %v2289 = vunpack.c.l.bf16 %v2220
      %v2290 = vunpack.c.l.bf16 %v2221
      %v2291 = vunpack.c.l.bf16 %v2222
      %v2292 = vunpack.c.l.bf16 %v2223
      %v2293 = vunpack.c.l.bf16 %v2224
      %v2294 = vunpack.c.l.bf16 %v2225
      %v2295 = vunpack.c.l.bf16 %v2226
      %v2296 = vunpack.c.l.bf16 %v2227
      %v2297 = vunpack.c.l.bf16 %v2228
      %v2298 = vunpack.c.l.bf16 %v2229
      %v2299 = vunpack.c.l.bf16 %v2230
      %v2300 = vunpack.c.l.bf16 %v2231
      %v2301 = vunpack.c.l.bf16 %v2232
      %v2302 = vunpack.c.l.bf16 %v2233
      %v2303 = vunpack.c.l.bf16 %v2234
      %v2304 = vunpack.c.l.bf16 %v2235
      %v2305 = vunpack.c.l.bf16 %v2236
      %v2306 = vunpack.c.l.bf16 %v2237
      %v2307 = vunpack.c.l.bf16 %v2238
      %v2308 = vunpack.c.l.bf16 %v2239
      %v2309 = vunpack.c.l.bf16 %v2240
      %v2310 = vunpack.c.l.bf16 %v2241
      %v2311 = vunpack.c.l.bf16 %v2242
      %v2312 = vunpack.c.l.bf16 %v2243
      %v2313 = vunpack.c.l.bf16 %v2244
      %v2314 = vunpack.c.l.bf16 %v2245
      %v2315 = vunpack.c.l.bf16 %v2246
      %v2316 = vunpack.c.l.bf16 %v2247
      %v2317 = vunpack.c.l.bf16 %v2248
      %v2318 = vunpack.c.l.bf16 %v2249
      %v2319 = vunpack.c.l.bf16 %v2250
      %v2320 = vunpack.c.l.bf16 %v2251
      %v2321 = vunpack.c.l.bf16 %v2252
      %v2322 = vunpack.c.l.bf16 %v2253
      %v2323 = vunpack.c.l.bf16 %v2254
      %v2324 = vunpack.c.l.bf16 %v2255
      %v2325 = vunpack.c.l.bf16 %v2256
      %v2326 = vunpack.c.l.bf16 %v2257
      %v2327 = vunpack.c.l.bf16 %v2258
      %v2328 = vunpack.c.l.bf16 %v2259
      %v2329 = vunpack.c.l.bf16 %v2260
      %v2330 = vunpack.c.l.bf16 %v2261
      %v2331 = vunpack.c.l.bf16 %v2262
      %v2332 = vunpack.c.l.bf16 %v2267
      %v2333 = vadd.f32 %v2268, %v2332
      %v2334 = vadd.f32 %v2269, %v2332
      %v2335 = vadd.f32 %v2270, %v2332
      %v2336 = vadd.f32 %v2271, %v2332
      %v2337 = vadd.f32 %v2272, %v2332
      %v2338 = vadd.f32 %v2273, %v2332
      %v2339 = vadd.f32 %v2274, %v2332
      %v2340 = vadd.f32 %v2275, %v2332
      %v2341 = vadd.f32 %v2276, %v2332
      %v2342 = vadd.f32 %v2277, %v2332
      %v2343 = vadd.f32 %v2278, %v2332
      %v2344 = vadd.f32 %v2279, %v2332
      %v2345 = vadd.f32 %v2280, %v2332
      %v2346 = vadd.f32 %v2281, %v2332
      %v2347 = vadd.f32 %v2282, %v2332
      %v2348 = vadd.f32 %v2283, %v2332
      %v2349 = vadd.f32 %v2284, %v2332
      %v2350 = vadd.f32 %v2285, %v2332
      %v2351 = vadd.f32 %v2286, %v2332
      %v2352 = vadd.f32 %v2287, %v2332
      %v2353 = vadd.f32 %v2288, %v2332
      %v2354 = vadd.f32 %v2289, %v2332
      %v2355 = vadd.f32 %v2290, %v2332
      %v2356 = vadd.f32 %v2291, %v2332
      %v2357 = vadd.f32 %v2292, %v2332
      %v2358 = vadd.f32 %v2293, %v2332
      %v2359 = vadd.f32 %v2294, %v2332
      %v2360 = vadd.f32 %v2295, %v2332
      %v2361 = vadd.f32 %v2296, %v2332
      %v2362 = vadd.f32 %v2297, %v2332
      %v2363 = vadd.f32 %v2298, %v2332
      %v2364 = vadd.f32 %v2299, %v2332
      %v2365 = vadd.f32 %v2300, %v2332
      %v2366 = vadd.f32 %v2301, %v2332
      %v2367 = vadd.f32 %v2302, %v2332
      %v2368 = vadd.f32 %v2303, %v2332
      %v2369 = vadd.f32 %v2304, %v2332
      %v2370 = vadd.f32 %v2305, %v2332
      %v2371 = vadd.f32 %v2306, %v2332
      %v2372 = vadd.f32 %v2307, %v2332
      %v2373 = vadd.f32 %v2308, %v2332
      %v2374 = vadd.f32 %v2309, %v2332
      %v2375 = vadd.f32 %v2310, %v2332
      %v2376 = vadd.f32 %v2311, %v2332
      %v2377 = vadd.f32 %v2312, %v2332
      %v2378 = vadd.f32 %v2313, %v2332
      %v2379 = vadd.f32 %v2314, %v2332
      %v2380 = vadd.f32 %v2315, %v2332
      %v2381 = vadd.f32 %v2316, %v2332
      %v2382 = vadd.f32 %v2317, %v2332
      %v2383 = vadd.f32 %v2318, %v2332
      %v2384 = vadd.f32 %v2319, %v2332
      %v2385 = vadd.f32 %v2320, %v2332
      %v2386 = vadd.f32 %v2321, %v2332
      %v2387 = vadd.f32 %v2322, %v2332
      %v2388 = vadd.f32 %v2323, %v2332
      %v2389 = vadd.f32 %v2324, %v2332
      %v2390 = vadd.f32 %v2325, %v2332
      %v2391 = vadd.f32 %v2326, %v2332
      %v2392 = vadd.f32 %v2327, %v2332
      %v2393 = vadd.f32 %v2328, %v2332
      %v2394 = vadd.f32 %v2329, %v2332
      %v2395 = vadd.f32 %v2330, %v2332
      %v2396 = vadd.f32 %v2331, %v2332
      %v2397 = vpack.c.bf16 %v2333, %v2333
      %v2398 = vpack.c.bf16 %v2334, %v2334
      %v2399 = vpack.c.bf16 %v2335, %v2335
      %v2400 = vpack.c.bf16 %v2336, %v2336
      %v2401 = vpack.c.bf16 %v2337, %v2337
      %v2402 = vpack.c.bf16 %v2338, %v2338
      %v2403 = vpack.c.bf16 %v2339, %v2339
      %v2404 = vpack.c.bf16 %v2340, %v2340
      %v2405 = vpack.c.bf16 %v2341, %v2341
      %v2406 = vpack.c.bf16 %v2342, %v2342
      %v2407 = vpack.c.bf16 %v2343, %v2343
      %v2408 = vpack.c.bf16 %v2344, %v2344
      %v2409 = vpack.c.bf16 %v2345, %v2345
      %v2410 = vpack.c.bf16 %v2346, %v2346
      %v2411 = vpack.c.bf16 %v2347, %v2347
      %v2412 = vpack.c.bf16 %v2348, %v2348
      %v2413 = vpack.c.bf16 %v2349, %v2349
      %v2414 = vpack.c.bf16 %v2350, %v2350
      %v2415 = vpack.c.bf16 %v2351, %v2351
      %v2416 = vpack.c.bf16 %v2352, %v2352
      %v2417 = vpack.c.bf16 %v2353, %v2353
      %v2418 = vpack.c.bf16 %v2354, %v2354
      %v2419 = vpack.c.bf16 %v2355, %v2355
      %v2420 = vpack.c.bf16 %v2356, %v2356
      %v2421 = vpack.c.bf16 %v2357, %v2357
      %v2422 = vpack.c.bf16 %v2358, %v2358
      %v2423 = vpack.c.bf16 %v2359, %v2359
      %v2424 = vpack.c.bf16 %v2360, %v2360
      %v2425 = vpack.c.bf16 %v2361, %v2361
      %v2426 = vpack.c.bf16 %v2362, %v2362
      %v2427 = vpack.c.bf16 %v2363, %v2363
      %v2428 = vpack.c.bf16 %v2364, %v2364
      %v2429 = vpack.c.bf16 %v2365, %v2365
      %v2430 = vpack.c.bf16 %v2366, %v2366
      %v2431 = vpack.c.bf16 %v2367, %v2367
      %v2432 = vpack.c.bf16 %v2368, %v2368
      %v2433 = vpack.c.bf16 %v2369, %v2369
      %v2434 = vpack.c.bf16 %v2370, %v2370
      %v2435 = vpack.c.bf16 %v2371, %v2371
      %v2436 = vpack.c.bf16 %v2372, %v2372
      %v2437 = vpack.c.bf16 %v2373, %v2373
      %v2438 = vpack.c.bf16 %v2374, %v2374
      %v2439 = vpack.c.bf16 %v2375, %v2375
      %v2440 = vpack.c.bf16 %v2376, %v2376
      %v2441 = vpack.c.bf16 %v2377, %v2377
      %v2442 = vpack.c.bf16 %v2378, %v2378
      %v2443 = vpack.c.bf16 %v2379, %v2379
      %v2444 = vpack.c.bf16 %v2380, %v2380
      %v2445 = vpack.c.bf16 %v2381, %v2381
      %v2446 = vpack.c.bf16 %v2382, %v2382
      %v2447 = vpack.c.bf16 %v2383, %v2383
      %v2448 = vpack.c.bf16 %v2384, %v2384
      %v2449 = vpack.c.bf16 %v2385, %v2385
      %v2450 = vpack.c.bf16 %v2386, %v2386
      %v2451 = vpack.c.bf16 %v2387, %v2387
      %v2452 = vpack.c.bf16 %v2388, %v2388
      %v2453 = vpack.c.bf16 %v2389, %v2389
      %v2454 = vpack.c.bf16 %v2390, %v2390
      %v2455 = vpack.c.bf16 %v2391, %v2391
      %v2456 = vpack.c.bf16 %v2392, %v2392
      %v2457 = vpack.c.bf16 %v2393, %v2393
      %v2458 = vpack.c.bf16 %v2394, %v2394
      %v2459 = vpack.c.bf16 %v2395, %v2395
      %v2460 = vpack.c.bf16 %v2396, %v2396
      %v2461 = vunpack.c.l.bf16 %v2397
      %v2462 = vunpack.c.l.bf16 %v2398
      %v2463 = vunpack.c.l.bf16 %v2399
      %v2464 = vunpack.c.l.bf16 %v2400
      %v2465 = vunpack.c.l.bf16 %v2401
      %v2466 = vunpack.c.l.bf16 %v2402
      %v2467 = vunpack.c.l.bf16 %v2403
      %v2468 = vunpack.c.l.bf16 %v2404
      %v2469 = vunpack.c.l.bf16 %v2405
      %v2470 = vunpack.c.l.bf16 %v2406
      %v2471 = vunpack.c.l.bf16 %v2407
      %v2472 = vunpack.c.l.bf16 %v2408
      %v2473 = vunpack.c.l.bf16 %v2409
      %v2474 = vunpack.c.l.bf16 %v2410
      %v2475 = vunpack.c.l.bf16 %v2411
      %v2476 = vunpack.c.l.bf16 %v2412
      %v2477 = vunpack.c.l.bf16 %v2413
      %v2478 = vunpack.c.l.bf16 %v2414
      %v2479 = vunpack.c.l.bf16 %v2415
      %v2480 = vunpack.c.l.bf16 %v2416
      %v2481 = vunpack.c.l.bf16 %v2417
      %v2482 = vunpack.c.l.bf16 %v2418
      %v2483 = vunpack.c.l.bf16 %v2419
      %v2484 = vunpack.c.l.bf16 %v2420
      %v2485 = vunpack.c.l.bf16 %v2421
      %v2486 = vunpack.c.l.bf16 %v2422
      %v2487 = vunpack.c.l.bf16 %v2423
      %v2488 = vunpack.c.l.bf16 %v2424
      %v2489 = vunpack.c.l.bf16 %v2425
      %v2490 = vunpack.c.l.bf16 %v2426
      %v2491 = vunpack.c.l.bf16 %v2427
      %v2492 = vunpack.c.l.bf16 %v2428
      %v2493 = vunpack.c.l.bf16 %v2429
      %v2494 = vunpack.c.l.bf16 %v2430
      %v2495 = vunpack.c.l.bf16 %v2431
      %v2496 = vunpack.c.l.bf16 %v2432
      %v2497 = vunpack.c.l.bf16 %v2433
      %v2498 = vunpack.c.l.bf16 %v2434
      %v2499 = vunpack.c.l.bf16 %v2435
      %v2500 = vunpack.c.l.bf16 %v2436
      %v2501 = vunpack.c.l.bf16 %v2437
      %v2502 = vunpack.c.l.bf16 %v2438
      %v2503 = vunpack.c.l.bf16 %v2439
      %v2504 = vunpack.c.l.bf16 %v2440
      %v2505 = vunpack.c.l.bf16 %v2441
      %v2506 = vunpack.c.l.bf16 %v2442
      %v2507 = vunpack.c.l.bf16 %v2443
      %v2508 = vunpack.c.l.bf16 %v2444
      %v2509 = vunpack.c.l.bf16 %v2445
      %v2510 = vunpack.c.l.bf16 %v2446
      %v2511 = vunpack.c.l.bf16 %v2447
      %v2512 = vunpack.c.l.bf16 %v2448
      %v2513 = vunpack.c.l.bf16 %v2449
      %v2514 = vunpack.c.l.bf16 %v2450
      %v2515 = vunpack.c.l.bf16 %v2451
      %v2516 = vunpack.c.l.bf16 %v2452
      %v2517 = vunpack.c.l.bf16 %v2453
      %v2518 = vunpack.c.l.bf16 %v2454
      %v2519 = vunpack.c.l.bf16 %v2455
      %v2520 = vunpack.c.l.bf16 %v2456
      %v2521 = vunpack.c.l.bf16 %v2457
      %v2522 = vunpack.c.l.bf16 %v2458
      %v2523 = vunpack.c.l.bf16 %v2459
      %v2524 = vunpack.c.l.bf16 %v2460
      %v2525 = vmax.f32 %v2461, 0.0
      %v2526 = vmax.f32 %v2462, 0.0
      %v2527 = vmax.f32 %v2463, 0.0
      %v2528 = vmax.f32 %v2464, 0.0
      %v2529 = vmax.f32 %v2465, 0.0
      %v2530 = vmax.f32 %v2466, 0.0
      %v2531 = vmax.f32 %v2467, 0.0
      %v2532 = vmax.f32 %v2468, 0.0
      %v2533 = vmax.f32 %v2469, 0.0
      %v2534 = vmax.f32 %v2470, 0.0
      %v2535 = vmax.f32 %v2471, 0.0
      %v2536 = vmax.f32 %v2472, 0.0
      %v2537 = vmax.f32 %v2473, 0.0
      %v2538 = vmax.f32 %v2474, 0.0
      %v2539 = vmax.f32 %v2475, 0.0
      %v2540 = vmax.f32 %v2476, 0.0
      %v2541 = vmax.f32 %v2477, 0.0
      %v2542 = vmax.f32 %v2478, 0.0
      %v2543 = vmax.f32 %v2479, 0.0
      %v2544 = vmax.f32 %v2480, 0.0
      %v2545 = vmax.f32 %v2481, 0.0
      %v2546 = vmax.f32 %v2482, 0.0
      %v2547 = vmax.f32 %v2483, 0.0
      %v2548 = vmax.f32 %v2484, 0.0
      %v2549 = vmax.f32 %v2485, 0.0
      %v2550 = vmax.f32 %v2486, 0.0
      %v2551 = vmax.f32 %v2487, 0.0
      %v2552 = vmax.f32 %v2488, 0.0
      %v2553 = vmax.f32 %v2489, 0.0
      %v2554 = vmax.f32 %v2490, 0.0
      %v2555 = vmax.f32 %v2491, 0.0
      %v2556 = vmax.f32 %v2492, 0.0
      %v2557 = vmax.f32 %v2493, 0.0
      %v2558 = vmax.f32 %v2494, 0.0
      %v2559 = vmax.f32 %v2495, 0.0
      %v2560 = vmax.f32 %v2496, 0.0
      %v2561 = vmax.f32 %v2497, 0.0
      %v2562 = vmax.f32 %v2498, 0.0
      %v2563 = vmax.f32 %v2499, 0.0
      %v2564 = vmax.f32 %v2500, 0.0
      %v2565 = vmax.f32 %v2501, 0.0
      %v2566 = vmax.f32 %v2502, 0.0
      %v2567 = vmax.f32 %v2503, 0.0
      %v2568 = vmax.f32 %v2504, 0.0
      %v2569 = vmax.f32 %v2505, 0.0
      %v2570 = vmax.f32 %v2506, 0.0
      %v2571 = vmax.f32 %v2507, 0.0
      %v2572 = vmax.f32 %v2508, 0.0
      %v2573 = vmax.f32 %v2509, 0.0
      %v2574 = vmax.f32 %v2510, 0.0
      %v2575 = vmax.f32 %v2511, 0.0
      %v2576 = vmax.f32 %v2512, 0.0
      %v2577 = vmax.f32 %v2513, 0.0
      %v2578 = vmax.f32 %v2514, 0.0
      %v2579 = vmax.f32 %v2515, 0.0
      %v2580 = vmax.f32 %v2516, 0.0
      %v2581 = vmax.f32 %v2517, 0.0
      %v2582 = vmax.f32 %v2518, 0.0
      %v2583 = vmax.f32 %v2519, 0.0
      %v2584 = vmax.f32 %v2520, 0.0
      %v2585 = vmax.f32 %v2521, 0.0
      %v2586 = vmax.f32 %v2522, 0.0
      %v2587 = vmax.f32 %v2523, 0.0
      %v2588 = vmax.f32 %v2524, 0.0
      %v2589 = vpack.c.bf16 %v2526, %v2525
      %v2590 = vpack.c.bf16 %v2528, %v2527
      %v2591 = vpack.c.bf16 %v2530, %v2529
      %v2592 = vpack.c.bf16 %v2532, %v2531
      %v2593 = vpack.c.bf16 %v2534, %v2533
      %v2594 = vpack.c.bf16 %v2536, %v2535
      %v2595 = vpack.c.bf16 %v2538, %v2537
      %v2596 = vpack.c.bf16 %v2540, %v2539
      %v2597 = vpack.c.bf16 %v2542, %v2541
      %v2598 = vpack.c.bf16 %v2544, %v2543
      %v2599 = vpack.c.bf16 %v2546, %v2545
      %v2600 = vpack.c.bf16 %v2548, %v2547
      %v2601 = vpack.c.bf16 %v2550, %v2549
      %v2602 = vpack.c.bf16 %v2552, %v2551
      %v2603 = vpack.c.bf16 %v2554, %v2553
      %v2604 = vpack.c.bf16 %v2556, %v2555
      %v2605 = vpack.c.bf16 %v2558, %v2557
      %v2606 = vpack.c.bf16 %v2560, %v2559
      %v2607 = vpack.c.bf16 %v2562, %v2561
      %v2608 = vpack.c.bf16 %v2564, %v2563
      %v2609 = vpack.c.bf16 %v2566, %v2565
      %v2610 = vpack.c.bf16 %v2568, %v2567
      %v2611 = vpack.c.bf16 %v2570, %v2569
      %v2612 = vpack.c.bf16 %v2572, %v2571
      %v2613 = vpack.c.bf16 %v2574, %v2573
      %v2614 = vpack.c.bf16 %v2576, %v2575
      %v2615 = vpack.c.bf16 %v2578, %v2577
      %v2616 = vpack.c.bf16 %v2580, %v2579
      %v2617 = vpack.c.bf16 %v2582, %v2581
      %v2618 = vpack.c.bf16 %v2584, %v2583
      %v2619 = vpack.c.bf16 %v2586, %v2585
      %v2620 = vpack.c.bf16 %v2588, %v2587
      %v2621 = vld [vmem:[%s7] sm:$0xf]
      %v2622 = vld [vmem:[%s7 + $0x4] sm:$0xf]
      %v2623 = vld [vmem:[%s7 + $0x8] sm:$0xf]
      %v2624 = vld [vmem:[%s7 + $0xc] sm:$0xf]
      %v2625 = vld [vmem:[%s7 + $0x10] sm:$0xf]
      %v2626 = vld [vmem:[%s7 + $0x14] sm:$0xf]
      %v2627 = vld [vmem:[%s7 + $0x18] sm:$0xf]
      %v2628 = vld [vmem:[%s7 + $0x1c] sm:$0xf]
      %v2629 = vld [vmem:[%s7 + $0x20] sm:$0xf]
      %v2630 = vld [vmem:[%s7 + $0x24] sm:$0xf]
      %v2631 = vld [vmem:[%s7 + $0x28] sm:$0xf]
      %v2632 = vld [vmem:[%s7 + $0x2c] sm:$0xf]
      %v2633 = vld [vmem:[%s7 + $0x30] sm:$0xf]
      %v2634 = vld [vmem:[%s7 + $0x34] sm:$0xf]
      %v2635 = vld [vmem:[%s7 + $0x38] sm:$0xf]
      %v2636 = vld [vmem:[%s7 + $0x3c] sm:$0xf]
      %v2653 = vunpack.c.l.b16 %v2621
      %v2654 = vunpack.c.l.b16 %v2622
      %v2655 = vunpack.c.l.b16 %v2623
      %v2656 = vunpack.c.l.b16 %v2624
      %v2657 = vunpack.c.l.b16 %v2625
      %v2658 = vunpack.c.l.b16 %v2626
      %v2659 = vunpack.c.l.b16 %v2627
      %v2660 = vunpack.c.l.b16 %v2628
      %v2661 = vunpack.c.l.b16 %v2629
      %v2662 = vunpack.c.l.b16 %v2630
      %v2663 = vunpack.c.l.b16 %v2631
      %v2664 = vunpack.c.l.b16 %v2632
      %v2665 = vunpack.c.l.b16 %v2633
      %v2666 = vunpack.c.l.b16 %v2634
      %v2667 = vunpack.c.l.b16 %v2635
      %v2668 = vunpack.c.l.b16 %v2636
      %v2669 = vpack.c.b16 %v2654, %v2653
      %v2670 = vpack.c.b16 %v2656, %v2655
      %v2671 = vpack.c.b16 %v2658, %v2657
      %v2672 = vpack.c.b16 %v2660, %v2659
      %v2673 = vpack.c.b16 %v2662, %v2661
      %v2674 = vpack.c.b16 %v2664, %v2663
      %v2675 = vpack.c.b16 %v2666, %v2665
      %v2676 = vpack.c.b16 %v2668, %v2667
      %2685 = vmatpush.bf16.msra.mxu0 %v2676
      %2686 = vmatpush.bf16.msra.mxu0 %v2675
      %2687 = vmatpush.bf16.msra.mxu0 %v2674
      %2688 = vmatpush.bf16.msra.mxu0 %v2673
      %2689 = vmatpush.bf16.msra.mxu0 %v2672
      %2690 = vmatpush.bf16.msra.mxu0 %v2671
      %2691 = vmatpush.bf16.msra.mxu0 %v2670
      %2692 = vmatpush.bf16.msra.mxu0 %v2669
      %2693 = vmatmul.bf16.gmra.mxu0 %v2589
      %v2694 = vpop.f32.mrf.mxu0
      %v2695 = vadd.f32 0.0, %v2694
      %v2696 = vpop.f32.mrf.mxu0
      %v2697 = vadd.f32 0.0, %v2696
      %2698 = vmatmul.bf16.gmra.mxu0 %v2590
      %v2699 = vpop.f32.mrf.mxu0
      %v2700 = vadd.f32 0.0, %v2699
      %v2701 = vpop.f32.mrf.mxu0
      %v2702 = vadd.f32 0.0, %v2701
      %2703 = vmatmul.bf16.gmra.mxu0 %v2591
      %v2704 = vpop.f32.mrf.mxu0
      %v2705 = vadd.f32 0.0, %v2704
      %v2706 = vpop.f32.mrf.mxu0
      %v2707 = vadd.f32 0.0, %v2706
      %2708 = vmatmul.bf16.gmra.mxu0 %v2592
      %v2709 = vpop.f32.mrf.mxu0
      %v2710 = vadd.f32 0.0, %v2709
      %v2711 = vpop.f32.mrf.mxu0
      %v2712 = vadd.f32 0.0, %v2711
      %2713 = vmatmul.bf16.gmra.mxu0 %v2593
      %v2714 = vpop.f32.mrf.mxu0
      %v2715 = vadd.f32 0.0, %v2714
      %v2716 = vpop.f32.mrf.mxu0
      %v2717 = vadd.f32 0.0, %v2716
      %2718 = vmatmul.bf16.gmra.mxu0 %v2594
      %v2719 = vpop.f32.mrf.mxu0
      %v2720 = vadd.f32 0.0, %v2719
      %v2721 = vpop.f32.mrf.mxu0
      %v2722 = vadd.f32 0.0, %v2721
      %2723 = vmatmul.bf16.gmra.mxu0 %v2595
      %v2724 = vpop.f32.mrf.mxu0
      %v2725 = vadd.f32 0.0, %v2724
      %v2726 = vpop.f32.mrf.mxu0
      %v2727 = vadd.f32 0.0, %v2726
      %2728 = vmatmul.bf16.gmra.mxu0 %v2596
      %v2729 = vpop.f32.mrf.mxu0
      %v2730 = vadd.f32 0.0, %v2729
      %v2731 = vpop.f32.mrf.mxu0
      %v2732 = vadd.f32 0.0, %v2731
      %2733 = vmatmul.bf16.gmra.mxu0 %v2597
      %v2734 = vpop.f32.mrf.mxu0
      %v2735 = vadd.f32 0.0, %v2734
      %v2736 = vpop.f32.mrf.mxu0
      %v2737 = vadd.f32 0.0, %v2736
      %2738 = vmatmul.bf16.gmra.mxu0 %v2598
      %v2739 = vpop.f32.mrf.mxu0
      %v2740 = vadd.f32 0.0, %v2739
      %v2741 = vpop.f32.mrf.mxu0
      %v2742 = vadd.f32 0.0, %v2741
      %2743 = vmatmul.bf16.gmra.mxu0 %v2599
      %v2744 = vpop.f32.mrf.mxu0
      %v2745 = vadd.f32 0.0, %v2744
      %v2746 = vpop.f32.mrf.mxu0
      %v2747 = vadd.f32 0.0, %v2746
      %2748 = vmatmul.bf16.gmra.mxu0 %v2600
      %v2749 = vpop.f32.mrf.mxu0
      %v2750 = vadd.f32 0.0, %v2749
      %v2751 = vpop.f32.mrf.mxu0
      %v2752 = vadd.f32 0.0, %v2751
      %2753 = vmatmul.bf16.gmra.mxu0 %v2601
      %v2754 = vpop.f32.mrf.mxu0
      %v2755 = vadd.f32 0.0, %v2754
      %v2756 = vpop.f32.mrf.mxu0
      %v2757 = vadd.f32 0.0, %v2756
      %2758 = vmatmul.bf16.gmra.mxu0 %v2602
      %v2759 = vpop.f32.mrf.mxu0
      %v2760 = vadd.f32 0.0, %v2759
      %v2761 = vpop.f32.mrf.mxu0
      %v2762 = vadd.f32 0.0, %v2761
      %2763 = vmatmul.bf16.gmra.mxu0 %v2603
      %v2764 = vpop.f32.mrf.mxu0
      %v2765 = vadd.f32 0.0, %v2764
      %v2766 = vpop.f32.mrf.mxu0
      %v2767 = vadd.f32 0.0, %v2766
      %2768 = vmatmul.bf16.gmra.mxu0 %v2604
      %v2769 = vpop.f32.mrf.mxu0
      %v2770 = vadd.f32 0.0, %v2769
      %v2771 = vpop.f32.mrf.mxu0
      %v2772 = vadd.f32 0.0, %v2771
      %2773 = vmatmul.bf16.gmra.mxu0 %v2605
      %v2774 = vpop.f32.mrf.mxu0
      %v2775 = vadd.f32 0.0, %v2774
      %v2776 = vpop.f32.mrf.mxu0
      %v2777 = vadd.f32 0.0, %v2776
      %2778 = vmatmul.bf16.gmra.mxu0 %v2606
      %v2779 = vpop.f32.mrf.mxu0
      %v2780 = vadd.f32 0.0, %v2779
      %v2781 = vpop.f32.mrf.mxu0
      %v2782 = vadd.f32 0.0, %v2781
      %2783 = vmatmul.bf16.gmra.mxu0 %v2607
      %v2784 = vpop.f32.mrf.mxu0
      %v2785 = vadd.f32 0.0, %v2784
      %v2786 = vpop.f32.mrf.mxu0
      %v2787 = vadd.f32 0.0, %v2786
      %2788 = vmatmul.bf16.gmra.mxu0 %v2608
      %v2789 = vpop.f32.mrf.mxu0
      %v2790 = vadd.f32 0.0, %v2789
      %v2791 = vpop.f32.mrf.mxu0
      %v2792 = vadd.f32 0.0, %v2791
      %2793 = vmatmul.bf16.gmra.mxu0 %v2609
      %v2794 = vpop.f32.mrf.mxu0
      %v2795 = vadd.f32 0.0, %v2794
      %v2796 = vpop.f32.mrf.mxu0
      %v2797 = vadd.f32 0.0, %v2796
      %2798 = vmatmul.bf16.gmra.mxu0 %v2610
      %v2799 = vpop.f32.mrf.mxu0
      %v2800 = vadd.f32 0.0, %v2799
      %v2801 = vpop.f32.mrf.mxu0
      %v2802 = vadd.f32 0.0, %v2801
      %2803 = vmatmul.bf16.gmra.mxu0 %v2611
      %v2804 = vpop.f32.mrf.mxu0
      %v2805 = vadd.f32 0.0, %v2804
      %v2806 = vpop.f32.mrf.mxu0
      %v2807 = vadd.f32 0.0, %v2806
      %2808 = vmatmul.bf16.gmra.mxu0 %v2612
      %v2809 = vpop.f32.mrf.mxu0
      %v2810 = vadd.f32 0.0, %v2809
      %v2811 = vpop.f32.mrf.mxu0
      %v2812 = vadd.f32 0.0, %v2811
      %2813 = vmatmul.bf16.gmra.mxu0 %v2613
      %v2814 = vpop.f32.mrf.mxu0
      %v2815 = vadd.f32 0.0, %v2814
      %v2816 = vpop.f32.mrf.mxu0
      %v2817 = vadd.f32 0.0, %v2816
      %2818 = vmatmul.bf16.gmra.mxu0 %v2614
      %v2819 = vpop.f32.mrf.mxu0
      %v2820 = vadd.f32 0.0, %v2819
      %v2821 = vpop.f32.mrf.mxu0
      %v2822 = vadd.f32 0.0, %v2821
      %2823 = vmatmul.bf16.gmra.mxu0 %v2615
      %v2824 = vpop.f32.mrf.mxu0
      %v2825 = vadd.f32 0.0, %v2824
      %v2826 = vpop.f32.mrf.mxu0
      %v2827 = vadd.f32 0.0, %v2826
      %2828 = vmatmul.bf16.gmra.mxu0 %v2616
      %v2829 = vpop.f32.mrf.mxu0
      %v2830 = vadd.f32 0.0, %v2829
      %v2831 = vpop.f32.mrf.mxu0
      %v2832 = vadd.f32 0.0, %v2831
      %2833 = vmatmul.bf16.gmra.mxu0 %v2617
      %v2834 = vpop.f32.mrf.mxu0
      %v2835 = vadd.f32 0.0, %v2834
      %v2836 = vpop.f32.mrf.mxu0
      %v2837 = vadd.f32 0.0, %v2836
      %2838 = vmatmul.bf16.gmra.mxu0 %v2618
      %v2839 = vpop.f32.mrf.mxu0
      %v2840 = vadd.f32 0.0, %v2839
      %v2841 = vpop.f32.mrf.mxu0
      %v2842 = vadd.f32 0.0, %v2841
      %2843 = vmatmul.bf16.gmra.mxu0 %v2619
      %v2844 = vpop.f32.mrf.mxu0
      %v2845 = vadd.f32 0.0, %v2844
      %v2846 = vpop.f32.mrf.mxu0
      %v2847 = vadd.f32 0.0, %v2846
      %2848 = vmatmul.bf16.gmra.mxu0 %v2620
      %v2849 = vpop.f32.mrf.mxu0
      %v2850 = vadd.f32 0.0, %v2849
      %v2851 = vpop.f32.mrf.mxu0
      %v2852 = vadd.f32 0.0, %v2851
      %2853 = vdwg.mxu0
      %v2854 = vpack.c.bf16 %v2695, %v2695
      %v2855 = vpack.c.bf16 %v2697, %v2697
      %v2856 = vpack.c.bf16 %v2700, %v2700
      %v2857 = vpack.c.bf16 %v2702, %v2702
      %v2858 = vpack.c.bf16 %v2705, %v2705
      %v2859 = vpack.c.bf16 %v2707, %v2707
      %v2860 = vpack.c.bf16 %v2710, %v2710
      %v2861 = vpack.c.bf16 %v2712, %v2712
      %v2862 = vpack.c.bf16 %v2715, %v2715
      %v2863 = vpack.c.bf16 %v2717, %v2717
      %v2864 = vpack.c.bf16 %v2720, %v2720
      %v2865 = vpack.c.bf16 %v2722, %v2722
      %v2866 = vpack.c.bf16 %v2725, %v2725
      %v2867 = vpack.c.bf16 %v2727, %v2727
      %v2868 = vpack.c.bf16 %v2730, %v2730
      %v2869 = vpack.c.bf16 %v2732, %v2732
      %v2870 = vpack.c.bf16 %v2735, %v2735
      %v2871 = vpack.c.bf16 %v2737, %v2737
      %v2872 = vpack.c.bf16 %v2740, %v2740
      %v2873 = vpack.c.bf16 %v2742, %v2742
      %v2874 = vpack.c.bf16 %v2745, %v2745
      %v2875 = vpack.c.bf16 %v2747, %v2747
      %v2876 = vpack.c.bf16 %v2750, %v2750
      %v2877 = vpack.c.bf16 %v2752, %v2752
      %v2878 = vpack.c.bf16 %v2755, %v2755
      %v2879 = vpack.c.bf16 %v2757, %v2757
      %v2880 = vpack.c.bf16 %v2760, %v2760
      %v2881 = vpack.c.bf16 %v2762, %v2762
      %v2882 = vpack.c.bf16 %v2765, %v2765
      %v2883 = vpack.c.bf16 %v2767, %v2767
      %v2884 = vpack.c.bf16 %v2770, %v2770
      %v2885 = vpack.c.bf16 %v2772, %v2772
      %v2886 = vpack.c.bf16 %v2775, %v2775
      %v2887 = vpack.c.bf16 %v2777, %v2777
      %v2888 = vpack.c.bf16 %v2780, %v2780
      %v2889 = vpack.c.bf16 %v2782, %v2782
      %v2890 = vpack.c.bf16 %v2785, %v2785
      %v2891 = vpack.c.bf16 %v2787, %v2787
      %v2892 = vpack.c.bf16 %v2790, %v2790
      %v2893 = vpack.c.bf16 %v2792, %v2792
      %v2894 = vpack.c.bf16 %v2795, %v2795
      %v2895 = vpack.c.bf16 %v2797, %v2797
      %v2896 = vpack.c.bf16 %v2800, %v2800
      %v2897 = vpack.c.bf16 %v2802, %v2802
      %v2898 = vpack.c.bf16 %v2805, %v2805
      %v2899 = vpack.c.bf16 %v2807, %v2807
      %v2900 = vpack.c.bf16 %v2810, %v2810
      %v2901 = vpack.c.bf16 %v2812, %v2812
      %v2902 = vpack.c.bf16 %v2815, %v2815
      %v2903 = vpack.c.bf16 %v2817, %v2817
      %v2904 = vpack.c.bf16 %v2820, %v2820
      %v2905 = vpack.c.bf16 %v2822, %v2822
      %v2906 = vpack.c.bf16 %v2825, %v2825
      %v2907 = vpack.c.bf16 %v2827, %v2827
      %v2908 = vpack.c.bf16 %v2830, %v2830
      %v2909 = vpack.c.bf16 %v2832, %v2832
      %v2910 = vpack.c.bf16 %v2835, %v2835
      %v2911 = vpack.c.bf16 %v2837, %v2837
      %v2912 = vpack.c.bf16 %v2840, %v2840
      %v2913 = vpack.c.bf16 %v2842, %v2842
      %v2914 = vpack.c.bf16 %v2845, %v2845
      %v2915 = vpack.c.bf16 %v2847, %v2847
      %v2916 = vpack.c.bf16 %v2850, %v2850
      %v2917 = vpack.c.bf16 %v2852, %v2852
      %v2918 = vld [vmem:[%s8] sm:$0x1]
      %v2920 = vpack.i.b16 %v2918, %v2918
      %v2922 = vperm.slane %v2920, 0
      %v2923 = vunpack.c.l.bf16 %v2854
      %v2924 = vunpack.c.l.bf16 %v2855
      %v2925 = vunpack.c.l.bf16 %v2856
      %v2926 = vunpack.c.l.bf16 %v2857
      %v2927 = vunpack.c.l.bf16 %v2858
      %v2928 = vunpack.c.l.bf16 %v2859
      %v2929 = vunpack.c.l.bf16 %v2860
      %v2930 = vunpack.c.l.bf16 %v2861
      %v2931 = vunpack.c.l.bf16 %v2862
      %v2932 = vunpack.c.l.bf16 %v2863
      %v2933 = vunpack.c.l.bf16 %v2864
      %v2934 = vunpack.c.l.bf16 %v2865
      %v2935 = vunpack.c.l.bf16 %v2866
      %v2936 = vunpack.c.l.bf16 %v2867
      %v2937 = vunpack.c.l.bf16 %v2868
      %v2938 = vunpack.c.l.bf16 %v2869
      %v2939 = vunpack.c.l.bf16 %v2870
      %v2940 = vunpack.c.l.bf16 %v2871
      %v2941 = vunpack.c.l.bf16 %v2872
      %v2942 = vunpack.c.l.bf16 %v2873
      %v2943 = vunpack.c.l.bf16 %v2874
      %v2944 = vunpack.c.l.bf16 %v2875
      %v2945 = vunpack.c.l.bf16 %v2876
      %v2946 = vunpack.c.l.bf16 %v2877
      %v2947 = vunpack.c.l.bf16 %v2878
      %v2948 = vunpack.c.l.bf16 %v2879
      %v2949 = vunpack.c.l.bf16 %v2880
      %v2950 = vunpack.c.l.bf16 %v2881
      %v2951 = vunpack.c.l.bf16 %v2882
      %v2952 = vunpack.c.l.bf16 %v2883
      %v2953 = vunpack.c.l.bf16 %v2884
      %v2954 = vunpack.c.l.bf16 %v2885
      %v2955 = vunpack.c.l.bf16 %v2886
      %v2956 = vunpack.c.l.bf16 %v2887
      %v2957 = vunpack.c.l.bf16 %v2888
      %v2958 = vunpack.c.l.bf16 %v2889
      %v2959 = vunpack.c.l.bf16 %v2890
      %v2960 = vunpack.c.l.bf16 %v2891
      %v2961 = vunpack.c.l.bf16 %v2892
      %v2962 = vunpack.c.l.bf16 %v2893
      %v2963 = vunpack.c.l.bf16 %v2894
      %v2964 = vunpack.c.l.bf16 %v2895
      %v2965 = vunpack.c.l.bf16 %v2896
      %v2966 = vunpack.c.l.bf16 %v2897
      %v2967 = vunpack.c.l.bf16 %v2898
      %v2968 = vunpack.c.l.bf16 %v2899
      %v2969 = vunpack.c.l.bf16 %v2900
      %v2970 = vunpack.c.l.bf16 %v2901
      %v2971 = vunpack.c.l.bf16 %v2902
      %v2972 = vunpack.c.l.bf16 %v2903
      %v2973 = vunpack.c.l.bf16 %v2904
      %v2974 = vunpack.c.l.bf16 %v2905
      %v2975 = vunpack.c.l.bf16 %v2906
      %v2976 = vunpack.c.l.bf16 %v2907
      %v2977 = vunpack.c.l.bf16 %v2908
      %v2978 = vunpack.c.l.bf16 %v2909
      %v2979 = vunpack.c.l.bf16 %v2910
      %v2980 = vunpack.c.l.bf16 %v2911
      %v2981 = vunpack.c.l.bf16 %v2912
      %v2982 = vunpack.c.l.bf16 %v2913
      %v2983 = vunpack.c.l.bf16 %v2914
      %v2984 = vunpack.c.l.bf16 %v2915
      %v2985 = vunpack.c.l.bf16 %v2916
      %v2986 = vunpack.c.l.bf16 %v2917
      %v2987 = vunpack.c.l.bf16 %v2922
      %v2988 = vadd.f32 %v2923, %v2987
      %v2989 = vadd.f32 %v2924, %v2987
      %v2990 = vadd.f32 %v2925, %v2987
      %v2991 = vadd.f32 %v2926, %v2987
      %v2992 = vadd.f32 %v2927, %v2987
      %v2993 = vadd.f32 %v2928, %v2987
      %v2994 = vadd.f32 %v2929, %v2987
      %v2995 = vadd.f32 %v2930, %v2987
      %v2996 = vadd.f32 %v2931, %v2987
      %v2997 = vadd.f32 %v2932, %v2987
      %v2998 = vadd.f32 %v2933, %v2987
      %v2999 = vadd.f32 %v2934, %v2987
      %v3000 = vadd.f32 %v2935, %v2987
      %v3001 = vadd.f32 %v2936, %v2987
      %v3002 = vadd.f32 %v2937, %v2987
      %v3003 = vadd.f32 %v2938, %v2987
      %v3004 = vadd.f32 %v2939, %v2987
      %v3005 = vadd.f32 %v2940, %v2987
      %v3006 = vadd.f32 %v2941, %v2987
      %v3007 = vadd.f32 %v2942, %v2987
      %v3008 = vadd.f32 %v2943, %v2987
      %v3009 = vadd.f32 %v2944, %v2987
      %v3010 = vadd.f32 %v2945, %v2987
      %v3011 = vadd.f32 %v2946, %v2987
      %v3012 = vadd.f32 %v2947, %v2987
      %v3013 = vadd.f32 %v2948, %v2987
      %v3014 = vadd.f32 %v2949, %v2987
      %v3015 = vadd.f32 %v2950, %v2987
      %v3016 = vadd.f32 %v2951, %v2987
      %v3017 = vadd.f32 %v2952, %v2987
      %v3018 = vadd.f32 %v2953, %v2987
      %v3019 = vadd.f32 %v2954, %v2987
      %v3020 = vadd.f32 %v2955, %v2987
      %v3021 = vadd.f32 %v2956, %v2987
      %v3022 = vadd.f32 %v2957, %v2987
      %v3023 = vadd.f32 %v2958, %v2987
      %v3024 = vadd.f32 %v2959, %v2987
      %v3025 = vadd.f32 %v2960, %v2987
      %v3026 = vadd.f32 %v2961, %v2987
      %v3027 = vadd.f32 %v2962, %v2987
      %v3028 = vadd.f32 %v2963, %v2987
      %v3029 = vadd.f32 %v2964, %v2987
      %v3030 = vadd.f32 %v2965, %v2987
      %v3031 = vadd.f32 %v2966, %v2987
      %v3032 = vadd.f32 %v2967, %v2987
      %v3033 = vadd.f32 %v2968, %v2987
      %v3034 = vadd.f32 %v2969, %v2987
      %v3035 = vadd.f32 %v2970, %v2987
      %v3036 = vadd.f32 %v2971, %v2987
      %v3037 = vadd.f32 %v2972, %v2987
      %v3038 = vadd.f32 %v2973, %v2987
      %v3039 = vadd.f32 %v2974, %v2987
      %v3040 = vadd.f32 %v2975, %v2987
      %v3041 = vadd.f32 %v2976, %v2987
      %v3042 = vadd.f32 %v2977, %v2987
      %v3043 = vadd.f32 %v2978, %v2987
      %v3044 = vadd.f32 %v2979, %v2987
      %v3045 = vadd.f32 %v2980, %v2987
      %v3046 = vadd.f32 %v2981, %v2987
      %v3047 = vadd.f32 %v2982, %v2987
      %v3048 = vadd.f32 %v2983, %v2987
      %v3049 = vadd.f32 %v2984, %v2987
      %v3050 = vadd.f32 %v2985, %v2987
      %v3051 = vadd.f32 %v2986, %v2987
      %v3052 = vpack.c.bf16 %v2988, %v2988
      %v3053 = vpack.c.bf16 %v2989, %v2989
      %v3054 = vpack.c.bf16 %v2990, %v2990
      %v3055 = vpack.c.bf16 %v2991, %v2991
      %v3056 = vpack.c.bf16 %v2992, %v2992
      %v3057 = vpack.c.bf16 %v2993, %v2993
      %v3058 = vpack.c.bf16 %v2994, %v2994
      %v3059 = vpack.c.bf16 %v2995, %v2995
      %v3060 = vpack.c.bf16 %v2996, %v2996
      %v3061 = vpack.c.bf16 %v2997, %v2997
      %v3062 = vpack.c.bf16 %v2998, %v2998
      %v3063 = vpack.c.bf16 %v2999, %v2999
      %v3064 = vpack.c.bf16 %v3000, %v3000
      %v3065 = vpack.c.bf16 %v3001, %v3001
      %v3066 = vpack.c.bf16 %v3002, %v3002
      %v3067 = vpack.c.bf16 %v3003, %v3003
      %v3068 = vpack.c.bf16 %v3004, %v3004
      %v3069 = vpack.c.bf16 %v3005, %v3005
      %v3070 = vpack.c.bf16 %v3006, %v3006
      %v3071 = vpack.c.bf16 %v3007, %v3007
      %v3072 = vpack.c.bf16 %v3008, %v3008
      %v3073 = vpack.c.bf16 %v3009, %v3009
      %v3074 = vpack.c.bf16 %v3010, %v3010
      %v3075 = vpack.c.bf16 %v3011, %v3011
      %v3076 = vpack.c.bf16 %v3012, %v3012
      %v3077 = vpack.c.bf16 %v3013, %v3013
      %v3078 = vpack.c.bf16 %v3014, %v3014
      %v3079 = vpack.c.bf16 %v3015, %v3015
      %v3080 = vpack.c.bf16 %v3016, %v3016
      %v3081 = vpack.c.bf16 %v3017, %v3017
      %v3082 = vpack.c.bf16 %v3018, %v3018
      %v3083 = vpack.c.bf16 %v3019, %v3019
      %v3084 = vpack.c.bf16 %v3020, %v3020
      %v3085 = vpack.c.bf16 %v3021, %v3021
      %v3086 = vpack.c.bf16 %v3022, %v3022
      %v3087 = vpack.c.bf16 %v3023, %v3023
      %v3088 = vpack.c.bf16 %v3024, %v3024
      %v3089 = vpack.c.bf16 %v3025, %v3025
      %v3090 = vpack.c.bf16 %v3026, %v3026
      %v3091 = vpack.c.bf16 %v3027, %v3027
      %v3092 = vpack.c.bf16 %v3028, %v3028
      %v3093 = vpack.c.bf16 %v3029, %v3029
      %v3094 = vpack.c.bf16 %v3030, %v3030
      %v3095 = vpack.c.bf16 %v3031, %v3031
      %v3096 = vpack.c.bf16 %v3032, %v3032
      %v3097 = vpack.c.bf16 %v3033, %v3033
      %v3098 = vpack.c.bf16 %v3034, %v3034
      %v3099 = vpack.c.bf16 %v3035, %v3035
      %v3100 = vpack.c.bf16 %v3036, %v3036
      %v3101 = vpack.c.bf16 %v3037, %v3037
      %v3102 = vpack.c.bf16 %v3038, %v3038
      %v3103 = vpack.c.bf16 %v3039, %v3039
      %v3104 = vpack.c.bf16 %v3040, %v3040
      %v3105 = vpack.c.bf16 %v3041, %v3041
      %v3106 = vpack.c.bf16 %v3042, %v3042
      %v3107 = vpack.c.bf16 %v3043, %v3043
      %v3108 = vpack.c.bf16 %v3044, %v3044
      %v3109 = vpack.c.bf16 %v3045, %v3045
      %v3110 = vpack.c.bf16 %v3046, %v3046
      %v3111 = vpack.c.bf16 %v3047, %v3047
      %v3112 = vpack.c.bf16 %v3048, %v3048
      %v3113 = vpack.c.bf16 %v3049, %v3049
      %v3114 = vpack.c.bf16 %v3050, %v3050
      %v3115 = vpack.c.bf16 %v3051, %v3051
      %v3116 = vunpack.c.l.bf16 %v3052
      %v3117 = vunpack.c.l.bf16 %v3053
      %v3118 = vunpack.c.l.bf16 %v3054
      %v3119 = vunpack.c.l.bf16 %v3055
      %v3120 = vunpack.c.l.bf16 %v3056
      %v3121 = vunpack.c.l.bf16 %v3057
      %v3122 = vunpack.c.l.bf16 %v3058
      %v3123 = vunpack.c.l.bf16 %v3059
      %v3124 = vunpack.c.l.bf16 %v3060
      %v3125 = vunpack.c.l.bf16 %v3061
      %v3126 = vunpack.c.l.bf16 %v3062
      %v3127 = vunpack.c.l.bf16 %v3063
      %v3128 = vunpack.c.l.bf16 %v3064
      %v3129 = vunpack.c.l.bf16 %v3065
      %v3130 = vunpack.c.l.bf16 %v3066
      %v3131 = vunpack.c.l.bf16 %v3067
      %v3132 = vunpack.c.l.bf16 %v3068
      %v3133 = vunpack.c.l.bf16 %v3069
      %v3134 = vunpack.c.l.bf16 %v3070
      %v3135 = vunpack.c.l.bf16 %v3071
      %v3136 = vunpack.c.l.bf16 %v3072
      %v3137 = vunpack.c.l.bf16 %v3073
      %v3138 = vunpack.c.l.bf16 %v3074
      %v3139 = vunpack.c.l.bf16 %v3075
      %v3140 = vunpack.c.l.bf16 %v3076
      %v3141 = vunpack.c.l.bf16 %v3077
      %v3142 = vunpack.c.l.bf16 %v3078
      %v3143 = vunpack.c.l.bf16 %v3079
      %v3144 = vunpack.c.l.bf16 %v3080
      %v3145 = vunpack.c.l.bf16 %v3081
      %v3146 = vunpack.c.l.bf16 %v3082
      %v3147 = vunpack.c.l.bf16 %v3083
      %v3148 = vunpack.c.l.bf16 %v3084
      %v3149 = vunpack.c.l.bf16 %v3085
      %v3150 = vunpack.c.l.bf16 %v3086
      %v3151 = vunpack.c.l.bf16 %v3087
      %v3152 = vunpack.c.l.bf16 %v3088
      %v3153 = vunpack.c.l.bf16 %v3089
      %v3154 = vunpack.c.l.bf16 %v3090
      %v3155 = vunpack.c.l.bf16 %v3091
      %v3156 = vunpack.c.l.bf16 %v3092
      %v3157 = vunpack.c.l.bf16 %v3093
      %v3158 = vunpack.c.l.bf16 %v3094
      %v3159 = vunpack.c.l.bf16 %v3095
      %v3160 = vunpack.c.l.bf16 %v3096
      %v3161 = vunpack.c.l.bf16 %v3097
      %v3162 = vunpack.c.l.bf16 %v3098
      %v3163 = vunpack.c.l.bf16 %v3099
      %v3164 = vunpack.c.l.bf16 %v3100
      %v3165 = vunpack.c.l.bf16 %v3101
      %v3166 = vunpack.c.l.bf16 %v3102
      %v3167 = vunpack.c.l.bf16 %v3103
      %v3168 = vunpack.c.l.bf16 %v3104
      %v3169 = vunpack.c.l.bf16 %v3105
      %v3170 = vunpack.c.l.bf16 %v3106
      %v3171 = vunpack.c.l.bf16 %v3107
      %v3172 = vunpack.c.l.bf16 %v3108
      %v3173 = vunpack.c.l.bf16 %v3109
      %v3174 = vunpack.c.l.bf16 %v3110
      %v3175 = vunpack.c.l.bf16 %v3111
      %v3176 = vunpack.c.l.bf16 %v3112
      %v3177 = vunpack.c.l.bf16 %v3113
      %v3178 = vunpack.c.l.bf16 %v3114
      %v3179 = vunpack.c.l.bf16 %v3115
      %v3180 = vmax.f32 %v3116, 0.0
      %v3181 = vmax.f32 %v3117, 0.0
      %v3182 = vmax.f32 %v3118, 0.0
      %v3183 = vmax.f32 %v3119, 0.0
      %v3184 = vmax.f32 %v3120, 0.0
      %v3185 = vmax.f32 %v3121, 0.0
      %v3186 = vmax.f32 %v3122, 0.0
      %v3187 = vmax.f32 %v3123, 0.0
      %v3188 = vmax.f32 %v3124, 0.0
      %v3189 = vmax.f32 %v3125, 0.0
      %v3190 = vmax.f32 %v3126, 0.0
      %v3191 = vmax.f32 %v3127, 0.0
      %v3192 = vmax.f32 %v3128, 0.0
      %v3193 = vmax.f32 %v3129, 0.0
      %v3194 = vmax.f32 %v3130, 0.0
      %v3195 = vmax.f32 %v3131, 0.0
      %v3196 = vmax.f32 %v3132, 0.0
      %v3197 = vmax.f32 %v3133, 0.0
      %v3198 = vmax.f32 %v3134, 0.0
      %v3199 = vmax.f32 %v3135, 0.0
      %v3200 = vmax.f32 %v3136, 0.0
      %v3201 = vmax.f32 %v3137, 0.0
      %v3202 = vmax.f32 %v3138, 0.0
      %v3203 = vmax.f32 %v3139, 0.0
      %v3204 = vmax.f32 %v3140, 0.0
      %v3205 = vmax.f32 %v3141, 0.0
      %v3206 = vmax.f32 %v3142, 0.0
      %v3207 = vmax.f32 %v3143, 0.0
      %v3208 = vmax.f32 %v3144, 0.0
      %v3209 = vmax.f32 %v3145, 0.0
      %v3210 = vmax.f32 %v3146, 0.0
      %v3211 = vmax.f32 %v3147, 0.0
      %v3212 = vmax.f32 %v3148, 0.0
      %v3213 = vmax.f32 %v3149, 0.0
      %v3214 = vmax.f32 %v3150, 0.0
      %v3215 = vmax.f32 %v3151, 0.0
      %v3216 = vmax.f32 %v3152, 0.0
      %v3217 = vmax.f32 %v3153, 0.0
      %v3218 = vmax.f32 %v3154, 0.0
      %v3219 = vmax.f32 %v3155, 0.0
      %v3220 = vmax.f32 %v3156, 0.0
      %v3221 = vmax.f32 %v3157, 0.0
      %v3222 = vmax.f32 %v3158, 0.0
      %v3223 = vmax.f32 %v3159, 0.0
      %v3224 = vmax.f32 %v3160, 0.0
      %v3225 = vmax.f32 %v3161, 0.0
      %v3226 = vmax.f32 %v3162, 0.0
      %v3227 = vmax.f32 %v3163, 0.0
      %v3228 = vmax.f32 %v3164, 0.0
      %v3229 = vmax.f32 %v3165, 0.0
      %v3230 = vmax.f32 %v3166, 0.0
      %v3231 = vmax.f32 %v3167, 0.0
      %v3232 = vmax.f32 %v3168, 0.0
      %v3233 = vmax.f32 %v3169, 0.0
      %v3234 = vmax.f32 %v3170, 0.0
      %v3235 = vmax.f32 %v3171, 0.0
      %v3236 = vmax.f32 %v3172, 0.0
      %v3237 = vmax.f32 %v3173, 0.0
      %v3238 = vmax.f32 %v3174, 0.0
      %v3239 = vmax.f32 %v3175, 0.0
      %v3240 = vmax.f32 %v3176, 0.0
      %v3241 = vmax.f32 %v3177, 0.0
      %v3242 = vmax.f32 %v3178, 0.0
      %v3243 = vmax.f32 %v3179, 0.0
      %v3244 = vpack.c.bf16 %v3181, %v3180
      %v3245 = vpack.c.bf16 %v3183, %v3182
      %v3246 = vpack.c.bf16 %v3185, %v3184
      %v3247 = vpack.c.bf16 %v3187, %v3186
      %v3248 = vpack.c.bf16 %v3189, %v3188
      %v3249 = vpack.c.bf16 %v3191, %v3190
      %v3250 = vpack.c.bf16 %v3193, %v3192
      %v3251 = vpack.c.bf16 %v3195, %v3194
      %v3252 = vpack.c.bf16 %v3197, %v3196
      %v3253 = vpack.c.bf16 %v3199, %v3198
      %v3254 = vpack.c.bf16 %v3201, %v3200
      %v3255 = vpack.c.bf16 %v3203, %v3202
      %v3256 = vpack.c.bf16 %v3205, %v3204
      %v3257 = vpack.c.bf16 %v3207, %v3206
      %v3258 = vpack.c.bf16 %v3209, %v3208
      %v3259 = vpack.c.bf16 %v3211, %v3210
      %v3260 = vpack.c.bf16 %v3213, %v3212
      %v3261 = vpack.c.bf16 %v3215, %v3214
      %v3262 = vpack.c.bf16 %v3217, %v3216
      %v3263 = vpack.c.bf16 %v3219, %v3218
      %v3264 = vpack.c.bf16 %v3221, %v3220
      %v3265 = vpack.c.bf16 %v3223, %v3222
      %v3266 = vpack.c.bf16 %v3225, %v3224
      %v3267 = vpack.c.bf16 %v3227, %v3226
      %v3268 = vpack.c.bf16 %v3229, %v3228
      %v3269 = vpack.c.bf16 %v3231, %v3230
      %v3270 = vpack.c.bf16 %v3233, %v3232
      %v3271 = vpack.c.bf16 %v3235, %v3234
      %v3272 = vpack.c.bf16 %v3237, %v3236
      %v3273 = vpack.c.bf16 %v3239, %v3238
      %v3274 = vpack.c.bf16 %v3241, %v3240
      %v3275 = vpack.c.bf16 %v3243, %v3242
      %v3276 = vld [vmem:[%s9] sm:$0xf]
      %v3277 = vld [vmem:[%s9 + $0x4] sm:$0xf]
      %v3278 = vld [vmem:[%s9 + $0x8] sm:$0xf]
      %v3279 = vld [vmem:[%s9 + $0xc] sm:$0xf]
      %v3280 = vld [vmem:[%s9 + $0x10] sm:$0xf]
      %v3281 = vld [vmem:[%s9 + $0x14] sm:$0xf]
      %v3282 = vld [vmem:[%s9 + $0x18] sm:$0xf]
      %v3283 = vld [vmem:[%s9 + $0x1c] sm:$0xf]
      %v3284 = vld [vmem:[%s9 + $0x20] sm:$0xf]
      %v3285 = vld [vmem:[%s9 + $0x24] sm:$0xf]
      %v3286 = vld [vmem:[%s9 + $0x28] sm:$0xf]
      %v3287 = vld [vmem:[%s9 + $0x2c] sm:$0xf]
      %v3288 = vld [vmem:[%s9 + $0x30] sm:$0xf]
      %v3289 = vld [vmem:[%s9 + $0x34] sm:$0xf]
      %v3290 = vld [vmem:[%s9 + $0x38] sm:$0xf]
      %v3291 = vld [vmem:[%s9 + $0x3c] sm:$0xf]
      %v3292 = vld [vmem:[%s10] sm:$0x1]
      %v3294 = vperm.slane %v3292, 0
      %v3312 = vunpack.c.l.b16 %v3276
      %v3313 = vunpack.c.l.b16 %v3277
      %v3314 = vunpack.c.l.b16 %v3278
      %v3315 = vunpack.c.l.b16 %v3279
      %v3316 = vunpack.c.l.b16 %v3280
      %v3317 = vunpack.c.l.b16 %v3281
      %v3318 = vunpack.c.l.b16 %v3282
      %v3319 = vunpack.c.l.b16 %v3283
      %v3320 = vunpack.c.l.b16 %v3284
      %v3321 = vunpack.c.l.b16 %v3285
      %v3322 = vunpack.c.l.b16 %v3286
      %v3323 = vunpack.c.l.b16 %v3287
      %v3324 = vunpack.c.l.b16 %v3288
      %v3325 = vunpack.c.l.b16 %v3289
      %v3326 = vunpack.c.l.b16 %v3290
      %v3327 = vunpack.c.l.b16 %v3291
      %v3328 = vpack.c.b16 %v3313, %v3312
      %v3329 = vpack.c.b16 %v3315, %v3314
      %v3330 = vpack.c.b16 %v3317, %v3316
      %v3331 = vpack.c.b16 %v3319, %v3318
      %v3332 = vpack.c.b16 %v3321, %v3320
      %v3333 = vpack.c.b16 %v3323, %v3322
      %v3334 = vpack.c.b16 %v3325, %v3324
      %v3335 = vpack.c.b16 %v3327, %v3326
      %3344 = vmatpush.bf16.msra.mxu0 %v3335
      %3345 = vmatpush.bf16.msra.mxu0 %v3334
      %3346 = vmatpush.bf16.msra.mxu0 %v3333
      %3347 = vmatpush.bf16.msra.mxu0 %v3332
      %3348 = vmatpush.bf16.msra.mxu0 %v3331
      %3349 = vmatpush.bf16.msra.mxu0 %v3330
      %3350 = vmatpush.bf16.msra.mxu0 %v3329
      %3351 = vmatpush.bf16.msra.mxu0 %v3328
      %3352 = vmatmul.bf16.gmra.mxu0 %v3244
      %v3353 = vpop.f32.mrf.mxu0
      %v3354 = vadd.f32 %v3294, %v3353
      %v3355 = vpop.f32.mrf.mxu0
      %v3356 = vadd.f32 %v3294, %v3355
      %3357 = vmatmul.bf16.gmra.mxu0 %v3245
      %v3358 = vpop.f32.mrf.mxu0
      %v3359 = vadd.f32 %v3294, %v3358
      %v3360 = vpop.f32.mrf.mxu0
      %v3361 = vadd.f32 %v3294, %v3360
      %3362 = vmatmul.bf16.gmra.mxu0 %v3246
      %v3363 = vpop.f32.mrf.mxu0
      %v3364 = vadd.f32 %v3294, %v3363
      %v3365 = vpop.f32.mrf.mxu0
      %v3366 = vadd.f32 %v3294, %v3365
      %3367 = vmatmul.bf16.gmra.mxu0 %v3247
      %v3368 = vpop.f32.mrf.mxu0
      %v3369 = vadd.f32 %v3294, %v3368
      %v3370 = vpop.f32.mrf.mxu0
      %v3371 = vadd.f32 %v3294, %v3370
      %3372 = vmatmul.bf16.gmra.mxu0 %v3248
      %v3373 = vpop.f32.mrf.mxu0
      %v3374 = vadd.f32 %v3294, %v3373
      %v3375 = vpop.f32.mrf.mxu0
      %v3376 = vadd.f32 %v3294, %v3375
      %3377 = vmatmul.bf16.gmra.mxu0 %v3249
      %v3378 = vpop.f32.mrf.mxu0
      %v3379 = vadd.f32 %v3294, %v3378
      %v3380 = vpop.f32.mrf.mxu0
      %v3381 = vadd.f32 %v3294, %v3380
      %3382 = vmatmul.bf16.gmra.mxu0 %v3250
      %v3383 = vpop.f32.mrf.mxu0
      %v3384 = vadd.f32 %v3294, %v3383
      %v3385 = vpop.f32.mrf.mxu0
      %v3386 = vadd.f32 %v3294, %v3385
      %3387 = vmatmul.bf16.gmra.mxu0 %v3251
      %v3388 = vpop.f32.mrf.mxu0
      %v3389 = vadd.f32 %v3294, %v3388
      %v3390 = vpop.f32.mrf.mxu0
      %v3391 = vadd.f32 %v3294, %v3390
      %3392 = vmatmul.bf16.gmra.mxu0 %v3252
      %v3393 = vpop.f32.mrf.mxu0
      %v3394 = vadd.f32 %v3294, %v3393
      %v3395 = vpop.f32.mrf.mxu0
      %v3396 = vadd.f32 %v3294, %v3395
      %3397 = vmatmul.bf16.gmra.mxu0 %v3253
      %v3398 = vpop.f32.mrf.mxu0
      %v3399 = vadd.f32 %v3294, %v3398
      %v3400 = vpop.f32.mrf.mxu0
      %v3401 = vadd.f32 %v3294, %v3400
      %3402 = vmatmul.bf16.gmra.mxu0 %v3254
      %v3403 = vpop.f32.mrf.mxu0
      %v3404 = vadd.f32 %v3294, %v3403
      %v3405 = vpop.f32.mrf.mxu0
      %v3406 = vadd.f32 %v3294, %v3405
      %3407 = vmatmul.bf16.gmra.mxu0 %v3255
      %v3408 = vpop.f32.mrf.mxu0
      %v3409 = vadd.f32 %v3294, %v3408
      %v3410 = vpop.f32.mrf.mxu0
      %v3411 = vadd.f32 %v3294, %v3410
      %3412 = vmatmul.bf16.gmra.mxu0 %v3256
      %v3413 = vpop.f32.mrf.mxu0
      %v3414 = vadd.f32 %v3294, %v3413
      %v3415 = vpop.f32.mrf.mxu0
      %v3416 = vadd.f32 %v3294, %v3415
      %3417 = vmatmul.bf16.gmra.mxu0 %v3257
      %v3418 = vpop.f32.mrf.mxu0
      %v3419 = vadd.f32 %v3294, %v3418
      %v3420 = vpop.f32.mrf.mxu0
      %v3421 = vadd.f32 %v3294, %v3420
      %3422 = vmatmul.bf16.gmra.mxu0 %v3258
      %v3423 = vpop.f32.mrf.mxu0
      %v3424 = vadd.f32 %v3294, %v3423
      %v3425 = vpop.f32.mrf.mxu0
      %v3426 = vadd.f32 %v3294, %v3425
      %3427 = vmatmul.bf16.gmra.mxu0 %v3259
      %v3428 = vpop.f32.mrf.mxu0
      %v3429 = vadd.f32 %v3294, %v3428
      %v3430 = vpop.f32.mrf.mxu0
      %v3431 = vadd.f32 %v3294, %v3430
      %3432 = vmatmul.bf16.gmra.mxu0 %v3260
      %v3433 = vpop.f32.mrf.mxu0
      %v3434 = vadd.f32 %v3294, %v3433
      %v3435 = vpop.f32.mrf.mxu0
      %v3436 = vadd.f32 %v3294, %v3435
      %3437 = vmatmul.bf16.gmra.mxu0 %v3261
      %v3438 = vpop.f32.mrf.mxu0
      %v3439 = vadd.f32 %v3294, %v3438
      %v3440 = vpop.f32.mrf.mxu0
      %v3441 = vadd.f32 %v3294, %v3440
      %3442 = vmatmul.bf16.gmra.mxu0 %v3262
      %v3443 = vpop.f32.mrf.mxu0
      %v3444 = vadd.f32 %v3294, %v3443
      %v3445 = vpop.f32.mrf.mxu0
      %v3446 = vadd.f32 %v3294, %v3445
      %3447 = vmatmul.bf16.gmra.mxu0 %v3263
      %v3448 = vpop.f32.mrf.mxu0
      %v3449 = vadd.f32 %v3294, %v3448
      %v3450 = vpop.f32.mrf.mxu0
      %v3451 = vadd.f32 %v3294, %v3450
      %3452 = vmatmul.bf16.gmra.mxu0 %v3264
      %v3453 = vpop.f32.mrf.mxu0
      %v3454 = vadd.f32 %v3294, %v3453
      %v3455 = vpop.f32.mrf.mxu0
      %v3456 = vadd.f32 %v3294, %v3455
      %3457 = vmatmul.bf16.gmra.mxu0 %v3265
      %v3458 = vpop.f32.mrf.mxu0
      %v3459 = vadd.f32 %v3294, %v3458
      %v3460 = vpop.f32.mrf.mxu0
      %v3461 = vadd.f32 %v3294, %v3460
      %3462 = vmatmul.bf16.gmra.mxu0 %v3266
      %v3463 = vpop.f32.mrf.mxu0
      %v3464 = vadd.f32 %v3294, %v3463
      %v3465 = vpop.f32.mrf.mxu0
      %v3466 = vadd.f32 %v3294, %v3465
      %3467 = vmatmul.bf16.gmra.mxu0 %v3267
      %v3468 = vpop.f32.mrf.mxu0
      %v3469 = vadd.f32 %v3294, %v3468
      %v3470 = vpop.f32.mrf.mxu0
      %v3471 = vadd.f32 %v3294, %v3470
      %3472 = vmatmul.bf16.gmra.mxu0 %v3268
      %v3473 = vpop.f32.mrf.mxu0
      %v3474 = vadd.f32 %v3294, %v3473
      %v3475 = vpop.f32.mrf.mxu0
      %v3476 = vadd.f32 %v3294, %v3475
      %3477 = vmatmul.bf16.gmra.mxu0 %v3269
      %v3478 = vpop.f32.mrf.mxu0
      %v3479 = vadd.f32 %v3294, %v3478
      %v3480 = vpop.f32.mrf.mxu0
      %v3481 = vadd.f32 %v3294, %v3480
      %3482 = vmatmul.bf16.gmra.mxu0 %v3270
      %v3483 = vpop.f32.mrf.mxu0
      %v3484 = vadd.f32 %v3294, %v3483
      %v3485 = vpop.f32.mrf.mxu0
      %v3486 = vadd.f32 %v3294, %v3485
      %3487 = vmatmul.bf16.gmra.mxu0 %v3271
      %v3488 = vpop.f32.mrf.mxu0
      %v3489 = vadd.f32 %v3294, %v3488
      %v3490 = vpop.f32.mrf.mxu0
      %v3491 = vadd.f32 %v3294, %v3490
      %3492 = vmatmul.bf16.gmra.mxu0 %v3272
      %v3493 = vpop.f32.mrf.mxu0
      %v3494 = vadd.f32 %v3294, %v3493
      %v3495 = vpop.f32.mrf.mxu0
      %v3496 = vadd.f32 %v3294, %v3495
      %3497 = vmatmul.bf16.gmra.mxu0 %v3273
      %v3498 = vpop.f32.mrf.mxu0
      %v3499 = vadd.f32 %v3294, %v3498
      %v3500 = vpop.f32.mrf.mxu0
      %v3501 = vadd.f32 %v3294, %v3500
      %3502 = vmatmul.bf16.gmra.mxu0 %v3274
      %v3503 = vpop.f32.mrf.mxu0
      %v3504 = vadd.f32 %v3294, %v3503
      %v3505 = vpop.f32.mrf.mxu0
      %v3506 = vadd.f32 %v3294, %v3505
      %3507 = vmatmul.bf16.gmra.mxu0 %v3275
      %v3508 = vpop.f32.mrf.mxu0
      %v3509 = vadd.f32 %v3294, %v3508
      %v3510 = vpop.f32.mrf.mxu0
      %v3511 = vadd.f32 %v3294, %v3510
      %3512 = vdwg.mxu0
      %vm3513 = vcmask 64512
      %3514 = vst.msk [vmem:[%s388] sm:$0xff] %vm3513, %v3354
      %3515 = vst.msk [vmem:[%s388 + $0x8] sm:$0xff] %vm3513, %v3356
      %3516 = vst.msk [vmem:[%s388 + $0x10] sm:$0xff] %vm3513, %v3359
      %3517 = vst.msk [vmem:[%s388 + $0x18] sm:$0xff] %vm3513, %v3361
      %3518 = vst.msk [vmem:[%s388 + $0x20] sm:$0xff] %vm3513, %v3364
      %3519 = vst.msk [vmem:[%s388 + $0x28] sm:$0xff] %vm3513, %v3366
      %3520 = vst.msk [vmem:[%s388 + $0x30] sm:$0xff] %vm3513, %v3369
      %3521 = vst.msk [vmem:[%s388 + $0x38] sm:$0xff] %vm3513, %v3371
      %3522 = vst.msk [vmem:[%s388 + $0x40] sm:$0xff] %vm3513, %v3374
      %3523 = vst.msk [vmem:[%s388 + $0x48] sm:$0xff] %vm3513, %v3376
      %3524 = vst.msk [vmem:[%s388 + $0x50] sm:$0xff] %vm3513, %v3379
      %3525 = vst.msk [vmem:[%s388 + $0x58] sm:$0xff] %vm3513, %v3381
      %3526 = vst.msk [vmem:[%s388 + $0x60] sm:$0xff] %vm3513, %v3384
      %3527 = vst.msk [vmem:[%s388 + $0x68] sm:$0xff] %vm3513, %v3386
      %3528 = vst.msk [vmem:[%s388 + $0x70] sm:$0xff] %vm3513, %v3389
      %3529 = vst.msk [vmem:[%s388 + $0x78] sm:$0xff] %vm3513, %v3391
      %3530 = vst.msk [vmem:[%s388 + $0x80] sm:$0xff] %vm3513, %v3394
      %3531 = vst.msk [vmem:[%s388 + $0x88] sm:$0xff] %vm3513, %v3396
      %3532 = vst.msk [vmem:[%s388 + $0x90] sm:$0xff] %vm3513, %v3399
      %3533 = vst.msk [vmem:[%s388 + $0x98] sm:$0xff] %vm3513, %v3401
      %3534 = vst.msk [vmem:[%s388 + $0xa0] sm:$0xff] %vm3513, %v3404
      %3535 = vst.msk [vmem:[%s388 + $0xa8] sm:$0xff] %vm3513, %v3406
      %3536 = vst.msk [vmem:[%s388 + $0xb0] sm:$0xff] %vm3513, %v3409
      %3537 = vst.msk [vmem:[%s388 + $0xb8] sm:$0xff] %vm3513, %v3411
      %3538 = vst.msk [vmem:[%s388 + $0xc0] sm:$0xff] %vm3513, %v3414
      %3539 = vst.msk [vmem:[%s388 + $0xc8] sm:$0xff] %vm3513, %v3416
      %3540 = vst.msk [vmem:[%s388 + $0xd0] sm:$0xff] %vm3513, %v3419
      %3541 = vst.msk [vmem:[%s388 + $0xd8] sm:$0xff] %vm3513, %v3421
      %3542 = vst.msk [vmem:[%s388 + $0xe0] sm:$0xff] %vm3513, %v3424
      %3543 = vst.msk [vmem:[%s388 + $0xe8] sm:$0xff] %vm3513, %v3426
      %3544 = vst.msk [vmem:[%s388 + $0xf0] sm:$0xff] %vm3513, %v3429
      %3545 = vst.msk [vmem:[%s388 + $0xf8] sm:$0xff] %vm3513, %v3431
      %3546 = vst.msk [vmem:[%s388 + $0x100] sm:$0xff] %vm3513, %v3434
      %3547 = vst.msk [vmem:[%s388 + $0x108] sm:$0xff] %vm3513, %v3436
      %3548 = vst.msk [vmem:[%s388 + $0x110] sm:$0xff] %vm3513, %v3439
      %3549 = vst.msk [vmem:[%s388 + $0x118] sm:$0xff] %vm3513, %v3441
      %3550 = vst.msk [vmem:[%s388 + $0x120] sm:$0xff] %vm3513, %v3444
      %3551 = vst.msk [vmem:[%s388 + $0x128] sm:$0xff] %vm3513, %v3446
      %3552 = vst.msk [vmem:[%s388 + $0x130] sm:$0xff] %vm3513, %v3449
      %3553 = vst.msk [vmem:[%s388 + $0x138] sm:$0xff] %vm3513, %v3451
      %3554 = vst.msk [vmem:[%s388 + $0x140] sm:$0xff] %vm3513, %v3454
      %3555 = vst.msk [vmem:[%s388 + $0x148] sm:$0xff] %vm3513, %v3456
      %3556 = vst.msk [vmem:[%s388 + $0x150] sm:$0xff] %vm3513, %v3459
      %3557 = vst.msk [vmem:[%s388 + $0x158] sm:$0xff] %vm3513, %v3461
      %3558 = vst.msk [vmem:[%s388 + $0x160] sm:$0xff] %vm3513, %v3464
      %3559 = vst.msk [vmem:[%s388 + $0x168] sm:$0xff] %vm3513, %v3466
      %3560 = vst.msk [vmem:[%s388 + $0x170] sm:$0xff] %vm3513, %v3469
      %3561 = vst.msk [vmem:[%s388 + $0x178] sm:$0xff] %vm3513, %v3471
      %3562 = vst.msk [vmem:[%s388 + $0x180] sm:$0xff] %vm3513, %v3474
      %3563 = vst.msk [vmem:[%s388 + $0x188] sm:$0xff] %vm3513, %v3476
      %3564 = vst.msk [vmem:[%s388 + $0x190] sm:$0xff] %vm3513, %v3479
      %3565 = vst.msk [vmem:[%s388 + $0x198] sm:$0xff] %vm3513, %v3481
      %3566 = vst.msk [vmem:[%s388 + $0x1a0] sm:$0xff] %vm3513, %v3484
      %3567 = vst.msk [vmem:[%s388 + $0x1a8] sm:$0xff] %vm3513, %v3486
      %3568 = vst.msk [vmem:[%s388 + $0x1b0] sm:$0xff] %vm3513, %v3489
      %3569 = vst.msk [vmem:[%s388 + $0x1b8] sm:$0xff] %vm3513, %v3491
      %3570 = vst.msk [vmem:[%s388 + $0x1c0] sm:$0xff] %vm3513, %v3494
      %3571 = vst.msk [vmem:[%s388 + $0x1c8] sm:$0xff] %vm3513, %v3496
      %3572 = vst.msk [vmem:[%s388 + $0x1d0] sm:$0xff] %vm3513, %v3499
      %3573 = vst.msk [vmem:[%s388 + $0x1d8] sm:$0xff] %vm3513, %v3501
      %3574 = vst.msk [vmem:[%s388 + $0x1e0] sm:$0xff] %vm3513, %v3504
      %3575 = vst.msk [vmem:[%s388 + $0x1e8] sm:$0xff] %vm3513, %v3506
      %3576 = vst.msk [vmem:[%s388 + $0x1f0] sm:$0xff] %vm3513, %v3509
      %3577 = vst.msk [vmem:[%s388 + $0x1f8] sm:$0xff] %vm3513, %v3511
      %s3578 = smul.u32 64, %s22
      %p3579 = scmp.lt.s32.totalorder %s3578, 127
      %s3580 = scalar_select %p3579, %s3578, 127
      %s3581 = smul.addr %s3580, 8
      %s3582 = scalar_lea.vmem %s11, %s3581
      // Predicated region
      $region65: #{nerf_forward.1} parent=63 // pred_check
        %p3583 = pneg %p276
      $region66: #{nerf_forward.1} parent=63 // pred_check_branch
        %3585 = sbr.rel (%p3583) target = $region68
      $region67: #{nerf_forward.1} parent=63 // pred_region
        %s3586 = smul.u32 64, %s22
      $region68: #{nerf_forward.1} parent=63 // pred_fallthru
        _
    $region64: #{nerf_forward.1} parent=5 // pred_fallthru
      _
    %p3587 = scmp.le.s32.totalorder 2, %s17
    // Predicated region
    $region69: #{nerf_forward.1} parent=5 // pred_check
      %p3588 = pneg %p3587
    $region70: #{nerf_forward.1} parent=5 // pred_check_branch
      %3590 = sbr.rel (%p3588) target = $region72
    $region71: #{nerf_forward.1} parent=5 // pred_region
      %s3591 = ssub.s32 %s17, 2
      // Predicated region
      $region73: #{nerf_forward.1} parent=71 // pred_check
        %p3592 = pneg %p282
      $region74: #{nerf_forward.1} parent=71 // pred_check_branch
        %3594 = sbr.rel (%p3592) target = $region76
      $region75: #{nerf_forward.1} parent=71 // pred_region
        %s3595 = smul.u32 64, %s23
        %p3596 = scmp.lt.s32.totalorder %s3595, 127
        %s3597 = scalar_select %p3596, %s3595, 127
        %s3598 = smul.addr %s3597, 8
        %s3599 = scalar_lea.vmem %s11, %s3598
      $region76: #{nerf_forward.1} parent=71 // pred_fallthru
        _
    $region72: #{nerf_forward.1} parent=5 // pred_fallthru
      _
  $region6: #{nerf_forward.1} parent=0 // loop_footer
    %s21 = sadd.s32 1, %s17
  $region7: #{nerf_forward.1} parent=0 // loop_footer_branch
    %16 = sbr.rel target = $region3
  $region8: #{nerf_forward.1} parent=0 // loop_exit
    _

</llo_original>
